<compile_context>
chip_gen: v5e
topology: v5e:2x2
jax: 0.10.0
libtpu: 0.0.40
codegen_flags: <defaults>
</compile_context>

<pallas_src>
import math

import jax
import jax.numpy as jnp
from jax.experimental import pallas as pl
from jax.experimental.pallas import tpu as pltpu

# ----------------------------- tiny config -----------------------------------
VOCAB = 100
HIDDEN = 32
NUM_LAYERS = 2
NUM_HEADS = 4
HEAD_DIM = HIDDEN // NUM_HEADS
INTERMEDIATE = 64
MAX_POS = 16
NUM_CATS = 4        # CATS = ['맛', '가격', '서비스', '분위기']
NUM_CLASSES = 3
LN_EPS = 1e-12

NUM_KERNEL_INPUTS = 28


def _vmem():
    return pl.BlockSpec(memory_space=pltpu.MemorySpace.VMEM)


# ----------------------------- in-kernel helpers ------------------------------
def _layernorm(x, g, b):
    mu = jnp.mean(x, axis=-1, keepdims=True)
    var = jnp.mean(jnp.square(x - mu), axis=-1, keepdims=True)
    return (x - mu) * jax.lax.rsqrt(var + LN_EPS) * g + b


def _linear3d(x, w, b):
    # (B,S,Hin) @ (Hin,Hout) + (1,Hout) -> (B,S,Hout), via 2D MXU matmul.
    B, S, Hin = x.shape
    y = jnp.dot(x.reshape(B * S, Hin), w, preferred_element_type=jnp.float32) + b
    return y.reshape(B, S, w.shape[1])


def _gelu_tanh(x):
    # NOTE: tanh-approx GELU (BERT's exact erf-GELU replaced for TPU lowering).
    return 0.5 * x * (1.0 + jnp.tanh(0.7978845608028654 *
                                     (x + 0.044715 * x * x * x)))


# ----------------------------- fused Pallas kernel ----------------------------
def fused_forward_kernel(ids_ref, mask_ref, labels_ref,
                         wemb_ref, pemb_ref, temb_ref, embg_ref, embb_ref,
                         wq_ref, bq_ref, wk_ref, bk_ref, wv_ref, bv_ref,
                         wo_ref, bo_ref, ln1g_ref, ln1b_ref,
                         w1_ref, b1_ref, w2_ref, b2_ref, ln2g_ref, ln2b_ref,
                         poolw_ref, poolb_ref, headsw_ref, headsb_ref,
                         logits_ref, loss_ref,
                         ctx_ref):
    B, S = ids_ref.shape

    # ---- embeddings: one-hot gather on the MXU + additive pos/type + LayerNorm ----
    ids = ids_ref[...]                                             # (B, S) int32
    vocab_iota = jax.lax.broadcasted_iota(jnp.int32, (B, S, VOCAB), 2)
    onehot = (ids[:, :, None] == vocab_iota).astype(jnp.float32)   # (B, S, VOCAB)
    word = jnp.dot(onehot.reshape(B * S, VOCAB), wemb_ref[...],
                   preferred_element_type=jnp.float32).reshape(B, S, HIDDEN)
    pos = pemb_ref[0:S, :]                                         # (S, H)
    # TODO(synk): token_type_ids hard-coded to segment 0 (single-segment inputs).
    tok_type = temb_ref[0:1, :]                                    # (1, H)
    h = _layernorm(word + pos[None, :, :] + tok_type[None, :, :],
                   embg_ref[...], embb_ref[...])                   # (B, S, H)

    # ---- attention bias computed once, reused by every layer ----
    attn_bias = (1.0 - mask_ref[...])[:, None, :] * -10000.0       # (B, 1, S)
    scale = 1.0 / math.sqrt(HEAD_DIM)

    # ---- transformer layers (statically unrolled; weights stacked on dim 0) ----
    for l in range(NUM_LAYERS):
        q = _linear3d(h, wq_ref[l], bq_ref[l])
        k = _linear3d(h, wk_ref[l], bk_ref[l])
        v = _linear3d(h, wv_ref[l], bv_ref[l])

        for hd in range(NUM_HEADS):                 # static per-head loop
            lo = hd * HEAD_DIM
            qh = q[:, :, lo:lo + HEAD_DIM]
            kh = k[:, :, lo:lo + HEAD_DIM]
            vh = v[:, :, lo:lo + HEAD_DIM]
            s = jnp.einsum('bqd,bkd->bqk', qh, kh,
                           preferred_element_type=jnp.float32) * scale + attn_bias
            s = s - jnp.max(s, axis=-1, keepdims=True)
            p = jnp.exp(s)
            p = p * pl.reciprocal(jnp.sum(p, axis=-1, keepdims=True), approx=True)
            # write head context into its lane slice of the VMEM scratch (no concat)
            ctx_ref[:, :, lo:lo + HEAD_DIM] = jnp.einsum(
                'bqk,bkd->bqd', p, vh, preferred_element_type=jnp.float32)

        attn_out = _linear3d(ctx_ref[...], wo_ref[l], bo_ref[l])
        h = _layernorm(h + attn_out, ln1g_ref[l], ln1b_ref[l])

        inter = _gelu_tanh(_linear3d(h, w1_ref[l], b1_ref[l]))
        ffn = _linear3d(inter, w2_ref[l], b2_ref[l])
        h = _layernorm(h + ffn, ln2g_ref[l], ln2b_ref[l])

    # ---- pooler (tanh on [CLS]) + 4 classification heads ----
    cls = h[:, 0, :]                                               # (B, H)
    pooled = jnp.tanh(jnp.dot(cls, poolw_ref[...],
                              preferred_element_type=jnp.float32) + poolb_ref[...])
    # dropout(p=0.1) is an identity in eval mode.
    # TODO(synk): training-mode dropout mask not implemented.
    flat_logits = jnp.dot(pooled, headsw_ref[...],
                          preferred_element_type=jnp.float32) + headsb_ref[...]  # (B, 12)

    # ---- per-category cross-entropy, mean over categories (== global mean) ----
    labels = labels_ref[...]                                       # (B, NUM_CATS) int32
    total_nll = jnp.zeros((), jnp.float32)
    for c in range(NUM_CATS):
        lc = flat_logits[:, c * NUM_CLASSES:(c + 1) * NUM_CLASSES]  # (B, 3)
        logits_ref[:, c, :] = lc                                    # torch.stack(..., dim=1)
        m = jnp.max(lc, axis=-1, keepdims=True)
        z = lc - m
        logp = z - jnp.log(jnp.sum(jnp.exp(z), axis=-1, keepdims=True))
        cls_iota = jax.lax.broadcasted_iota(jnp.int32, (B, NUM_CLASSES), 1)
        onehot_c = (labels[:, c:c + 1] == cls_iota).astype(jnp.float32)
        total_nll = total_nll + (-jnp.sum(logp * onehot_c))
    loss_ref[...] = jnp.broadcast_to(total_nll / float(B * NUM_CATS), (1, 1))


def _build_fused_call(B, S):
    return pl.pallas_call(
        fused_forward_kernel,
        out_shape=(jax.ShapeDtypeStruct((B, NUM_CATS, NUM_CLASSES), jnp.float32),
                   jax.ShapeDtypeStruct((1, 1), jnp.float32)),
        in_specs=[_vmem() for _ in range(NUM_KERNEL_INPUTS)],
        out_specs=(_vmem(), _vmem()),
        scratch_shapes=[pltpu.VMEM((B, S, HIDDEN), jnp.float32)],   # attention ctx
    )


# ----------------------------- parameters -------------------------------------
def init_params(key):
    std = 0.02
    counter = iter(range(10_000))

    def nrm(shape):
        return std * jax.random.normal(jax.random.fold_in(key, next(counter)),
                                       shape, jnp.float32)

    L = NUM_LAYERS
    return {
        'word_emb': nrm((VOCAB, HIDDEN)),
        'pos_emb': nrm((MAX_POS, HIDDEN)),
        'type_emb': nrm((2, HIDDEN)),
        'emb_ln_g': jnp.ones((1, HIDDEN), jnp.float32),
        'emb_ln_b': jnp.zeros((1, HIDDEN), jnp.float32),
        # per-layer weights stacked along a leading NUM_LAYERS axis
        'wq': nrm((L, HIDDEN, HIDDEN)), 'bq': jnp.zeros((L, 1, HIDDEN), jnp.float32),
        'wk': nrm((L, HIDDEN, HIDDEN)), 'bk': jnp.zeros((L, 1, HIDDEN), jnp.float32),
        'wv': nrm((L, HIDDEN, HIDDEN)), 'bv': jnp.zeros((L, 1, HIDDEN), jnp.float32),
        'wo': nrm((L, HIDDEN, HIDDEN)), 'bo': jnp.zeros((L, 1, HIDDEN), jnp.float32),
        'ln1_g': jnp.ones((L, 1, HIDDEN), jnp.float32),
        'ln1_b': jnp.zeros((L, 1, HIDDEN), jnp.float32),
        'w1': nrm((L, HIDDEN, INTERMEDIATE)),
        'b1': jnp.zeros((L, 1, INTERMEDIATE), jnp.float32),
        'w2': nrm((L, INTERMEDIATE, HIDDEN)),
        'b2': jnp.zeros((L, 1, HIDDEN), jnp.float32),
        'ln2_g': jnp.ones((L, 1, HIDDEN), jnp.float32),
        'ln2_b': jnp.zeros((L, 1, HIDDEN), jnp.float32),
        'pooler_w': nrm((HIDDEN, HIDDEN)),
        'pooler_b': jnp.zeros((1, HIDDEN), jnp.float32),
        # 4 heads nn.Linear(hs, 3) concatenated along the output dim -> (H, 12)
        'heads_w': nrm((HIDDEN, NUM_CATS * NUM_CLASSES)),
        'heads_b': jnp.zeros((1, NUM_CATS * NUM_CLASSES), jnp.float32),
    }


# ----------------------------- forward -----------------------------------------
@jax.jit
def _forward_jit(params, input_ids, attention_mask, labels):
    B, S = input_ids.shape
    logits, loss = _build_fused_call(B, S)(
        input_ids.astype(jnp.int32),
        attention_mask.astype(jnp.float32),
        labels.astype(jnp.int32),
        params['word_emb'], params['pos_emb'], params['type_emb'],
        params['emb_ln_g'], params['emb_ln_b'],
        params['wq'], params['bq'], params['wk'], params['bk'],
        params['wv'], params['bv'], params['wo'], params['bo'],
        params['ln1_g'], params['ln1_b'],
        params['w1'], params['b1'], params['w2'], params['b2'],
        params['ln2_g'], params['ln2_b'],
        params['pooler_w'], params['pooler_b'],
        params['heads_w'], params['heads_b'])
    return loss[0, 0], logits


def multi_task_bert_forward(params, input_ids, attention_mask=None, labels=None):
    B, S = input_ids.shape
    if attention_mask is None:
        attention_mask = jnp.ones((B, S), jnp.float32)
    have_labels = labels is not None
    if not have_labels:
        # loss computed on dummy labels inside the fused kernel (negligible work),
        # but reported as None to match the PyTorch module's contract.
        labels = jnp.zeros((B, NUM_CATS), jnp.int32)
    loss, logits = _forward_jit(params, input_ids, attention_mask, labels)
    return {'loss': loss if have_labels else None, 'logits': logits}


# ----------------------------- main ---------------------------------------------
if __name__ == "__main__":
    key = jax.random.PRNGKey(0)
    pkey, ikey, lkey = jax.random.split(key, 3)

    params = init_params(pkey)

    B, S = 2, 8
    input_ids = jax.random.randint(ikey, (B, S), 0, VOCAB, dtype=jnp.int32)
    attention_mask = jnp.ones((B, S), jnp.float32)
    labels = jax.random.randint(lkey, (B, NUM_CATS), 0, NUM_CLASSES, dtype=jnp.int32)

    out = multi_task_bert_forward(params, input_ids, attention_mask, labels)
    jax.block_until_ready((out['loss'], out['logits']))

    assert out['logits'].shape == (B, NUM_CATS, NUM_CLASSES)
    assert out['loss'].shape == ()
    print("KERNEL_OK")
</pallas_src>

<mosaic_0001>
module attributes {stable_mosaic.version = 11 : i64} {
  func.func @fused_forward_kernel(%arg0: memref<2x8xi32, #tpu.memory_space<vmem>>, %arg1: memref<2x8xf32, #tpu.memory_space<vmem>>, %arg2: memref<2x4xi32, #tpu.memory_space<vmem>>, %arg3: memref<100x32xf32, #tpu.memory_space<vmem>>, %arg4: memref<16x32xf32, #tpu.memory_space<vmem>>, %arg5: memref<2x32xf32, #tpu.memory_space<vmem>>, %arg6: memref<1x32xf32, #tpu.memory_space<vmem>>, %arg7: memref<1x32xf32, #tpu.memory_space<vmem>>, %arg8: memref<2x32x32xf32, #tpu.memory_space<vmem>>, %arg9: memref<2x1x32xf32, #tpu.memory_space<vmem>>, %arg10: memref<2x32x32xf32, #tpu.memory_space<vmem>>, %arg11: memref<2x1x32xf32, #tpu.memory_space<vmem>>, %arg12: memref<2x32x32xf32, #tpu.memory_space<vmem>>, %arg13: memref<2x1x32xf32, #tpu.memory_space<vmem>>, %arg14: memref<2x32x32xf32, #tpu.memory_space<vmem>>, %arg15: memref<2x1x32xf32, #tpu.memory_space<vmem>>, %arg16: memref<2x1x32xf32, #tpu.memory_space<vmem>>, %arg17: memref<2x1x32xf32, #tpu.memory_space<vmem>>, %arg18: memref<2x32x64xf32, #tpu.memory_space<vmem>>, %arg19: memref<2x1x64xf32, #tpu.memory_space<vmem>>, %arg20: memref<2x64x32xf32, #tpu.memory_space<vmem>>, %arg21: memref<2x1x32xf32, #tpu.memory_space<vmem>>, %arg22: memref<2x1x32xf32, #tpu.memory_space<vmem>>, %arg23: memref<2x1x32xf32, #tpu.memory_space<vmem>>, %arg24: memref<32x32xf32, #tpu.memory_space<vmem>>, %arg25: memref<1x32xf32, #tpu.memory_space<vmem>>, %arg26: memref<32x12xf32, #tpu.memory_space<vmem>>, %arg27: memref<1x12xf32, #tpu.memory_space<vmem>>, %arg28: memref<2x4x3xf32, #tpu.memory_space<vmem>>, %arg29: memref<1x1xf32, #tpu.memory_space<vmem>>, %arg30: memref<2x8x32xf32, #tpu.memory_space<vmem>>) attributes {dimension_semantics = [], scalar_prefetch = 0 : i64, scratch_operands = 1 : i64, tpu.core_type = #tpu.core_type<tc>} {
    %c0 = arith.constant 0 : index
    %c0_0 = arith.constant 0 : index
    %0 = vector.load %arg0[%c0, %c0_0] : memref<2x8xi32, #tpu.memory_space<vmem>>, vector<2x8xi32>
    %1 = tpu.iota {dimensions = array<i32: 2>} : vector<2x8x100xi32>
    %2 = vector.shape_cast %0 : vector<2x8xi32> to vector<2x8x1xi32>
    %3 = vector.broadcast %2 : vector<2x8x1xi32> to vector<2x8x100xi32>
    %4 = arith.cmpi eq, %3, %1 : vector<2x8x100xi32>
    %5 = arith.extui %4 : vector<2x8x100xi1> to vector<2x8x100xi32>
    %6 = arith.sitofp %5 : vector<2x8x100xi32> to vector<2x8x100xf32>
    %7 = vector.shape_cast %6 : vector<2x8x100xf32> to vector<16x100xf32>
    %c0_1 = arith.constant 0 : index
    %c0_2 = arith.constant 0 : index
    %8 = vector.load %arg3[%c0_1, %c0_2] : memref<100x32xf32, #tpu.memory_space<vmem>>, vector<100x32xf32>
    %cst = arith.constant dense<0.000000e+00> : vector<16x32xf32>
    %9 = tpu.matmul %7, %8, %cst {dimension_numbers = #tpu.dot_dimension_numbers<[1], [0], [0], [1], [0, 0, 1, 1], [], []>} : vector<16x100xf32>, vector<100x32xf32>, vector<16x32xf32> -> vector<16x32xf32>
    %10 = vector.shape_cast %9 : vector<16x32xf32> to vector<2x8x32xf32>
    %c0_3 = arith.constant 0 : index
    %c0_4 = arith.constant 0 : index
    %11 = vector.load %arg4[%c0_3, %c0_4] : memref<16x32xf32, #tpu.memory_space<vmem>>, vector<8x32xf32>
    %c0_5 = arith.constant 0 : index
    %c0_6 = arith.constant 0 : index
    %12 = vector.load %arg5[%c0_5, %c0_6] : memref<2x32xf32, #tpu.memory_space<vmem>>, vector<1x32xf32>
    %13 = vector.shape_cast %11 : vector<8x32xf32> to vector<1x8x32xf32>
    %14 = vector.broadcast %13 : vector<1x8x32xf32> to vector<2x8x32xf32>
    %15 = arith.addf %10, %14 : vector<2x8x32xf32>
    %16 = vector.shape_cast %12 : vector<1x32xf32> to vector<1x1x32xf32>
    %17 = vector.broadcast %16 : vector<1x1x32xf32> to vector<2x8x32xf32>
    %18 = arith.addf %15, %17 : vector<2x8x32xf32>
    %c0_7 = arith.constant 0 : index
    %c0_8 = arith.constant 0 : index
    %19 = vector.load %arg6[%c0_7, %c0_8] : memref<1x32xf32, #tpu.memory_space<vmem>>, vector<1x32xf32>
    %c0_9 = arith.constant 0 : index
    %c0_10 = arith.constant 0 : index
    %20 = vector.load %arg7[%c0_9, %c0_10] : memref<1x32xf32, #tpu.memory_space<vmem>>, vector<1x32xf32>
    %cst_11 = arith.constant dense<0.000000e+00> : vector<2x8xf32>
    %21 = vector.multi_reduction <add>, %18, %cst_11 [2] : vector<2x8x32xf32> to vector<2x8xf32>
    %22 = vector.shape_cast %21 : vector<2x8xf32> to vector<2x8x1xf32>
    %cst_12 = arith.constant 3.200000e+01 : f32
    %23 = vector.broadcast %cst_12 : f32 to vector<2x8x1xf32>
    %24 = arith.divf %22, %23 : vector<2x8x1xf32>
    %25 = vector.broadcast %24 : vector<2x8x1xf32> to vector<2x8x32xf32>
    %26 = arith.subf %18, %25 : vector<2x8x32xf32>
    %27 = arith.mulf %26, %26 : vector<2x8x32xf32>
    %cst_13 = arith.constant dense<0.000000e+00> : vector<2x8xf32>
    %28 = vector.multi_reduction <add>, %27, %cst_13 [2] : vector<2x8x32xf32> to vector<2x8xf32>
    %29 = vector.shape_cast %28 : vector<2x8xf32> to vector<2x8x1xf32>
    %cst_14 = arith.constant 3.200000e+01 : f32
    %30 = vector.broadcast %cst_14 : f32 to vector<2x8x1xf32>
    %31 = arith.divf %29, %30 : vector<2x8x1xf32>
    %32 = vector.broadcast %24 : vector<2x8x1xf32> to vector<2x8x32xf32>
    %33 = arith.subf %18, %32 : vector<2x8x32xf32>
    %cst_15 = arith.constant 9.99999996E-13 : f32
    %34 = vector.broadcast %cst_15 : f32 to vector<2x8x1xf32>
    %35 = arith.addf %31, %34 : vector<2x8x1xf32>
    %36 = math.rsqrt %35 : vector<2x8x1xf32>
    %37 = vector.broadcast %36 : vector<2x8x1xf32> to vector<2x8x32xf32>
    %38 = arith.mulf %33, %37 : vector<2x8x32xf32>
    %39 = vector.shape_cast %19 : vector<1x32xf32> to vector<1x1x32xf32>
    %40 = vector.broadcast %39 : vector<1x1x32xf32> to vector<2x8x32xf32>
    %41 = arith.mulf %38, %40 : vector<2x8x32xf32>
    %42 = vector.shape_cast %20 : vector<1x32xf32> to vector<1x1x32xf32>
    %43 = vector.broadcast %42 : vector<1x1x32xf32> to vector<2x8x32xf32>
    %44 = arith.addf %41, %43 : vector<2x8x32xf32>
    %c0_16 = arith.constant 0 : index
    %c0_17 = arith.constant 0 : index
    %45 = vector.load %arg1[%c0_16, %c0_17] : memref<2x8xf32, #tpu.memory_space<vmem>>, vector<2x8xf32>
    %cst_18 = arith.constant 1.000000e+00 : f32
    %46 = vector.broadcast %cst_18 : f32 to vector<2x8xf32>
    %47 = arith.subf %46, %45 : vector<2x8xf32>
    %48 = vector.shape_cast %47 : vector<2x8xf32> to vector<2x1x8xf32>
    %cst_19 = arith.constant -1.000000e+04 : f32
    %49 = vector.broadcast %cst_19 : f32 to vector<2x1x8xf32>
    %50 = arith.mulf %48, %49 : vector<2x1x8xf32>
    %c0_20 = arith.constant 0 : index
    %c0_21 = arith.constant 0 : index
    %c0_22 = arith.constant 0 : index
    %51 = vector.load %arg8[%c0_20, %c0_21, %c0_22] : memref<2x32x32xf32, #tpu.memory_space<vmem>>, vector<1x32x32xf32>
    %52 = vector.shape_cast %51 : vector<1x32x32xf32> to vector<32x32xf32>
    %c0_23 = arith.constant 0 : index
    %c0_24 = arith.constant 0 : index
    %c0_25 = arith.constant 0 : index
    %53 = vector.load %arg9[%c0_23, %c0_24, %c0_25] : memref<2x1x32xf32, #tpu.memory_space<vmem>>, vector<1x1x32xf32>
    %54 = vector.shape_cast %53 : vector<1x1x32xf32> to vector<1x32xf32>
    %55 = vector.shape_cast %44 : vector<2x8x32xf32> to vector<16x32xf32>
    %cst_26 = arith.constant dense<0.000000e+00> : vector<16x32xf32>
    %56 = tpu.matmul %55, %52, %cst_26 {dimension_numbers = #tpu.dot_dimension_numbers<[1], [0], [0], [1], [0, 0, 1, 1], [], []>} : vector<16x32xf32>, vector<32x32xf32>, vector<16x32xf32> -> vector<16x32xf32>
    %57 = vector.broadcast %54 : vector<1x32xf32> to vector<16x32xf32>
    %58 = arith.addf %56, %57 : vector<16x32xf32>
    %59 = vector.shape_cast %58 : vector<16x32xf32> to vector<2x8x32xf32>
    %c0_27 = arith.constant 0 : index
    %c0_28 = arith.constant 0 : index
    %c0_29 = arith.constant 0 : index
    %60 = vector.load %arg10[%c0_27, %c0_28, %c0_29] : memref<2x32x32xf32, #tpu.memory_space<vmem>>, vector<1x32x32xf32>
    %61 = vector.shape_cast %60 : vector<1x32x32xf32> to vector<32x32xf32>
    %c0_30 = arith.constant 0 : index
    %c0_31 = arith.constant 0 : index
    %c0_32 = arith.constant 0 : index
    %62 = vector.load %arg11[%c0_30, %c0_31, %c0_32] : memref<2x1x32xf32, #tpu.memory_space<vmem>>, vector<1x1x32xf32>
    %63 = vector.shape_cast %62 : vector<1x1x32xf32> to vector<1x32xf32>
    %64 = vector.shape_cast %44 : vector<2x8x32xf32> to vector<16x32xf32>
    %cst_33 = arith.constant dense<0.000000e+00> : vector<16x32xf32>
    %65 = tpu.matmul %64, %61, %cst_33 {dimension_numbers = #tpu.dot_dimension_numbers<[1], [0], [0], [1], [0, 0, 1, 1], [], []>} : vector<16x32xf32>, vector<32x32xf32>, vector<16x32xf32> -> vector<16x32xf32>
    %66 = vector.broadcast %63 : vector<1x32xf32> to vector<16x32xf32>
    %67 = arith.addf %65, %66 : vector<16x32xf32>
    %68 = vector.shape_cast %67 : vector<16x32xf32> to vector<2x8x32xf32>
    %c0_34 = arith.constant 0 : index
    %c0_35 = arith.constant 0 : index
    %c0_36 = arith.constant 0 : index
    %69 = vector.load %arg12[%c0_34, %c0_35, %c0_36] : memref<2x32x32xf32, #tpu.memory_space<vmem>>, vector<1x32x32xf32>
    %70 = vector.shape_cast %69 : vector<1x32x32xf32> to vector<32x32xf32>
    %c0_37 = arith.constant 0 : index
    %c0_38 = arith.constant 0 : index
    %c0_39 = arith.constant 0 : index
    %71 = vector.load %arg13[%c0_37, %c0_38, %c0_39] : memref<2x1x32xf32, #tpu.memory_space<vmem>>, vector<1x1x32xf32>
    %72 = vector.shape_cast %71 : vector<1x1x32xf32> to vector<1x32xf32>
    %73 = vector.shape_cast %44 : vector<2x8x32xf32> to vector<16x32xf32>
    %cst_40 = arith.constant dense<0.000000e+00> : vector<16x32xf32>
    %74 = tpu.matmul %73, %70, %cst_40 {dimension_numbers = #tpu.dot_dimension_numbers<[1], [0], [0], [1], [0, 0, 1, 1], [], []>} : vector<16x32xf32>, vector<32x32xf32>, vector<16x32xf32> -> vector<16x32xf32>
    %75 = vector.broadcast %72 : vector<1x32xf32> to vector<16x32xf32>
    %76 = arith.addf %74, %75 : vector<16x32xf32>
    %77 = vector.shape_cast %76 : vector<16x32xf32> to vector<2x8x32xf32>
    %78 = vector.extract_strided_slice %59 {offsets = [0, 0, 0], sizes = [2, 8, 8], strides = [1, 1, 1]} : vector<2x8x32xf32> to vector<2x8x8xf32>
    %79 = vector.extract_strided_slice %68 {offsets = [0, 0, 0], sizes = [2, 8, 8], strides = [1, 1, 1]} : vector<2x8x32xf32> to vector<2x8x8xf32>
    %80 = vector.extract_strided_slice %77 {offsets = [0, 0, 0], sizes = [2, 8, 8], strides = [1, 1, 1]} : vector<2x8x32xf32> to vector<2x8x8xf32>
    "tpu.trace_start"() <{level = 10 : i32, message = "bqd,bkd->bqk"}> : () -> ()
    %cst_41 = arith.constant dense<0.000000e+00> : vector<2x8x8xf32>
    %81 = tpu.matmul %78, %79, %cst_41 {dimension_numbers = #tpu.dot_dimension_numbers<[2], [2], [1], [1], [0, 0, 0, 1, 1, 1], [0], [0]>} : vector<2x8x8xf32>, vector<2x8x8xf32>, vector<2x8x8xf32> -> vector<2x8x8xf32>
    "tpu.trace_stop"() : () -> ()
    %cst_42 = arith.constant 0.353553385 : f32
    %82 = vector.broadcast %cst_42 : f32 to vector<2x8x8xf32>
    %83 = arith.mulf %81, %82 : vector<2x8x8xf32>
    %84 = vector.broadcast %50 : vector<2x1x8xf32> to vector<2x8x8xf32>
    %85 = arith.addf %83, %84 : vector<2x8x8xf32>
    %cst_43 = arith.constant dense<0xFF800000> : vector<2x8xf32>
    %86 = vector.multi_reduction <maximumf>, %85, %cst_43 [2] : vector<2x8x8xf32> to vector<2x8xf32>
    %87 = vector.shape_cast %86 : vector<2x8xf32> to vector<2x8x1xf32>
    %88 = vector.broadcast %87 : vector<2x8x1xf32> to vector<2x8x8xf32>
    %89 = arith.subf %85, %88 : vector<2x8x8xf32>
    %90 = math.exp %89 : vector<2x8x8xf32>
    %cst_44 = arith.constant dense<0.000000e+00> : vector<2x8xf32>
    %91 = vector.multi_reduction <add>, %90, %cst_44 [2] : vector<2x8x8xf32> to vector<2x8xf32>
    %92 = vector.shape_cast %91 : vector<2x8xf32> to vector<2x8x1xf32>
    %93 = tpu.reciprocal %92 {approx = true} : vector<2x8x1xf32> -> vector<2x8x1xf32>
    %94 = vector.broadcast %93 : vector<2x8x1xf32> to vector<2x8x8xf32>
    %95 = arith.mulf %90, %94 : vector<2x8x8xf32>
    "tpu.trace_start"() <{level = 10 : i32, message = "bqk,bkd->bqd"}> : () -> ()
    %cst_45 = arith.constant dense<0.000000e+00> : vector<2x8x8xf32>
    %96 = tpu.matmul %95, %80, %cst_45 {dimension_numbers = #tpu.dot_dimension_numbers<[2], [1], [1], [2], [0, 0, 0, 1, 1, 2], [0], [0]>} : vector<2x8x8xf32>, vector<2x8x8xf32>, vector<2x8x8xf32> -> vector<2x8x8xf32>
    "tpu.trace_stop"() : () -> ()
    %c0_46 = arith.constant 0 : index
    %c0_47 = arith.constant 0 : index
    %c0_48 = arith.constant 0 : index
    %97 = vector.load %arg30[%c0_46, %c0_47, %c0_48] : memref<2x8x32xf32, #tpu.memory_space<vmem>>, vector<2x8x8xf32>
    tpu.vector_store %arg30[%c0_46, %c0_47, %c0_48], %96 {strides = array<i32>} : memref<2x8x32xf32, #tpu.memory_space<vmem>>, vector<2x8x8xf32>,
    %98 = vector.extract_strided_slice %59 {offsets = [0, 0, 8], sizes = [2, 8, 8], strides = [1, 1, 1]} : vector<2x8x32xf32> to vector<2x8x8xf32>
    %99 = vector.extract_strided_slice %68 {offsets = [0, 0, 8], sizes = [2, 8, 8], strides = [1, 1, 1]} : vector<2x8x32xf32> to vector<2x8x8xf32>
    %100 = vector.extract_strided_slice %77 {offsets = [0, 0, 8], sizes = [2, 8, 8], strides = [1, 1, 1]} : vector<2x8x32xf32> to vector<2x8x8xf32>
    "tpu.trace_start"() <{level = 10 : i32, message = "bqd,bkd->bqk"}> : () -> ()
    %cst_49 = arith.constant dense<0.000000e+00> : vector<2x8x8xf32>
    %101 = tpu.matmul %98, %99, %cst_49 {dimension_numbers = #tpu.dot_dimension_numbers<[2], [2], [1], [1], [0, 0, 0, 1, 1, 1], [0], [0]>} : vector<2x8x8xf32>, vector<2x8x8xf32>, vector<2x8x8xf32> -> vector<2x8x8xf32>
    "tpu.trace_stop"() : () -> ()
    %cst_50 = arith.constant 0.353553385 : f32
    %102 = vector.broadcast %cst_50 : f32 to vector<2x8x8xf32>
    %103 = arith.mulf %101, %102 : vector<2x8x8xf32>
    %104 = vector.broadcast %50 : vector<2x1x8xf32> to vector<2x8x8xf32>
    %105 = arith.addf %103, %104 : vector<2x8x8xf32>
    %cst_51 = arith.constant dense<0xFF800000> : vector<2x8xf32>
    %106 = vector.multi_reduction <maximumf>, %105, %cst_51 [2] : vector<2x8x8xf32> to vector<2x8xf32>
    %107 = vector.shape_cast %106 : vector<2x8xf32> to vector<2x8x1xf32>
    %108 = vector.broadcast %107 : vector<2x8x1xf32> to vector<2x8x8xf32>
    %109 = arith.subf %105, %108 : vector<2x8x8xf32>
    %110 = math.exp %109 : vector<2x8x8xf32>
    %cst_52 = arith.constant dense<0.000000e+00> : vector<2x8xf32>
    %111 = vector.multi_reduction <add>, %110, %cst_52 [2] : vector<2x8x8xf32> to vector<2x8xf32>
    %112 = vector.shape_cast %111 : vector<2x8xf32> to vector<2x8x1xf32>
    %113 = tpu.reciprocal %112 {approx = true} : vector<2x8x1xf32> -> vector<2x8x1xf32>
    %114 = vector.broadcast %113 : vector<2x8x1xf32> to vector<2x8x8xf32>
    %115 = arith.mulf %110, %114 : vector<2x8x8xf32>
    "tpu.trace_start"() <{level = 10 : i32, message = "bqk,bkd->bqd"}> : () -> ()
    %cst_53 = arith.constant dense<0.000000e+00> : vector<2x8x8xf32>
    %116 = tpu.matmul %115, %100, %cst_53 {dimension_numbers = #tpu.dot_dimension_numbers<[2], [1], [1], [2], [0, 0, 0, 1, 1, 2], [0], [0]>} : vector<2x8x8xf32>, vector<2x8x8xf32>, vector<2x8x8xf32> -> vector<2x8x8xf32>
    "tpu.trace_stop"() : () -> ()
    %c0_54 = arith.constant 0 : index
    %c0_55 = arith.constant 0 : index
    %c8 = arith.constant 8 : index
    %117 = vector.load %arg30[%c0_54, %c0_55, %c8] : memref<2x8x32xf32, #tpu.memory_space<vmem>>, vector<2x8x8xf32>
    tpu.vector_store %arg30[%c0_54, %c0_55, %c8], %116 {strides = array<i32>} : memref<2x8x32xf32, #tpu.memory_space<vmem>>, vector<2x8x8xf32>,
    %118 = vector.extract_strided_slice %59 {offsets = [0, 0, 16], sizes = [2, 8, 8], strides = [1, 1, 1]} : vector<2x8x32xf32> to vector<2x8x8xf32>
    %119 = vector.extract_strided_slice %68 {offsets = [0, 0, 16], sizes = [2, 8, 8], strides = [1, 1, 1]} : vector<2x8x32xf32> to vector<2x8x8xf32>
    %120 = vector.extract_strided_slice %77 {offsets = [0, 0, 16], sizes = [2, 8, 8], strides = [1, 1, 1]} : vector<2x8x32xf32> to vector<2x8x8xf32>
    "tpu.trace_start"() <{level = 10 : i32, message = "bqd,bkd->bqk"}> : () -> ()
    %cst_56 = arith.constant dense<0.000000e+00> : vector<2x8x8xf32>
    %121 = tpu.matmul %118, %119, %cst_56 {dimension_numbers = #tpu.dot_dimension_numbers<[2], [2], [1], [1], [0, 0, 0, 1, 1, 1], [0], [0]>} : vector<2x8x8xf32>, vector<2x8x8xf32>, vector<2x8x8xf32> -> vector<2x8x8xf32>
    "tpu.trace_stop"() : () -> ()
    %cst_57 = arith.constant 0.353553385 : f32
    %122 = vector.broadcast %cst_57 : f32 to vector<2x8x8xf32>
    %123 = arith.mulf %121, %122 : vector<2x8x8xf32>
    %124 = vector.broadcast %50 : vector<2x1x8xf32> to vector<2x8x8xf32>
    %125 = arith.addf %123, %124 : vector<2x8x8xf32>
    %cst_58 = arith.constant dense<0xFF800000> : vector<2x8xf32>
    %126 = vector.multi_reduction <maximumf>, %125, %cst_58 [2] : vector<2x8x8xf32> to vector<2x8xf32>
    %127 = vector.shape_cast %126 : vector<2x8xf32> to vector<2x8x1xf32>
    %128 = vector.broadcast %127 : vector<2x8x1xf32> to vector<2x8x8xf32>
    %129 = arith.subf %125, %128 : vector<2x8x8xf32>
    %130 = math.exp %129 : vector<2x8x8xf32>
    %cst_59 = arith.constant dense<0.000000e+00> : vector<2x8xf32>
    %131 = vector.multi_reduction <add>, %130, %cst_59 [2] : vector<2x8x8xf32> to vector<2x8xf32>
    %132 = vector.shape_cast %131 : vector<2x8xf32> to vector<2x8x1xf32>
    %133 = tpu.reciprocal %132 {approx = true} : vector<2x8x1xf32> -> vector<2x8x1xf32>
    %134 = vector.broadcast %133 : vector<2x8x1xf32> to vector<2x8x8xf32>
    %135 = arith.mulf %130, %134 : vector<2x8x8xf32>
    "tpu.trace_start"() <{level = 10 : i32, message = "bqk,bkd->bqd"}> : () -> ()
    %cst_60 = arith.constant dense<0.000000e+00> : vector<2x8x8xf32>
    %136 = tpu.matmul %135, %120, %cst_60 {dimension_numbers = #tpu.dot_dimension_numbers<[2], [1], [1], [2], [0, 0, 0, 1, 1, 2], [0], [0]>} : vector<2x8x8xf32>, vector<2x8x8xf32>, vector<2x8x8xf32> -> vector<2x8x8xf32>
    "tpu.trace_stop"() : () -> ()
    %c0_61 = arith.constant 0 : index
    %c0_62 = arith.constant 0 : index
    %c16 = arith.constant 16 : index
    %137 = vector.load %arg30[%c0_61, %c0_62, %c16] : memref<2x8x32xf32, #tpu.memory_space<vmem>>, vector<2x8x8xf32>
    tpu.vector_store %arg30[%c0_61, %c0_62, %c16], %136 {strides = array<i32>} : memref<2x8x32xf32, #tpu.memory_space<vmem>>, vector<2x8x8xf32>,
    %138 = vector.extract_strided_slice %59 {offsets = [0, 0, 24], sizes = [2, 8, 8], strides = [1, 1, 1]} : vector<2x8x32xf32> to vector<2x8x8xf32>
    %139 = vector.extract_strided_slice %68 {offsets = [0, 0, 24], sizes = [2, 8, 8], strides = [1, 1, 1]} : vector<2x8x32xf32> to vector<2x8x8xf32>
    %140 = vector.extract_strided_slice %77 {offsets = [0, 0, 24], sizes = [2, 8, 8], strides = [1, 1, 1]} : vector<2x8x32xf32> to vector<2x8x8xf32>
    "tpu.trace_start"() <{level = 10 : i32, message = "bqd,bkd->bqk"}> : () -> ()
    %cst_63 = arith.constant dense<0.000000e+00> : vector<2x8x8xf32>
    %141 = tpu.matmul %138, %139, %cst_63 {dimension_numbers = #tpu.dot_dimension_numbers<[2], [2], [1], [1], [0, 0, 0, 1, 1, 1], [0], [0]>} : vector<2x8x8xf32>, vector<2x8x8xf32>, vector<2x8x8xf32> -> vector<2x8x8xf32>
    "tpu.trace_stop"() : () -> ()
    %cst_64 = arith.constant 0.353553385 : f32
    %142 = vector.broadcast %cst_64 : f32 to vector<2x8x8xf32>
    %143 = arith.mulf %141, %142 : vector<2x8x8xf32>
    %144 = vector.broadcast %50 : vector<2x1x8xf32> to vector<2x8x8xf32>
    %145 = arith.addf %143, %144 : vector<2x8x8xf32>
    %cst_65 = arith.constant dense<0xFF800000> : vector<2x8xf32>
    %146 = vector.multi_reduction <maximumf>, %145, %cst_65 [2] : vector<2x8x8xf32> to vector<2x8xf32>
    %147 = vector.shape_cast %146 : vector<2x8xf32> to vector<2x8x1xf32>
    %148 = vector.broadcast %147 : vector<2x8x1xf32> to vector<2x8x8xf32>
    %149 = arith.subf %145, %148 : vector<2x8x8xf32>
    %150 = math.exp %149 : vector<2x8x8xf32>
    %cst_66 = arith.constant dense<0.000000e+00> : vector<2x8xf32>
    %151 = vector.multi_reduction <add>, %150, %cst_66 [2] : vector<2x8x8xf32> to vector<2x8xf32>
    %152 = vector.shape_cast %151 : vector<2x8xf32> to vector<2x8x1xf32>
    %153 = tpu.reciprocal %152 {approx = true} : vector<2x8x1xf32> -> vector<2x8x1xf32>
    %154 = vector.broadcast %153 : vector<2x8x1xf32> to vector<2x8x8xf32>
    %155 = arith.mulf %150, %154 : vector<2x8x8xf32>
    "tpu.trace_start"() <{level = 10 : i32, message = "bqk,bkd->bqd"}> : () -> ()
    %cst_67 = arith.constant dense<0.000000e+00> : vector<2x8x8xf32>
    %156 = tpu.matmul %155, %140, %cst_67 {dimension_numbers = #tpu.dot_dimension_numbers<[2], [1], [1], [2], [0, 0, 0, 1, 1, 2], [0], [0]>} : vector<2x8x8xf32>, vector<2x8x8xf32>, vector<2x8x8xf32> -> vector<2x8x8xf32>
    "tpu.trace_stop"() : () -> ()
    %c0_68 = arith.constant 0 : index
    %c0_69 = arith.constant 0 : index
    %c24 = arith.constant 24 : index
    %157 = vector.load %arg30[%c0_68, %c0_69, %c24] : memref<2x8x32xf32, #tpu.memory_space<vmem>>, vector<2x8x8xf32>
    tpu.vector_store %arg30[%c0_68, %c0_69, %c24], %156 {strides = array<i32>} : memref<2x8x32xf32, #tpu.memory_space<vmem>>, vector<2x8x8xf32>,
    %c0_70 = arith.constant 0 : index
    %c0_71 = arith.constant 0 : index
    %c0_72 = arith.constant 0 : index
    %158 = vector.load %arg30[%c0_70, %c0_71, %c0_72] : memref<2x8x32xf32, #tpu.memory_space<vmem>>, vector<2x8x32xf32>
    %c0_73 = arith.constant 0 : index
    %c0_74 = arith.constant 0 : index
    %c0_75 = arith.constant 0 : index
    %159 = vector.load %arg14[%c0_73, %c0_74, %c0_75] : memref<2x32x32xf32, #tpu.memory_space<vmem>>, vector<1x32x32xf32>
    %160 = vector.shape_cast %159 : vector<1x32x32xf32> to vector<32x32xf32>
    %c0_76 = arith.constant 0 : index
    %c0_77 = arith.constant 0 : index
    %c0_78 = arith.constant 0 : index
    %161 = vector.load %arg15[%c0_76, %c0_77, %c0_78] : memref<2x1x32xf32, #tpu.memory_space<vmem>>, vector<1x1x32xf32>
    %162 = vector.shape_cast %161 : vector<1x1x32xf32> to vector<1x32xf32>
    %163 = vector.shape_cast %158 : vector<2x8x32xf32> to vector<16x32xf32>
    %cst_79 = arith.constant dense<0.000000e+00> : vector<16x32xf32>
    %164 = tpu.matmul %163, %160, %cst_79 {dimension_numbers = #tpu.dot_dimension_numbers<[1], [0], [0], [1], [0, 0, 1, 1], [], []>} : vector<16x32xf32>, vector<32x32xf32>, vector<16x32xf32> -> vector<16x32xf32>
    %165 = vector.broadcast %162 : vector<1x32xf32> to vector<16x32xf32>
    %166 = arith.addf %164, %165 : vector<16x32xf32>
    %167 = vector.shape_cast %166 : vector<16x32xf32> to vector<2x8x32xf32>
    %168 = arith.addf %44, %167 : vector<2x8x32xf32>
    %c0_80 = arith.constant 0 : index
    %c0_81 = arith.constant 0 : index
    %c0_82 = arith.constant 0 : index
    %169 = vector.load %arg16[%c0_80, %c0_81, %c0_82] : memref<2x1x32xf32, #tpu.memory_space<vmem>>, vector<1x1x32xf32>
    %170 = vector.shape_cast %169 : vector<1x1x32xf32> to vector<1x32xf32>
    %c0_83 = arith.constant 0 : index
    %c0_84 = arith.constant 0 : index
    %c0_85 = arith.constant 0 : index
    %171 = vector.load %arg17[%c0_83, %c0_84, %c0_85] : memref<2x1x32xf32, #tpu.memory_space<vmem>>, vector<1x1x32xf32>
    %172 = vector.shape_cast %171 : vector<1x1x32xf32> to vector<1x32xf32>
    %cst_86 = arith.constant dense<0.000000e+00> : vector<2x8xf32>
    %173 = vector.multi_reduction <add>, %168, %cst_86 [2] : vector<2x8x32xf32> to vector<2x8xf32>
    %174 = vector.shape_cast %173 : vector<2x8xf32> to vector<2x8x1xf32>
    %cst_87 = arith.constant 3.200000e+01 : f32
    %175 = vector.broadcast %cst_87 : f32 to vector<2x8x1xf32>
    %176 = arith.divf %174, %175 : vector<2x8x1xf32>
    %177 = vector.broadcast %176 : vector<2x8x1xf32> to vector<2x8x32xf32>
    %178 = arith.subf %168, %177 : vector<2x8x32xf32>
    %179 = arith.mulf %178, %178 : vector<2x8x32xf32>
    %cst_88 = arith.constant dense<0.000000e+00> : vector<2x8xf32>
    %180 = vector.multi_reduction <add>, %179, %cst_88 [2] : vector<2x8x32xf32> to vector<2x8xf32>
    %181 = vector.shape_cast %180 : vector<2x8xf32> to vector<2x8x1xf32>
    %cst_89 = arith.constant 3.200000e+01 : f32
    %182 = vector.broadcast %cst_89 : f32 to vector<2x8x1xf32>
    %183 = arith.divf %181, %182 : vector<2x8x1xf32>
    %184 = vector.broadcast %176 : vector<2x8x1xf32> to vector<2x8x32xf32>
    %185 = arith.subf %168, %184 : vector<2x8x32xf32>
    %cst_90 = arith.constant 9.99999996E-13 : f32
    %186 = vector.broadcast %cst_90 : f32 to vector<2x8x1xf32>
    %187 = arith.addf %183, %186 : vector<2x8x1xf32>
    %188 = math.rsqrt %187 : vector<2x8x1xf32>
    %189 = vector.broadcast %188 : vector<2x8x1xf32> to vector<2x8x32xf32>
    %190 = arith.mulf %185, %189 : vector<2x8x32xf32>
    %191 = vector.shape_cast %170 : vector<1x32xf32> to vector<1x1x32xf32>
    %192 = vector.broadcast %191 : vector<1x1x32xf32> to vector<2x8x32xf32>
    %193 = arith.mulf %190, %192 : vector<2x8x32xf32>
    %194 = vector.shape_cast %172 : vector<1x32xf32> to vector<1x1x32xf32>
    %195 = vector.broadcast %194 : vector<1x1x32xf32> to vector<2x8x32xf32>
    %196 = arith.addf %193, %195 : vector<2x8x32xf32>
    %c0_91 = arith.constant 0 : index
    %c0_92 = arith.constant 0 : index
    %c0_93 = arith.constant 0 : index
    %197 = vector.load %arg18[%c0_91, %c0_92, %c0_93] : memref<2x32x64xf32, #tpu.memory_space<vmem>>, vector<1x32x64xf32>
    %198 = vector.shape_cast %197 : vector<1x32x64xf32> to vector<32x64xf32>
    %c0_94 = arith.constant 0 : index
    %c0_95 = arith.constant 0 : index
    %c0_96 = arith.constant 0 : index
    %199 = vector.load %arg19[%c0_94, %c0_95, %c0_96] : memref<2x1x64xf32, #tpu.memory_space<vmem>>, vector<1x1x64xf32>
    %200 = vector.shape_cast %199 : vector<1x1x64xf32> to vector<1x64xf32>
    %201 = vector.shape_cast %196 : vector<2x8x32xf32> to vector<16x32xf32>
    %cst_97 = arith.constant dense<0.000000e+00> : vector<16x64xf32>
    %202 = tpu.matmul %201, %198, %cst_97 {dimension_numbers = #tpu.dot_dimension_numbers<[1], [0], [0], [1], [0, 0, 1, 1], [], []>} : vector<16x32xf32>, vector<32x64xf32>, vector<16x64xf32> -> vector<16x64xf32>
    %203 = vector.broadcast %200 : vector<1x64xf32> to vector<16x64xf32>
    %204 = arith.addf %202, %203 : vector<16x64xf32>
    %205 = vector.shape_cast %204 : vector<16x64xf32> to vector<2x8x64xf32>
    %cst_98 = arith.constant 5.000000e-01 : f32
    %206 = vector.broadcast %cst_98 : f32 to vector<2x8x64xf32>
    %207 = arith.mulf %206, %205 : vector<2x8x64xf32>
    %cst_99 = arith.constant 4.471500e-02 : f32
    %208 = vector.broadcast %cst_99 : f32 to vector<2x8x64xf32>
    %209 = arith.mulf %208, %205 : vector<2x8x64xf32>
    %210 = arith.mulf %209, %205 : vector<2x8x64xf32>
    %211 = arith.mulf %210, %205 : vector<2x8x64xf32>
    %212 = arith.addf %205, %211 : vector<2x8x64xf32>
    %cst_100 = arith.constant 0.797884583 : f32
    %213 = vector.broadcast %cst_100 : f32 to vector<2x8x64xf32>
    %214 = arith.mulf %213, %212 : vector<2x8x64xf32>
    %215 = math.tanh %214 : vector<2x8x64xf32>
    %cst_101 = arith.constant 1.000000e+00 : f32
    %216 = vector.broadcast %cst_101 : f32 to vector<2x8x64xf32>
    %217 = arith.addf %216, %215 : vector<2x8x64xf32>
    %218 = arith.mulf %207, %217 : vector<2x8x64xf32>
    %c0_102 = arith.constant 0 : index
    %c0_103 = arith.constant 0 : index
    %c0_104 = arith.constant 0 : index
    %219 = vector.load %arg20[%c0_102, %c0_103, %c0_104] : memref<2x64x32xf32, #tpu.memory_space<vmem>>, vector<1x64x32xf32>
    %220 = vector.shape_cast %219 : vector<1x64x32xf32> to vector<64x32xf32>
    %c0_105 = arith.constant 0 : index
    %c0_106 = arith.constant 0 : index
    %c0_107 = arith.constant 0 : index
    %221 = vector.load %arg21[%c0_105, %c0_106, %c0_107] : memref<2x1x32xf32, #tpu.memory_space<vmem>>, vector<1x1x32xf32>
    %222 = vector.shape_cast %221 : vector<1x1x32xf32> to vector<1x32xf32>
    %223 = vector.shape_cast %218 : vector<2x8x64xf32> to vector<16x64xf32>
    %cst_108 = arith.constant dense<0.000000e+00> : vector<16x32xf32>
    %224 = tpu.matmul %223, %220, %cst_108 {dimension_numbers = #tpu.dot_dimension_numbers<[1], [0], [0], [1], [0, 0, 1, 1], [], []>} : vector<16x64xf32>, vector<64x32xf32>, vector<16x32xf32> -> vector<16x32xf32>
    %225 = vector.broadcast %222 : vector<1x32xf32> to vector<16x32xf32>
    %226 = arith.addf %224, %225 : vector<16x32xf32>
    %227 = vector.shape_cast %226 : vector<16x32xf32> to vector<2x8x32xf32>
    %228 = arith.addf %196, %227 : vector<2x8x32xf32>
    %c0_109 = arith.constant 0 : index
    %c0_110 = arith.constant 0 : index
    %c0_111 = arith.constant 0 : index
    %229 = vector.load %arg22[%c0_109, %c0_110, %c0_111] : memref<2x1x32xf32, #tpu.memory_space<vmem>>, vector<1x1x32xf32>
    %230 = vector.shape_cast %229 : vector<1x1x32xf32> to vector<1x32xf32>
    %c0_112 = arith.constant 0 : index
    %c0_113 = arith.constant 0 : index
    %c0_114 = arith.constant 0 : index
    %231 = vector.load %arg23[%c0_112, %c0_113, %c0_114] : memref<2x1x32xf32, #tpu.memory_space<vmem>>, vector<1x1x32xf32>
    %232 = vector.shape_cast %231 : vector<1x1x32xf32> to vector<1x32xf32>
    %cst_115 = arith.constant dense<0.000000e+00> : vector<2x8xf32>
    %233 = vector.multi_reduction <add>, %228, %cst_115 [2] : vector<2x8x32xf32> to vector<2x8xf32>
    %234 = vector.shape_cast %233 : vector<2x8xf32> to vector<2x8x1xf32>
    %cst_116 = arith.constant 3.200000e+01 : f32
    %235 = vector.broadcast %cst_116 : f32 to vector<2x8x1xf32>
    %236 = arith.divf %234, %235 : vector<2x8x1xf32>
    %237 = vector.broadcast %236 : vector<2x8x1xf32> to vector<2x8x32xf32>
    %238 = arith.subf %228, %237 : vector<2x8x32xf32>
    %239 = arith.mulf %238, %238 : vector<2x8x32xf32>
    %cst_117 = arith.constant dense<0.000000e+00> : vector<2x8xf32>
    %240 = vector.multi_reduction <add>, %239, %cst_117 [2] : vector<2x8x32xf32> to vector<2x8xf32>
    %241 = vector.shape_cast %240 : vector<2x8xf32> to vector<2x8x1xf32>
    %cst_118 = arith.constant 3.200000e+01 : f32
    %242 = vector.broadcast %cst_118 : f32 to vector<2x8x1xf32>
    %243 = arith.divf %241, %242 : vector<2x8x1xf32>
    %244 = vector.broadcast %236 : vector<2x8x1xf32> to vector<2x8x32xf32>
    %245 = arith.subf %228, %244 : vector<2x8x32xf32>
    %cst_119 = arith.constant 9.99999996E-13 : f32
    %246 = vector.broadcast %cst_119 : f32 to vector<2x8x1xf32>
    %247 = arith.addf %243, %246 : vector<2x8x1xf32>
    %248 = math.rsqrt %247 : vector<2x8x1xf32>
    %249 = vector.broadcast %248 : vector<2x8x1xf32> to vector<2x8x32xf32>
    %250 = arith.mulf %245, %249 : vector<2x8x32xf32>
    %251 = vector.shape_cast %230 : vector<1x32xf32> to vector<1x1x32xf32>
    %252 = vector.broadcast %251 : vector<1x1x32xf32> to vector<2x8x32xf32>
    %253 = arith.mulf %250, %252 : vector<2x8x32xf32>
    %254 = vector.shape_cast %232 : vector<1x32xf32> to vector<1x1x32xf32>
    %255 = vector.broadcast %254 : vector<1x1x32xf32> to vector<2x8x32xf32>
    %256 = arith.addf %253, %255 : vector<2x8x32xf32>
    %c1 = arith.constant 1 : index
    %c0_120 = arith.constant 0 : index
    %c0_121 = arith.constant 0 : index
    %257 = vector.load %arg8[%c1, %c0_120, %c0_121] : memref<2x32x32xf32, #tpu.memory_space<vmem>>, vector<1x32x32xf32>
    %258 = vector.shape_cast %257 : vector<1x32x32xf32> to vector<32x32xf32>
    %c1_122 = arith.constant 1 : index
    %c0_123 = arith.constant 0 : index
    %c0_124 = arith.constant 0 : index
    %259 = vector.load %arg9[%c1_122, %c0_123, %c0_124] : memref<2x1x32xf32, #tpu.memory_space<vmem>>, vector<1x1x32xf32>
    %260 = vector.shape_cast %259 : vector<1x1x32xf32> to vector<1x32xf32>
    %261 = vector.shape_cast %256 : vector<2x8x32xf32> to vector<16x32xf32>
    %cst_125 = arith.constant dense<0.000000e+00> : vector<16x32xf32>
    %262 = tpu.matmul %261, %258, %cst_125 {dimension_numbers = #tpu.dot_dimension_numbers<[1], [0], [0], [1], [0, 0, 1, 1], [], []>} : vector<16x32xf32>, vector<32x32xf32>, vector<16x32xf32> -> vector<16x32xf32>
    %263 = vector.broadcast %260 : vector<1x32xf32> to vector<16x32xf32>
    %264 = arith.addf %262, %263 : vector<16x32xf32>
    %265 = vector.shape_cast %264 : vector<16x32xf32> to vector<2x8x32xf32>
    %c1_126 = arith.constant 1 : index
    %c0_127 = arith.constant 0 : index
    %c0_128 = arith.constant 0 : index
    %266 = vector.load %arg10[%c1_126, %c0_127, %c0_128] : memref<2x32x32xf32, #tpu.memory_space<vmem>>, vector<1x32x32xf32>
    %267 = vector.shape_cast %266 : vector<1x32x32xf32> to vector<32x32xf32>
    %c1_129 = arith.constant 1 : index
    %c0_130 = arith.constant 0 : index
    %c0_131 = arith.constant 0 : index
    %268 = vector.load %arg11[%c1_129, %c0_130, %c0_131] : memref<2x1x32xf32, #tpu.memory_space<vmem>>, vector<1x1x32xf32>
    %269 = vector.shape_cast %268 : vector<1x1x32xf32> to vector<1x32xf32>
    %270 = vector.shape_cast %256 : vector<2x8x32xf32> to vector<16x32xf32>
    %cst_132 = arith.constant dense<0.000000e+00> : vector<16x32xf32>
    %271 = tpu.matmul %270, %267, %cst_132 {dimension_numbers = #tpu.dot_dimension_numbers<[1], [0], [0], [1], [0, 0, 1, 1], [], []>} : vector<16x32xf32>, vector<32x32xf32>, vector<16x32xf32> -> vector<16x32xf32>
    %272 = vector.broadcast %269 : vector<1x32xf32> to vector<16x32xf32>
    %273 = arith.addf %271, %272 : vector<16x32xf32>
    %274 = vector.shape_cast %273 : vector<16x32xf32> to vector<2x8x32xf32>
    %c1_133 = arith.constant 1 : index
    %c0_134 = arith.constant 0 : index
    %c0_135 = arith.constant 0 : index
    %275 = vector.load %arg12[%c1_133, %c0_134, %c0_135] : memref<2x32x32xf32, #tpu.memory_space<vmem>>, vector<1x32x32xf32>
    %276 = vector.shape_cast %275 : vector<1x32x32xf32> to vector<32x32xf32>
    %c1_136 = arith.constant 1 : index
    %c0_137 = arith.constant 0 : index
    %c0_138 = arith.constant 0 : index
    %277 = vector.load %arg13[%c1_136, %c0_137, %c0_138] : memref<2x1x32xf32, #tpu.memory_space<vmem>>, vector<1x1x32xf32>
    %278 = vector.shape_cast %277 : vector<1x1x32xf32> to vector<1x32xf32>
    %279 = vector.shape_cast %256 : vector<2x8x32xf32> to vector<16x32xf32>
    %cst_139 = arith.constant dense<0.000000e+00> : vector<16x32xf32>
    %280 = tpu.matmul %279, %276, %cst_139 {dimension_numbers = #tpu.dot_dimension_numbers<[1], [0], [0], [1], [0, 0, 1, 1], [], []>} : vector<16x32xf32>, vector<32x32xf32>, vector<16x32xf32> -> vector<16x32xf32>
    %281 = vector.broadcast %278 : vector<1x32xf32> to vector<16x32xf32>
    %282 = arith.addf %280, %281 : vector<16x32xf32>
    %283 = vector.shape_cast %282 : vector<16x32xf32> to vector<2x8x32xf32>
    %284 = vector.extract_strided_slice %265 {offsets = [0, 0, 0], sizes = [2, 8, 8], strides = [1, 1, 1]} : vector<2x8x32xf32> to vector<2x8x8xf32>
    %285 = vector.extract_strided_slice %274 {offsets = [0, 0, 0], sizes = [2, 8, 8], strides = [1, 1, 1]} : vector<2x8x32xf32> to vector<2x8x8xf32>
    %286 = vector.extract_strided_slice %283 {offsets = [0, 0, 0], sizes = [2, 8, 8], strides = [1, 1, 1]} : vector<2x8x32xf32> to vector<2x8x8xf32>
    "tpu.trace_start"() <{level = 10 : i32, message = "bqd,bkd->bqk"}> : () -> ()
    %cst_140 = arith.constant dense<0.000000e+00> : vector<2x8x8xf32>
    %287 = tpu.matmul %284, %285, %cst_140 {dimension_numbers = #tpu.dot_dimension_numbers<[2], [2], [1], [1], [0, 0, 0, 1, 1, 1], [0], [0]>} : vector<2x8x8xf32>, vector<2x8x8xf32>, vector<2x8x8xf32> -> vector<2x8x8xf32>
    "tpu.trace_stop"() : () -> ()
    %cst_141 = arith.constant 0.353553385 : f32
    %288 = vector.broadcast %cst_141 : f32 to vector<2x8x8xf32>
    %289 = arith.mulf %287, %288 : vector<2x8x8xf32>
    %290 = vector.broadcast %50 : vector<2x1x8xf32> to vector<2x8x8xf32>
    %291 = arith.addf %289, %290 : vector<2x8x8xf32>
    %cst_142 = arith.constant dense<0xFF800000> : vector<2x8xf32>
    %292 = vector.multi_reduction <maximumf>, %291, %cst_142 [2] : vector<2x8x8xf32> to vector<2x8xf32>
    %293 = vector.shape_cast %292 : vector<2x8xf32> to vector<2x8x1xf32>
    %294 = vector.broadcast %293 : vector<2x8x1xf32> to vector<2x8x8xf32>
    %295 = arith.subf %291, %294 : vector<2x8x8xf32>
    %296 = math.exp %295 : vector<2x8x8xf32>
    %cst_143 = arith.constant dense<0.000000e+00> : vector<2x8xf32>
    %297 = vector.multi_reduction <add>, %296, %cst_143 [2] : vector<2x8x8xf32> to vector<2x8xf32>
    %298 = vector.shape_cast %297 : vector<2x8xf32> to vector<2x8x1xf32>
    %299 = tpu.reciprocal %298 {approx = true} : vector<2x8x1xf32> -> vector<2x8x1xf32>
    %300 = vector.broadcast %299 : vector<2x8x1xf32> to vector<2x8x8xf32>
    %301 = arith.mulf %296, %300 : vector<2x8x8xf32>
    "tpu.trace_start"() <{level = 10 : i32, message = "bqk,bkd->bqd"}> : () -> ()
    %cst_144 = arith.constant dense<0.000000e+00> : vector<2x8x8xf32>
    %302 = tpu.matmul %301, %286, %cst_144 {dimension_numbers = #tpu.dot_dimension_numbers<[2], [1], [1], [2], [0, 0, 0, 1, 1, 2], [0], [0]>} : vector<2x8x8xf32>, vector<2x8x8xf32>, vector<2x8x8xf32> -> vector<2x8x8xf32>
    "tpu.trace_stop"() : () -> ()
    %c0_145 = arith.constant 0 : index
    %c0_146 = arith.constant 0 : index
    %c0_147 = arith.constant 0 : index
    %303 = vector.load %arg30[%c0_145, %c0_146, %c0_147] : memref<2x8x32xf32, #tpu.memory_space<vmem>>, vector<2x8x8xf32>
    tpu.vector_store %arg30[%c0_145, %c0_146, %c0_147], %302 {strides = array<i32>} : memref<2x8x32xf32, #tpu.memory_space<vmem>>, vector<2x8x8xf32>,
    %304 = vector.extract_strided_slice %265 {offsets = [0, 0, 8], sizes = [2, 8, 8], strides = [1, 1, 1]} : vector<2x8x32xf32> to vector<2x8x8xf32>
    %305 = vector.extract_strided_slice %274 {offsets = [0, 0, 8], sizes = [2, 8, 8], strides = [1, 1, 1]} : vector<2x8x32xf32> to vector<2x8x8xf32>
    %306 = vector.extract_strided_slice %283 {offsets = [0, 0, 8], sizes = [2, 8, 8], strides = [1, 1, 1]} : vector<2x8x32xf32> to vector<2x8x8xf32>
    "tpu.trace_start"() <{level = 10 : i32, message = "bqd,bkd->bqk"}> : () -> ()
    %cst_148 = arith.constant dense<0.000000e+00> : vector<2x8x8xf32>
    %307 = tpu.matmul %304, %305, %cst_148 {dimension_numbers = #tpu.dot_dimension_numbers<[2], [2], [1], [1], [0, 0, 0, 1, 1, 1], [0], [0]>} : vector<2x8x8xf32>, vector<2x8x8xf32>, vector<2x8x8xf32> -> vector<2x8x8xf32>
    "tpu.trace_stop"() : () -> ()
    %cst_149 = arith.constant 0.353553385 : f32
    %308 = vector.broadcast %cst_149 : f32 to vector<2x8x8xf32>
    %309 = arith.mulf %307, %308 : vector<2x8x8xf32>
    %310 = vector.broadcast %50 : vector<2x1x8xf32> to vector<2x8x8xf32>
    %311 = arith.addf %309, %310 : vector<2x8x8xf32>
    %cst_150 = arith.constant dense<0xFF800000> : vector<2x8xf32>
    %312 = vector.multi_reduction <maximumf>, %311, %cst_150 [2] : vector<2x8x8xf32> to vector<2x8xf32>
    %313 = vector.shape_cast %312 : vector<2x8xf32> to vector<2x8x1xf32>
    %314 = vector.broadcast %313 : vector<2x8x1xf32> to vector<2x8x8xf32>
    %315 = arith.subf %311, %314 : vector<2x8x8xf32>
    %316 = math.exp %315 : vector<2x8x8xf32>
    %cst_151 = arith.constant dense<0.000000e+00> : vector<2x8xf32>
    %317 = vector.multi_reduction <add>, %316, %cst_151 [2] : vector<2x8x8xf32> to vector<2x8xf32>
    %318 = vector.shape_cast %317 : vector<2x8xf32> to vector<2x8x1xf32>
    %319 = tpu.reciprocal %318 {approx = true} : vector<2x8x1xf32> -> vector<2x8x1xf32>
    %320 = vector.broadcast %319 : vector<2x8x1xf32> to vector<2x8x8xf32>
    %321 = arith.mulf %316, %320 : vector<2x8x8xf32>
    "tpu.trace_start"() <{level = 10 : i32, message = "bqk,bkd->bqd"}> : () -> ()
    %cst_152 = arith.constant dense<0.000000e+00> : vector<2x8x8xf32>
    %322 = tpu.matmul %321, %306, %cst_152 {dimension_numbers = #tpu.dot_dimension_numbers<[2], [1], [1], [2], [0, 0, 0, 1, 1, 2], [0], [0]>} : vector<2x8x8xf32>, vector<2x8x8xf32>, vector<2x8x8xf32> -> vector<2x8x8xf32>
    "tpu.trace_stop"() : () -> ()
    %c0_153 = arith.constant 0 : index
    %c0_154 = arith.constant 0 : index
    %c8_155 = arith.constant 8 : index
    %323 = vector.load %arg30[%c0_153, %c0_154, %c8_155] : memref<2x8x32xf32, #tpu.memory_space<vmem>>, vector<2x8x8xf32>
    tpu.vector_store %arg30[%c0_153, %c0_154, %c8_155], %322 {strides = array<i32>} : memref<2x8x32xf32, #tpu.memory_space<vmem>>, vector<2x8x8xf32>,
    %324 = vector.extract_strided_slice %265 {offsets = [0, 0, 16], sizes = [2, 8, 8], strides = [1, 1, 1]} : vector<2x8x32xf32> to vector<2x8x8xf32>
    %325 = vector.extract_strided_slice %274 {offsets = [0, 0, 16], sizes = [2, 8, 8], strides = [1, 1, 1]} : vector<2x8x32xf32> to vector<2x8x8xf32>
    %326 = vector.extract_strided_slice %283 {offsets = [0, 0, 16], sizes = [2, 8, 8], strides = [1, 1, 1]} : vector<2x8x32xf32> to vector<2x8x8xf32>
    "tpu.trace_start"() <{level = 10 : i32, message = "bqd,bkd->bqk"}> : () -> ()
    %cst_156 = arith.constant dense<0.000000e+00> : vector<2x8x8xf32>
    %327 = tpu.matmul %324, %325, %cst_156 {dimension_numbers = #tpu.dot_dimension_numbers<[2], [2], [1], [1], [0, 0, 0, 1, 1, 1], [0], [0]>} : vector<2x8x8xf32>, vector<2x8x8xf32>, vector<2x8x8xf32> -> vector<2x8x8xf32>
    "tpu.trace_stop"() : () -> ()
    %cst_157 = arith.constant 0.353553385 : f32
    %328 = vector.broadcast %cst_157 : f32 to vector<2x8x8xf32>
    %329 = arith.mulf %327, %328 : vector<2x8x8xf32>
    %330 = vector.broadcast %50 : vector<2x1x8xf32> to vector<2x8x8xf32>
    %331 = arith.addf %329, %330 : vector<2x8x8xf32>
    %cst_158 = arith.constant dense<0xFF800000> : vector<2x8xf32>
    %332 = vector.multi_reduction <maximumf>, %331, %cst_158 [2] : vector<2x8x8xf32> to vector<2x8xf32>
    %333 = vector.shape_cast %332 : vector<2x8xf32> to vector<2x8x1xf32>
    %334 = vector.broadcast %333 : vector<2x8x1xf32> to vector<2x8x8xf32>
    %335 = arith.subf %331, %334 : vector<2x8x8xf32>
    %336 = math.exp %335 : vector<2x8x8xf32>
    %cst_159 = arith.constant dense<0.000000e+00> : vector<2x8xf32>
    %337 = vector.multi_reduction <add>, %336, %cst_159 [2] : vector<2x8x8xf32> to vector<2x8xf32>
    %338 = vector.shape_cast %337 : vector<2x8xf32> to vector<2x8x1xf32>
    %339 = tpu.reciprocal %338 {approx = true} : vector<2x8x1xf32> -> vector<2x8x1xf32>
    %340 = vector.broadcast %339 : vector<2x8x1xf32> to vector<2x8x8xf32>
    %341 = arith.mulf %336, %340 : vector<2x8x8xf32>
    "tpu.trace_start"() <{level = 10 : i32, message = "bqk,bkd->bqd"}> : () -> ()
    %cst_160 = arith.constant dense<0.000000e+00> : vector<2x8x8xf32>
    %342 = tpu.matmul %341, %326, %cst_160 {dimension_numbers = #tpu.dot_dimension_numbers<[2], [1], [1], [2], [0, 0, 0, 1, 1, 2], [0], [0]>} : vector<2x8x8xf32>, vector<2x8x8xf32>, vector<2x8x8xf32> -> vector<2x8x8xf32>
    "tpu.trace_stop"() : () -> ()
    %c0_161 = arith.constant 0 : index
    %c0_162 = arith.constant 0 : index
    %c16_163 = arith.constant 16 : index
    %343 = vector.load %arg30[%c0_161, %c0_162, %c16_163] : memref<2x8x32xf32, #tpu.memory_space<vmem>>, vector<2x8x8xf32>
    tpu.vector_store %arg30[%c0_161, %c0_162, %c16_163], %342 {strides = array<i32>} : memref<2x8x32xf32, #tpu.memory_space<vmem>>, vector<2x8x8xf32>,
    %344 = vector.extract_strided_slice %265 {offsets = [0, 0, 24], sizes = [2, 8, 8], strides = [1, 1, 1]} : vector<2x8x32xf32> to vector<2x8x8xf32>
    %345 = vector.extract_strided_slice %274 {offsets = [0, 0, 24], sizes = [2, 8, 8], strides = [1, 1, 1]} : vector<2x8x32xf32> to vector<2x8x8xf32>
    %346 = vector.extract_strided_slice %283 {offsets = [0, 0, 24], sizes = [2, 8, 8], strides = [1, 1, 1]} : vector<2x8x32xf32> to vector<2x8x8xf32>
    "tpu.trace_start"() <{level = 10 : i32, message = "bqd,bkd->bqk"}> : () -> ()
    %cst_164 = arith.constant dense<0.000000e+00> : vector<2x8x8xf32>
    %347 = tpu.matmul %344, %345, %cst_164 {dimension_numbers = #tpu.dot_dimension_numbers<[2], [2], [1], [1], [0, 0, 0, 1, 1, 1], [0], [0]>} : vector<2x8x8xf32>, vector<2x8x8xf32>, vector<2x8x8xf32> -> vector<2x8x8xf32>
    "tpu.trace_stop"() : () -> ()
    %cst_165 = arith.constant 0.353553385 : f32
    %348 = vector.broadcast %cst_165 : f32 to vector<2x8x8xf32>
    %349 = arith.mulf %347, %348 : vector<2x8x8xf32>
    %350 = vector.broadcast %50 : vector<2x1x8xf32> to vector<2x8x8xf32>
    %351 = arith.addf %349, %350 : vector<2x8x8xf32>
    %cst_166 = arith.constant dense<0xFF800000> : vector<2x8xf32>
    %352 = vector.multi_reduction <maximumf>, %351, %cst_166 [2] : vector<2x8x8xf32> to vector<2x8xf32>
    %353 = vector.shape_cast %352 : vector<2x8xf32> to vector<2x8x1xf32>
    %354 = vector.broadcast %353 : vector<2x8x1xf32> to vector<2x8x8xf32>
    %355 = arith.subf %351, %354 : vector<2x8x8xf32>
    %356 = math.exp %355 : vector<2x8x8xf32>
    %cst_167 = arith.constant dense<0.000000e+00> : vector<2x8xf32>
    %357 = vector.multi_reduction <add>, %356, %cst_167 [2] : vector<2x8x8xf32> to vector<2x8xf32>
    %358 = vector.shape_cast %357 : vector<2x8xf32> to vector<2x8x1xf32>
    %359 = tpu.reciprocal %358 {approx = true} : vector<2x8x1xf32> -> vector<2x8x1xf32>
    %360 = vector.broadcast %359 : vector<2x8x1xf32> to vector<2x8x8xf32>
    %361 = arith.mulf %356, %360 : vector<2x8x8xf32>
    "tpu.trace_start"() <{level = 10 : i32, message = "bqk,bkd->bqd"}> : () -> ()
    %cst_168 = arith.constant dense<0.000000e+00> : vector<2x8x8xf32>
    %362 = tpu.matmul %361, %346, %cst_168 {dimension_numbers = #tpu.dot_dimension_numbers<[2], [1], [1], [2], [0, 0, 0, 1, 1, 2], [0], [0]>} : vector<2x8x8xf32>, vector<2x8x8xf32>, vector<2x8x8xf32> -> vector<2x8x8xf32>
    "tpu.trace_stop"() : () -> ()
    %c0_169 = arith.constant 0 : index
    %c0_170 = arith.constant 0 : index
    %c24_171 = arith.constant 24 : index
    %363 = vector.load %arg30[%c0_169, %c0_170, %c24_171] : memref<2x8x32xf32, #tpu.memory_space<vmem>>, vector<2x8x8xf32>
    tpu.vector_store %arg30[%c0_169, %c0_170, %c24_171], %362 {strides = array<i32>} : memref<2x8x32xf32, #tpu.memory_space<vmem>>, vector<2x8x8xf32>,
    %c0_172 = arith.constant 0 : index
    %c0_173 = arith.constant 0 : index
    %c0_174 = arith.constant 0 : index
    %364 = vector.load %arg30[%c0_172, %c0_173, %c0_174] : memref<2x8x32xf32, #tpu.memory_space<vmem>>, vector<2x8x32xf32>
    %c1_175 = arith.constant 1 : index
    %c0_176 = arith.constant 0 : index
    %c0_177 = arith.constant 0 : index
    %365 = vector.load %arg14[%c1_175, %c0_176, %c0_177] : memref<2x32x32xf32, #tpu.memory_space<vmem>>, vector<1x32x32xf32>
    %366 = vector.shape_cast %365 : vector<1x32x32xf32> to vector<32x32xf32>
    %c1_178 = arith.constant 1 : index
    %c0_179 = arith.constant 0 : index
    %c0_180 = arith.constant 0 : index
    %367 = vector.load %arg15[%c1_178, %c0_179, %c0_180] : memref<2x1x32xf32, #tpu.memory_space<vmem>>, vector<1x1x32xf32>
    %368 = vector.shape_cast %367 : vector<1x1x32xf32> to vector<1x32xf32>
    %369 = vector.shape_cast %364 : vector<2x8x32xf32> to vector<16x32xf32>
    %cst_181 = arith.constant dense<0.000000e+00> : vector<16x32xf32>
    %370 = tpu.matmul %369, %366, %cst_181 {dimension_numbers = #tpu.dot_dimension_numbers<[1], [0], [0], [1], [0, 0, 1, 1], [], []>} : vector<16x32xf32>, vector<32x32xf32>, vector<16x32xf32> -> vector<16x32xf32>
    %371 = vector.broadcast %368 : vector<1x32xf32> to vector<16x32xf32>
    %372 = arith.addf %370, %371 : vector<16x32xf32>
    %373 = vector.shape_cast %372 : vector<16x32xf32> to vector<2x8x32xf32>
    %374 = arith.addf %256, %373 : vector<2x8x32xf32>
    %c1_182 = arith.constant 1 : index
    %c0_183 = arith.constant 0 : index
    %c0_184 = arith.constant 0 : index
    %375 = vector.load %arg16[%c1_182, %c0_183, %c0_184] : memref<2x1x32xf32, #tpu.memory_space<vmem>>, vector<1x1x32xf32>
    %376 = vector.shape_cast %375 : vector<1x1x32xf32> to vector<1x32xf32>
    %c1_185 = arith.constant 1 : index
    %c0_186 = arith.constant 0 : index
    %c0_187 = arith.constant 0 : index
    %377 = vector.load %arg17[%c1_185, %c0_186, %c0_187] : memref<2x1x32xf32, #tpu.memory_space<vmem>>, vector<1x1x32xf32>
    %378 = vector.shape_cast %377 : vector<1x1x32xf32> to vector<1x32xf32>
    %cst_188 = arith.constant dense<0.000000e+00> : vector<2x8xf32>
    %379 = vector.multi_reduction <add>, %374, %cst_188 [2] : vector<2x8x32xf32> to vector<2x8xf32>
    %380 = vector.shape_cast %379 : vector<2x8xf32> to vector<2x8x1xf32>
    %cst_189 = arith.constant 3.200000e+01 : f32
    %381 = vector.broadcast %cst_189 : f32 to vector<2x8x1xf32>
    %382 = arith.divf %380, %381 : vector<2x8x1xf32>
    %383 = vector.broadcast %382 : vector<2x8x1xf32> to vector<2x8x32xf32>
    %384 = arith.subf %374, %383 : vector<2x8x32xf32>
    %385 = arith.mulf %384, %384 : vector<2x8x32xf32>
    %cst_190 = arith.constant dense<0.000000e+00> : vector<2x8xf32>
    %386 = vector.multi_reduction <add>, %385, %cst_190 [2] : vector<2x8x32xf32> to vector<2x8xf32>
    %387 = vector.shape_cast %386 : vector<2x8xf32> to vector<2x8x1xf32>
    %cst_191 = arith.constant 3.200000e+01 : f32
    %388 = vector.broadcast %cst_191 : f32 to vector<2x8x1xf32>
    %389 = arith.divf %387, %388 : vector<2x8x1xf32>
    %390 = vector.broadcast %382 : vector<2x8x1xf32> to vector<2x8x32xf32>
    %391 = arith.subf %374, %390 : vector<2x8x32xf32>
    %cst_192 = arith.constant 9.99999996E-13 : f32
    %392 = vector.broadcast %cst_192 : f32 to vector<2x8x1xf32>
    %393 = arith.addf %389, %392 : vector<2x8x1xf32>
    %394 = math.rsqrt %393 : vector<2x8x1xf32>
    %395 = vector.broadcast %394 : vector<2x8x1xf32> to vector<2x8x32xf32>
    %396 = arith.mulf %391, %395 : vector<2x8x32xf32>
    %397 = vector.shape_cast %376 : vector<1x32xf32> to vector<1x1x32xf32>
    %398 = vector.broadcast %397 : vector<1x1x32xf32> to vector<2x8x32xf32>
    %399 = arith.mulf %396, %398 : vector<2x8x32xf32>
    %400 = vector.shape_cast %378 : vector<1x32xf32> to vector<1x1x32xf32>
    %401 = vector.broadcast %400 : vector<1x1x32xf32> to vector<2x8x32xf32>
    %402 = arith.addf %399, %401 : vector<2x8x32xf32>
    %c1_193 = arith.constant 1 : index
    %c0_194 = arith.constant 0 : index
    %c0_195 = arith.constant 0 : index
    %403 = vector.load %arg18[%c1_193, %c0_194, %c0_195] : memref<2x32x64xf32, #tpu.memory_space<vmem>>, vector<1x32x64xf32>
    %404 = vector.shape_cast %403 : vector<1x32x64xf32> to vector<32x64xf32>
    %c1_196 = arith.constant 1 : index
    %c0_197 = arith.constant 0 : index
    %c0_198 = arith.constant 0 : index
    %405 = vector.load %arg19[%c1_196, %c0_197, %c0_198] : memref<2x1x64xf32, #tpu.memory_space<vmem>>, vector<1x1x64xf32>
    %406 = vector.shape_cast %405 : vector<1x1x64xf32> to vector<1x64xf32>
    %407 = vector.shape_cast %402 : vector<2x8x32xf32> to vector<16x32xf32>
    %cst_199 = arith.constant dense<0.000000e+00> : vector<16x64xf32>
    %408 = tpu.matmul %407, %404, %cst_199 {dimension_numbers = #tpu.dot_dimension_numbers<[1], [0], [0], [1], [0, 0, 1, 1], [], []>} : vector<16x32xf32>, vector<32x64xf32>, vector<16x64xf32> -> vector<16x64xf32>
    %409 = vector.broadcast %406 : vector<1x64xf32> to vector<16x64xf32>
    %410 = arith.addf %408, %409 : vector<16x64xf32>
    %411 = vector.shape_cast %410 : vector<16x64xf32> to vector<2x8x64xf32>
    %cst_200 = arith.constant 5.000000e-01 : f32
    %412 = vector.broadcast %cst_200 : f32 to vector<2x8x64xf32>
    %413 = arith.mulf %412, %411 : vector<2x8x64xf32>
    %cst_201 = arith.constant 4.471500e-02 : f32
    %414 = vector.broadcast %cst_201 : f32 to vector<2x8x64xf32>
    %415 = arith.mulf %414, %411 : vector<2x8x64xf32>
    %416 = arith.mulf %415, %411 : vector<2x8x64xf32>
    %417 = arith.mulf %416, %411 : vector<2x8x64xf32>
    %418 = arith.addf %411, %417 : vector<2x8x64xf32>
    %cst_202 = arith.constant 0.797884583 : f32
    %419 = vector.broadcast %cst_202 : f32 to vector<2x8x64xf32>
    %420 = arith.mulf %419, %418 : vector<2x8x64xf32>
    %421 = math.tanh %420 : vector<2x8x64xf32>
    %cst_203 = arith.constant 1.000000e+00 : f32
    %422 = vector.broadcast %cst_203 : f32 to vector<2x8x64xf32>
    %423 = arith.addf %422, %421 : vector<2x8x64xf32>
    %424 = arith.mulf %413, %423 : vector<2x8x64xf32>
    %c1_204 = arith.constant 1 : index
    %c0_205 = arith.constant 0 : index
    %c0_206 = arith.constant 0 : index
    %425 = vector.load %arg20[%c1_204, %c0_205, %c0_206] : memref<2x64x32xf32, #tpu.memory_space<vmem>>, vector<1x64x32xf32>
    %426 = vector.shape_cast %425 : vector<1x64x32xf32> to vector<64x32xf32>
    %c1_207 = arith.constant 1 : index
    %c0_208 = arith.constant 0 : index
    %c0_209 = arith.constant 0 : index
    %427 = vector.load %arg21[%c1_207, %c0_208, %c0_209] : memref<2x1x32xf32, #tpu.memory_space<vmem>>, vector<1x1x32xf32>
    %428 = vector.shape_cast %427 : vector<1x1x32xf32> to vector<1x32xf32>
    %429 = vector.shape_cast %424 : vector<2x8x64xf32> to vector<16x64xf32>
    %cst_210 = arith.constant dense<0.000000e+00> : vector<16x32xf32>
    %430 = tpu.matmul %429, %426, %cst_210 {dimension_numbers = #tpu.dot_dimension_numbers<[1], [0], [0], [1], [0, 0, 1, 1], [], []>} : vector<16x64xf32>, vector<64x32xf32>, vector<16x32xf32> -> vector<16x32xf32>
    %431 = vector.broadcast %428 : vector<1x32xf32> to vector<16x32xf32>
    %432 = arith.addf %430, %431 : vector<16x32xf32>
    %433 = vector.shape_cast %432 : vector<16x32xf32> to vector<2x8x32xf32>
    %434 = arith.addf %402, %433 : vector<2x8x32xf32>
    %c1_211 = arith.constant 1 : index
    %c0_212 = arith.constant 0 : index
    %c0_213 = arith.constant 0 : index
    %435 = vector.load %arg22[%c1_211, %c0_212, %c0_213] : memref<2x1x32xf32, #tpu.memory_space<vmem>>, vector<1x1x32xf32>
    %436 = vector.shape_cast %435 : vector<1x1x32xf32> to vector<1x32xf32>
    %c1_214 = arith.constant 1 : index
    %c0_215 = arith.constant 0 : index
    %c0_216 = arith.constant 0 : index
    %437 = vector.load %arg23[%c1_214, %c0_215, %c0_216] : memref<2x1x32xf32, #tpu.memory_space<vmem>>, vector<1x1x32xf32>
    %438 = vector.shape_cast %437 : vector<1x1x32xf32> to vector<1x32xf32>
    %cst_217 = arith.constant dense<0.000000e+00> : vector<2x8xf32>
    %439 = vector.multi_reduction <add>, %434, %cst_217 [2] : vector<2x8x32xf32> to vector<2x8xf32>
    %440 = vector.shape_cast %439 : vector<2x8xf32> to vector<2x8x1xf32>
    %cst_218 = arith.constant 3.200000e+01 : f32
    %441 = vector.broadcast %cst_218 : f32 to vector<2x8x1xf32>
    %442 = arith.divf %440, %441 : vector<2x8x1xf32>
    %443 = vector.broadcast %442 : vector<2x8x1xf32> to vector<2x8x32xf32>
    %444 = arith.subf %434, %443 : vector<2x8x32xf32>
    %445 = arith.mulf %444, %444 : vector<2x8x32xf32>
    %cst_219 = arith.constant dense<0.000000e+00> : vector<2x8xf32>
    %446 = vector.multi_reduction <add>, %445, %cst_219 [2] : vector<2x8x32xf32> to vector<2x8xf32>
    %447 = vector.shape_cast %446 : vector<2x8xf32> to vector<2x8x1xf32>
    %cst_220 = arith.constant 3.200000e+01 : f32
    %448 = vector.broadcast %cst_220 : f32 to vector<2x8x1xf32>
    %449 = arith.divf %447, %448 : vector<2x8x1xf32>
    %450 = vector.broadcast %442 : vector<2x8x1xf32> to vector<2x8x32xf32>
    %451 = arith.subf %434, %450 : vector<2x8x32xf32>
    %cst_221 = arith.constant 9.99999996E-13 : f32
    %452 = vector.broadcast %cst_221 : f32 to vector<2x8x1xf32>
    %453 = arith.addf %449, %452 : vector<2x8x1xf32>
    %454 = math.rsqrt %453 : vector<2x8x1xf32>
    %455 = vector.broadcast %454 : vector<2x8x1xf32> to vector<2x8x32xf32>
    %456 = arith.mulf %451, %455 : vector<2x8x32xf32>
    %457 = vector.shape_cast %436 : vector<1x32xf32> to vector<1x1x32xf32>
    %458 = vector.broadcast %457 : vector<1x1x32xf32> to vector<2x8x32xf32>
    %459 = arith.mulf %456, %458 : vector<2x8x32xf32>
    %460 = vector.shape_cast %438 : vector<1x32xf32> to vector<1x1x32xf32>
    %461 = vector.broadcast %460 : vector<1x1x32xf32> to vector<2x8x32xf32>
    %462 = arith.addf %459, %461 : vector<2x8x32xf32>
    %463 = vector.extract_strided_slice %462 {offsets = [0, 0, 0], sizes = [2, 1, 32], strides = [1, 1, 1]} : vector<2x8x32xf32> to vector<2x1x32xf32>
    %464 = vector.shape_cast %463 : vector<2x1x32xf32> to vector<2x32xf32>
    %c0_222 = arith.constant 0 : index
    %c0_223 = arith.constant 0 : index
    %465 = vector.load %arg24[%c0_222, %c0_223] : memref<32x32xf32, #tpu.memory_space<vmem>>, vector<32x32xf32>
    %cst_224 = arith.constant dense<0.000000e+00> : vector<2x32xf32>
    %466 = tpu.matmul %464, %465, %cst_224 {dimension_numbers = #tpu.dot_dimension_numbers<[1], [0], [0], [1], [0, 0, 1, 1], [], []>} : vector<2x32xf32>, vector<32x32xf32>, vector<2x32xf32> -> vector<2x32xf32>
    %c0_225 = arith.constant 0 : index
    %c0_226 = arith.constant 0 : index
    %467 = vector.load %arg25[%c0_225, %c0_226] : memref<1x32xf32, #tpu.memory_space<vmem>>, vector<1x32xf32>
    %468 = vector.broadcast %467 : vector<1x32xf32> to vector<2x32xf32>
    %469 = arith.addf %466, %468 : vector<2x32xf32>
    %470 = math.tanh %469 : vector<2x32xf32>
    %c0_227 = arith.constant 0 : index
    %c0_228 = arith.constant 0 : index
    %471 = vector.load %arg26[%c0_227, %c0_228] : memref<32x12xf32, #tpu.memory_space<vmem>>, vector<32x12xf32>
    %cst_229 = arith.constant dense<0.000000e+00> : vector<2x12xf32>
    %472 = tpu.matmul %470, %471, %cst_229 {dimension_numbers = #tpu.dot_dimension_numbers<[1], [0], [0], [1], [0, 0, 1, 1], [], []>} : vector<2x32xf32>, vector<32x12xf32>, vector<2x12xf32> -> vector<2x12xf32>
    %c0_230 = arith.constant 0 : index
    %c0_231 = arith.constant 0 : index
    %473 = vector.load %arg27[%c0_230, %c0_231] : memref<1x12xf32, #tpu.memory_space<vmem>>, vector<1x12xf32>
    %474 = vector.broadcast %473 : vector<1x12xf32> to vector<2x12xf32>
    %475 = arith.addf %472, %474 : vector<2x12xf32>
    %c0_232 = arith.constant 0 : index
    %c0_233 = arith.constant 0 : index
    %476 = vector.load %arg2[%c0_232, %c0_233] : memref<2x4xi32, #tpu.memory_space<vmem>>, vector<2x4xi32>
    %477 = vector.extract_strided_slice %475 {offsets = [0, 0], sizes = [2, 3], strides = [1, 1]} : vector<2x12xf32> to vector<2x3xf32>
    %c0_234 = arith.constant 0 : index
    %c0_235 = arith.constant 0 : index
    %c0_236 = arith.constant 0 : index
    %478 = vector.load %arg28[%c0_234, %c0_235, %c0_236] : memref<2x4x3xf32, #tpu.memory_space<vmem>>, vector<2x1x3xf32>
    %479 = vector.shape_cast %478 : vector<2x1x3xf32> to vector<2x3xf32>
    %480 = vector.shape_cast %477 : vector<2x3xf32> to vector<2x1x3xf32>
    tpu.vector_store %arg28[%c0_234, %c0_235, %c0_236], %480 {strides = array<i32>} : memref<2x4x3xf32, #tpu.memory_space<vmem>>, vector<2x1x3xf32>,
    %cst_237 = arith.constant dense<0xFF800000> : vector<2xf32>
    %481 = vector.multi_reduction <maximumf>, %477, %cst_237 [1] : vector<2x3xf32> to vector<2xf32>
    %482 = vector.shape_cast %481 : vector<2xf32> to vector<2x1xf32>
    %483 = vector.broadcast %482 : vector<2x1xf32> to vector<2x3xf32>
    %484 = arith.subf %477, %483 : vector<2x3xf32>
    %485 = math.exp %484 : vector<2x3xf32>
    %cst_238 = arith.constant dense<0.000000e+00> : vector<2xf32>
    %486 = vector.multi_reduction <add>, %485, %cst_238 [1] : vector<2x3xf32> to vector<2xf32>
    %487 = vector.shape_cast %486 : vector<2xf32> to vector<2x1xf32>
    %488 = math.log %487 : vector<2x1xf32>
    %489 = vector.broadcast %488 : vector<2x1xf32> to vector<2x3xf32>
    %490 = arith.subf %484, %489 : vector<2x3xf32>
    %491 = tpu.iota {dimensions = array<i32: 1>} : vector<2x3xi32>
    %492 = vector.extract_strided_slice %476 {offsets = [0, 0], sizes = [2, 1], strides = [1, 1]} : vector<2x4xi32> to vector<2x1xi32>
    %493 = vector.broadcast %492 : vector<2x1xi32> to vector<2x3xi32>
    %494 = arith.cmpi eq, %493, %491 : vector<2x3xi32>
    %495 = arith.extui %494 : vector<2x3xi1> to vector<2x3xi32>
    %496 = arith.sitofp %495 : vector<2x3xi32> to vector<2x3xf32>
    %497 = arith.mulf %490, %496 : vector<2x3xf32>
    %498 = vector.shape_cast %497 : vector<2x3xf32> to vector<1x2x3xf32>
    %cst_239 = arith.constant dense<0.000000e+00> : vector<1xf32>
    %499 = vector.multi_reduction <add>, %498, %cst_239 [1, 2] : vector<1x2x3xf32> to vector<1xf32>
    %500 = vector.shape_cast %499 : vector<1xf32> to vector<1x1x1xf32>
    %501 = vector.extract %500[0, 0, 0] : f32 from vector<1x1x1xf32>
    %cst_240 = arith.constant 0.000000e+00 : f32
    %502 = arith.subf %cst_240, %501 : f32
    %cst_241 = arith.constant 0.000000e+00 : f32
    %503 = arith.addf %cst_241, %502 : f32
    %504 = vector.extract_strided_slice %475 {offsets = [0, 3], sizes = [2, 3], strides = [1, 1]} : vector<2x12xf32> to vector<2x3xf32>
    %c0_242 = arith.constant 0 : index
    %c1_243 = arith.constant 1 : index
    %c0_244 = arith.constant 0 : index
    %505 = vector.load %arg28[%c0_242, %c1_243, %c0_244] : memref<2x4x3xf32, #tpu.memory_space<vmem>>, vector<2x1x3xf32>
    %506 = vector.shape_cast %505 : vector<2x1x3xf32> to vector<2x3xf32>
    %507 = vector.shape_cast %504 : vector<2x3xf32> to vector<2x1x3xf32>
    tpu.vector_store %arg28[%c0_242, %c1_243, %c0_244], %507 {strides = array<i32>} : memref<2x4x3xf32, #tpu.memory_space<vmem>>, vector<2x1x3xf32>,
    %cst_245 = arith.constant dense<0xFF800000> : vector<2xf32>
    %508 = vector.multi_reduction <maximumf>, %504, %cst_245 [1] : vector<2x3xf32> to vector<2xf32>
    %509 = vector.shape_cast %508 : vector<2xf32> to vector<2x1xf32>
    %510 = vector.broadcast %509 : vector<2x1xf32> to vector<2x3xf32>
    %511 = arith.subf %504, %510 : vector<2x3xf32>
    %512 = math.exp %511 : vector<2x3xf32>
    %cst_246 = arith.constant dense<0.000000e+00> : vector<2xf32>
    %513 = vector.multi_reduction <add>, %512, %cst_246 [1] : vector<2x3xf32> to vector<2xf32>
    %514 = vector.shape_cast %513 : vector<2xf32> to vector<2x1xf32>
    %515 = math.log %514 : vector<2x1xf32>
    %516 = vector.broadcast %515 : vector<2x1xf32> to vector<2x3xf32>
    %517 = arith.subf %511, %516 : vector<2x3xf32>
    %518 = tpu.iota {dimensions = array<i32: 1>} : vector<2x3xi32>
    %519 = vector.extract_strided_slice %476 {offsets = [0, 1], sizes = [2, 1], strides = [1, 1]} : vector<2x4xi32> to vector<2x1xi32>
    %520 = vector.broadcast %519 : vector<2x1xi32> to vector<2x3xi32>
    %521 = arith.cmpi eq, %520, %518 : vector<2x3xi32>
    %522 = arith.extui %521 : vector<2x3xi1> to vector<2x3xi32>
    %523 = arith.sitofp %522 : vector<2x3xi32> to vector<2x3xf32>
    %524 = arith.mulf %517, %523 : vector<2x3xf32>
    %525 = vector.shape_cast %524 : vector<2x3xf32> to vector<1x2x3xf32>
    %cst_247 = arith.constant dense<0.000000e+00> : vector<1xf32>
    %526 = vector.multi_reduction <add>, %525, %cst_247 [1, 2] : vector<1x2x3xf32> to vector<1xf32>
    %527 = vector.shape_cast %526 : vector<1xf32> to vector<1x1x1xf32>
    %528 = vector.extract %527[0, 0, 0] : f32 from vector<1x1x1xf32>
    %cst_248 = arith.constant 0.000000e+00 : f32
    %529 = arith.subf %cst_248, %528 : f32
    %530 = arith.addf %503, %529 : f32
    %531 = vector.extract_strided_slice %475 {offsets = [0, 6], sizes = [2, 3], strides = [1, 1]} : vector<2x12xf32> to vector<2x3xf32>
    %c0_249 = arith.constant 0 : index
    %c2 = arith.constant 2 : index
    %c0_250 = arith.constant 0 : index
    %532 = vector.load %arg28[%c0_249, %c2, %c0_250] : memref<2x4x3xf32, #tpu.memory_space<vmem>>, vector<2x1x3xf32>
    %533 = vector.shape_cast %532 : vector<2x1x3xf32> to vector<2x3xf32>
    %534 = vector.shape_cast %531 : vector<2x3xf32> to vector<2x1x3xf32>
    tpu.vector_store %arg28[%c0_249, %c2, %c0_250], %534 {strides = array<i32>} : memref<2x4x3xf32, #tpu.memory_space<vmem>>, vector<2x1x3xf32>,
    %cst_251 = arith.constant dense<0xFF800000> : vector<2xf32>
    %535 = vector.multi_reduction <maximumf>, %531, %cst_251 [1] : vector<2x3xf32> to vector<2xf32>
    %536 = vector.shape_cast %535 : vector<2xf32> to vector<2x1xf32>
    %537 = vector.broadcast %536 : vector<2x1xf32> to vector<2x3xf32>
    %538 = arith.subf %531, %537 : vector<2x3xf32>
    %539 = math.exp %538 : vector<2x3xf32>
    %cst_252 = arith.constant dense<0.000000e+00> : vector<2xf32>
    %540 = vector.multi_reduction <add>, %539, %cst_252 [1] : vector<2x3xf32> to vector<2xf32>
    %541 = vector.shape_cast %540 : vector<2xf32> to vector<2x1xf32>
    %542 = math.log %541 : vector<2x1xf32>
    %543 = vector.broadcast %542 : vector<2x1xf32> to vector<2x3xf32>
    %544 = arith.subf %538, %543 : vector<2x3xf32>
    %545 = tpu.iota {dimensions = array<i32: 1>} : vector<2x3xi32>
    %546 = vector.extract_strided_slice %476 {offsets = [0, 2], sizes = [2, 1], strides = [1, 1]} : vector<2x4xi32> to vector<2x1xi32>
    %547 = vector.broadcast %546 : vector<2x1xi32> to vector<2x3xi32>
    %548 = arith.cmpi eq, %547, %545 : vector<2x3xi32>
    %549 = arith.extui %548 : vector<2x3xi1> to vector<2x3xi32>
    %550 = arith.sitofp %549 : vector<2x3xi32> to vector<2x3xf32>
    %551 = arith.mulf %544, %550 : vector<2x3xf32>
    %552 = vector.shape_cast %551 : vector<2x3xf32> to vector<1x2x3xf32>
    %cst_253 = arith.constant dense<0.000000e+00> : vector<1xf32>
    %553 = vector.multi_reduction <add>, %552, %cst_253 [1, 2] : vector<1x2x3xf32> to vector<1xf32>
    %554 = vector.shape_cast %553 : vector<1xf32> to vector<1x1x1xf32>
    %555 = vector.extract %554[0, 0, 0] : f32 from vector<1x1x1xf32>
    %cst_254 = arith.constant 0.000000e+00 : f32
    %556 = arith.subf %cst_254, %555 : f32
    %557 = arith.addf %530, %556 : f32
    %558 = vector.extract_strided_slice %475 {offsets = [0, 9], sizes = [2, 3], strides = [1, 1]} : vector<2x12xf32> to vector<2x3xf32>
    %c0_255 = arith.constant 0 : index
    %c3 = arith.constant 3 : index
    %c0_256 = arith.constant 0 : index
    %559 = vector.load %arg28[%c0_255, %c3, %c0_256] : memref<2x4x3xf32, #tpu.memory_space<vmem>>, vector<2x1x3xf32>
    %560 = vector.shape_cast %559 : vector<2x1x3xf32> to vector<2x3xf32>
    %561 = vector.shape_cast %558 : vector<2x3xf32> to vector<2x1x3xf32>
    tpu.vector_store %arg28[%c0_255, %c3, %c0_256], %561 {strides = array<i32>} : memref<2x4x3xf32, #tpu.memory_space<vmem>>, vector<2x1x3xf32>,
    %cst_257 = arith.constant dense<0xFF800000> : vector<2xf32>
    %562 = vector.multi_reduction <maximumf>, %558, %cst_257 [1] : vector<2x3xf32> to vector<2xf32>
    %563 = vector.shape_cast %562 : vector<2xf32> to vector<2x1xf32>
    %564 = vector.broadcast %563 : vector<2x1xf32> to vector<2x3xf32>
    %565 = arith.subf %558, %564 : vector<2x3xf32>
    %566 = math.exp %565 : vector<2x3xf32>
    %cst_258 = arith.constant dense<0.000000e+00> : vector<2xf32>
    %567 = vector.multi_reduction <add>, %566, %cst_258 [1] : vector<2x3xf32> to vector<2xf32>
    %568 = vector.shape_cast %567 : vector<2xf32> to vector<2x1xf32>
    %569 = math.log %568 : vector<2x1xf32>
    %570 = vector.broadcast %569 : vector<2x1xf32> to vector<2x3xf32>
    %571 = arith.subf %565, %570 : vector<2x3xf32>
    %572 = tpu.iota {dimensions = array<i32: 1>} : vector<2x3xi32>
    %573 = vector.extract_strided_slice %476 {offsets = [0, 3], sizes = [2, 1], strides = [1, 1]} : vector<2x4xi32> to vector<2x1xi32>
    %574 = vector.broadcast %573 : vector<2x1xi32> to vector<2x3xi32>
    %575 = arith.cmpi eq, %574, %572 : vector<2x3xi32>
    %576 = arith.extui %575 : vector<2x3xi1> to vector<2x3xi32>
    %577 = arith.sitofp %576 : vector<2x3xi32> to vector<2x3xf32>
    %578 = arith.mulf %571, %577 : vector<2x3xf32>
    %579 = vector.shape_cast %578 : vector<2x3xf32> to vector<1x2x3xf32>
    %cst_259 = arith.constant dense<0.000000e+00> : vector<1xf32>
    %580 = vector.multi_reduction <add>, %579, %cst_259 [1, 2] : vector<1x2x3xf32> to vector<1xf32>
    %581 = vector.shape_cast %580 : vector<1xf32> to vector<1x1x1xf32>
    %582 = vector.extract %581[0, 0, 0] : f32 from vector<1x1x1xf32>
    %cst_260 = arith.constant 0.000000e+00 : f32
    %583 = arith.subf %cst_260, %582 : f32
    %584 = arith.addf %557, %583 : f32
    %cst_261 = arith.constant 8.000000e+00 : f32
    %585 = arith.divf %584, %cst_261 : f32
    %586 = vector.broadcast %585 : f32 to vector<1x1xf32>
    %c0_262 = arith.constant 0 : index
    %c0_263 = arith.constant 0 : index
    %587 = vector.load %arg29[%c0_262, %c0_263] : memref<1x1xf32, #tpu.memory_space<vmem>>, vector<1x1xf32>
    tpu.vector_store %arg29[%c0_262, %c0_263], %586 {strides = array<i32>} : memref<1x1xf32, #tpu.memory_space<vmem>>, vector<1x1xf32>,
    return
  }
}

</mosaic_0001>

<llo_original>
// kernel: _forward_jit.1
$region0: #{_forward_jit.1}
  #allocation0 [shape = 'u32[]', space=smem, size = 0x4, offset = 0x4, fixed_abs, tag = 'smem constant byte address 0x4 - core index']
  #allocation1 [shape = 'u32[72,128]{1,0:T(1,128)}', space=vmem, size = 0x9000, scoped, tag = 'internal scratch']
  #allocation2 [shape = 'f32[2,8,32]{2,1,0:T(8,128)}', space=vmem, size = 0x2000, scoped, tag = 'scratch operand']
  %s0 = inlined_call_operand.smem [shape: u32[30], index: -1, kind: input, shape index: {}]
  %s1 = sld [smem:[%s0]]
  %s2 = scalar_lea.smem %s0, 1
  %s3 = sld [smem:[%s2]]
  %s4 = scalar_lea.smem %s0, 2
  %s5 = sld [smem:[%s4]]
  %s6 = scalar_lea.smem %s0, 3
  %s7 = sld [smem:[%s6]]
  %s8 = scalar_lea.smem %s0, 4
  %s9 = sld [smem:[%s8]]
  %s10 = scalar_lea.smem %s0, 5
  %s11 = sld [smem:[%s10]]
  %s12 = scalar_lea.smem %s0, 6
  %s13 = sld [smem:[%s12]]
  %s14 = scalar_lea.smem %s0, 7
  %s15 = sld [smem:[%s14]]
  %s16 = scalar_lea.smem %s0, 8
  %s17 = sld [smem:[%s16]]
  %s18 = scalar_lea.smem %s0, 9
  %s19 = sld [smem:[%s18]]
  %s20 = scalar_lea.smem %s0, 10
  %s21 = sld [smem:[%s20]]
  %s22 = scalar_lea.smem %s0, 11
  %s23 = sld [smem:[%s22]]
  %s24 = scalar_lea.smem %s0, 12
  %s25 = sld [smem:[%s24]]
  %s26 = scalar_lea.smem %s0, 13
  %s27 = sld [smem:[%s26]]
  %s28 = scalar_lea.smem %s0, 14
  %s29 = sld [smem:[%s28]]
  %s30 = scalar_lea.smem %s0, 15
  %s31 = sld [smem:[%s30]]
  %s32 = scalar_lea.smem %s0, 16
  %s33 = sld [smem:[%s32]]
  %s34 = scalar_lea.smem %s0, 17
  %s35 = sld [smem:[%s34]]
  %s36 = scalar_lea.smem %s0, 18
  %s37 = sld [smem:[%s36]]
  %s38 = scalar_lea.smem %s0, 19
  %s39 = sld [smem:[%s38]]
  %s40 = scalar_lea.smem %s0, 20
  %s41 = sld [smem:[%s40]]
  %s42 = scalar_lea.smem %s0, 21
  %s43 = sld [smem:[%s42]]
  %s44 = scalar_lea.smem %s0, 22
  %s45 = sld [smem:[%s44]]
  %s46 = scalar_lea.smem %s0, 23
  %s47 = sld [smem:[%s46]]
  %s48 = scalar_lea.smem %s0, 24
  %s49 = sld [smem:[%s48]]
  %s50 = scalar_lea.smem %s0, 25
  %s51 = sld [smem:[%s50]]
  %s52 = scalar_lea.smem %s0, 26
  %s53 = sld [smem:[%s52]]
  %s54 = scalar_lea.smem %s0, 27
  %s55 = sld [smem:[%s54]]
  %s56 = scalar_lea.smem %s0, 28
  %s57 = sld [smem:[%s56]]
  %s58 = scalar_lea.smem %s0, 29
  %s59 = sld [smem:[%s58]]
  %60 = xla_tuple %s57, %s59
  %s61 = sld [smem:[#allocation0]]
  $region194: #{_forward_jit.1} parent=0
    _
  %s63 = ssub.s32 1, %s61
  %s64 = scalar_select 0, %s63, %s61
  $region1: #{_forward_jit.1} parent=0
    #allocation3 [shape = 'u8[8192]{0}', space=vmem, size = 0x2000, scoped, tag = 'input window, operand 4, single buffered']
    #allocation4 [shape = 's32[1]{0}', space=sflag, size = 0x4, scoped, tag = 'scoped memory for _forward_jit.1']
    #allocation5 [shape = 's32[1]{0}', space=sflag, size = 0x4, scoped, tag = 'scoped memory for _forward_jit.1']
    #allocation6 [shape = 'u8[512]{0}', space=vmem, size = 0x400, scoped, tag = 'input window, operand 6, single buffered']
    #allocation7 [shape = 's32[1]{0}', space=sflag, size = 0x4, scoped, tag = 'scoped memory for _forward_jit.1']
    #allocation8 [shape = 'u8[512]{0}', space=vmem, size = 0x400, scoped, tag = 'input window, operand 7, single buffered']
    #allocation9 [shape = 'u8[1024]{0}', space=vmem, size = 0x400, scoped, tag = 'input window, operand 9, single buffered']
    #allocation10 [shape = 's32[1]{0}', space=sflag, size = 0x4, scoped, tag = 'scoped memory for _forward_jit.1']
    #allocation11 [shape = 'u8[1024]{0}', space=vmem, size = 0x400, scoped, tag = 'input window, operand 11, single buffered']
    #allocation12 [shape = 'u8[1024]{0}', space=vmem, size = 0x400, scoped, tag = 'input window, operand 13, single buffered']
    #allocation13 [shape = 's32[1]{0}', space=sflag, size = 0x4, scoped, tag = 'scoped memory for _forward_jit.1']
    #allocation14 [shape = 'u8[1024]{0}', space=vmem, size = 0x400, scoped, tag = 'input window, operand 15, single buffered']
    #allocation15 [shape = 'u8[1024]{0}', space=vmem, size = 0x400, scoped, tag = 'input window, operand 16, single buffered']
    #allocation16 [shape = 's32[1]{0}', space=sflag, size = 0x4, scoped, tag = 'scoped memory for _forward_jit.1']
    #allocation17 [shape = 'u8[1024]{0}', space=vmem, size = 0x400, scoped, tag = 'input window, operand 17, single buffered']
    #allocation18 [shape = 'u8[32768]{0}', space=vmem, size = 0x8000, scoped, tag = 'input window, operand 18, single buffered']
    #allocation19 [shape = 's32[1]{0}', space=sflag, size = 0x4, scoped, tag = 'scoped memory for _forward_jit.1']
    #allocation20 [shape = 'u8[1024]{0}', space=vmem, size = 0x400, scoped, tag = 'input window, operand 19, single buffered']
    #allocation21 [shape = 'u8[1024]{0}', space=vmem, size = 0x400, scoped, tag = 'input window, operand 21, single buffered']
    #allocation22 [shape = 's32[1]{0}', space=sflag, size = 0x4, scoped, tag = 'scoped memory for _forward_jit.1']
    #allocation23 [shape = 'u8[1024]{0}', space=vmem, size = 0x400, scoped, tag = 'input window, operand 22, single buffered']
    #allocation24 [shape = 'u8[1024]{0}', space=vmem, size = 0x400, scoped, tag = 'input window, operand 23, single buffered']
    #allocation25 [shape = 's32[1]{0}', space=sflag, size = 0x4, scoped, tag = 'scoped memory for _forward_jit.1']
    #allocation26 [shape = 'u8[512]{0}', space=vmem, size = 0x400, scoped, tag = 'input window, operand 25, single buffered']
    #allocation27 [shape = 'u8[512]{0}', space=vmem, size = 0x400, scoped, tag = 'input window, operand 27, single buffered']
    #allocation28 [shape = 's32[1]{0}', space=sflag, size = 0x4, scoped, tag = 'scoped memory for _forward_jit.1']
    #allocation29 [shape = 'u8[512]{0}', space=vmem, size = 0x400, scoped, tag = 'output window, operand 1, single buffered']
    %65 = vsyncpa [#allocation4], 0
    %66 = vsyncpa [#allocation7], 0
    %67 = vsyncpa [#allocation10], 0
    %68 = vsyncpa [#allocation13], 0
    %69 = vsyncpa [#allocation16], 0
    %70 = vsyncpa [#allocation19], 0
    %71 = vsyncpa [#allocation22], 0
    %72 = vsyncpa [#allocation25], 0
    %73 = vsyncpa [#allocation28], 0
    %74 = vsyncpa [#allocation5], 0
    // Predicated region
    $region2: #{_forward_jit.1} parent=1 // pred_check
      _
    $region3: #{_forward_jit.1} parent=1 // pred_check_branch
      %76 = sbr.rel (0) target = $region5
    $region4: #{_forward_jit.1} parent=1 // pred_region
      _
    $region5: #{_forward_jit.1} parent=1 // pred_fallthru
      _
    // Predicated region
    $region6: #{_forward_jit.1} parent=1 // pred_check
      _
    $region7: #{_forward_jit.1} parent=1 // pred_check_branch
      %78 = sbr.rel (0) target = $region9
    $region8: #{_forward_jit.1} parent=1 // pred_region
      _
    $region9: #{_forward_jit.1} parent=1 // pred_fallthru
      _
    // Predicated region
    $region10: #{_forward_jit.1} parent=1 // pred_check
      _
    $region11: #{_forward_jit.1} parent=1 // pred_check_branch
      %80 = sbr.rel (0) target = $region13
    $region12: #{_forward_jit.1} parent=1 // pred_region
      _
    $region13: #{_forward_jit.1} parent=1 // pred_fallthru
      _
    // Predicated region
    $region14: #{_forward_jit.1} parent=1 // pred_check
      _
    $region15: #{_forward_jit.1} parent=1 // pred_check_branch
      %82 = sbr.rel (0) target = $region17
    $region16: #{_forward_jit.1} parent=1 // pred_region
      _
    $region17: #{_forward_jit.1} parent=1 // pred_fallthru
      _
    // Predicated region
    $region18: #{_forward_jit.1} parent=1 // pred_check
      _
    $region19: #{_forward_jit.1} parent=1 // pred_check_branch
      %84 = sbr.rel (0) target = $region21
    $region20: #{_forward_jit.1} parent=1 // pred_region
      %86 = vsyncadd [#allocation4], 0
      %s87 = sshll.u32 %s9, 4
      %s88 = int_to_ptr.hbm [resolvable:$true] %s87
      %s89 = sshll.u32 [#allocation3], 4
      %s90 = int_to_ptr.vmem [resolvable:$true] %s89
      %95 = dma.hbm_to_vmem [thread:$0]  %s88, 256, %s90, [#allocation4], 128, 128, 8
    $region21: #{_forward_jit.1} parent=1 // pred_fallthru
      _
    // Predicated region
    $region22: #{_forward_jit.1} parent=1 // pred_check
      _
    $region23: #{_forward_jit.1} parent=1 // pred_check_branch
      %97 = sbr.rel (0) target = $region25
    $region24: #{_forward_jit.1} parent=1 // pred_region
      _
    $region25: #{_forward_jit.1} parent=1 // pred_fallthru
      _
    // Predicated region
    $region26: #{_forward_jit.1} parent=1 // pred_check
      _
    $region27: #{_forward_jit.1} parent=1 // pred_check_branch
      %99 = sbr.rel (0) target = $region29
    $region28: #{_forward_jit.1} parent=1 // pred_region
      %101 = vsyncadd [#allocation7], 0
      %s103 = sshll.u32 %s13, 4
      %s104 = int_to_ptr.hbm [resolvable:$true] %s103
      %s105 = sshll.u32 [#allocation6], 4
      %s106 = int_to_ptr.vmem [resolvable:$true] %s105
      %108 = dma.hbm_to_vmem [thread:$0]  %s104, 16, %s106, [#allocation7]
    $region29: #{_forward_jit.1} parent=1 // pred_fallthru
      _
    // Predicated region
    $region30: #{_forward_jit.1} parent=1 // pred_check
      _
    $region31: #{_forward_jit.1} parent=1 // pred_check_branch
      %110 = sbr.rel (0) target = $region33
    $region32: #{_forward_jit.1} parent=1 // pred_region
      %112 = vsyncadd [#allocation7], 0
      %s114 = sshll.u32 %s15, 4
      %s115 = int_to_ptr.hbm [resolvable:$true] %s114
      %s116 = sshll.u32 [#allocation8], 4
      %s117 = int_to_ptr.vmem [resolvable:$true] %s116
      %119 = dma.hbm_to_vmem [thread:$0]  %s115, 16, %s117, [#allocation7]
    $region33: #{_forward_jit.1} parent=1 // pred_fallthru
      _
    // Predicated region
    $region34: #{_forward_jit.1} parent=1 // pred_check
      _
    $region35: #{_forward_jit.1} parent=1 // pred_check_branch
      %121 = sbr.rel (0) target = $region37
    $region36: #{_forward_jit.1} parent=1 // pred_region
      _
    $region37: #{_forward_jit.1} parent=1 // pred_fallthru
      _
    // Predicated region
    $region38: #{_forward_jit.1} parent=1 // pred_check
      _
    $region39: #{_forward_jit.1} parent=1 // pred_check_branch
      %123 = sbr.rel (0) target = $region41
    $region40: #{_forward_jit.1} parent=1 // pred_region
      %125 = vsyncadd [#allocation10], 0
      %s126 = sshll.u32 %s19, 4
      %s127 = int_to_ptr.hbm [resolvable:$true] %s126
      %s128 = sshll.u32 [#allocation9], 4
      %s129 = int_to_ptr.vmem [resolvable:$true] %s128
      %134 = dma.hbm_to_vmem [thread:$0]  %s127, 32, %s129, [#allocation10], 16, 16, 1
    $region41: #{_forward_jit.1} parent=1 // pred_fallthru
      _
    // Predicated region
    $region42: #{_forward_jit.1} parent=1 // pred_check
      _
    $region43: #{_forward_jit.1} parent=1 // pred_check_branch
      %136 = sbr.rel (0) target = $region45
    $region44: #{_forward_jit.1} parent=1 // pred_region
      _
    $region45: #{_forward_jit.1} parent=1 // pred_fallthru
      _
    // Predicated region
    $region46: #{_forward_jit.1} parent=1 // pred_check
      _
    $region47: #{_forward_jit.1} parent=1 // pred_check_branch
      %138 = sbr.rel (0) target = $region49
    $region48: #{_forward_jit.1} parent=1 // pred_region
      %140 = vsyncadd [#allocation10], 0
      %s141 = sshll.u32 %s23, 4
      %s142 = int_to_ptr.hbm [resolvable:$true] %s141
      %s143 = sshll.u32 [#allocation11], 4
      %s144 = int_to_ptr.vmem [resolvable:$true] %s143
      %149 = dma.hbm_to_vmem [thread:$0]  %s142, 32, %s144, [#allocation10], 16, 16, 1
    $region49: #{_forward_jit.1} parent=1 // pred_fallthru
      _
    // Predicated region
    $region50: #{_forward_jit.1} parent=1 // pred_check
      _
    $region51: #{_forward_jit.1} parent=1 // pred_check_branch
      %151 = sbr.rel (0) target = $region53
    $region52: #{_forward_jit.1} parent=1 // pred_region
      _
    $region53: #{_forward_jit.1} parent=1 // pred_fallthru
      _
    // Predicated region
    $region54: #{_forward_jit.1} parent=1 // pred_check
      _
    $region55: #{_forward_jit.1} parent=1 // pred_check_branch
      %153 = sbr.rel (0) target = $region57
    $region56: #{_forward_jit.1} parent=1 // pred_region
      %155 = vsyncadd [#allocation13], 0
      %s156 = sshll.u32 %s27, 4
      %s157 = int_to_ptr.hbm [resolvable:$true] %s156
      %s158 = sshll.u32 [#allocation12], 4
      %s159 = int_to_ptr.vmem [resolvable:$true] %s158
      %164 = dma.hbm_to_vmem [thread:$0]  %s157, 32, %s159, [#allocation13], 16, 16, 1
    $region57: #{_forward_jit.1} parent=1 // pred_fallthru
      _
    // Predicated region
    $region58: #{_forward_jit.1} parent=1 // pred_check
      _
    $region59: #{_forward_jit.1} parent=1 // pred_check_branch
      %166 = sbr.rel (0) target = $region61
    $region60: #{_forward_jit.1} parent=1 // pred_region
      _
    $region61: #{_forward_jit.1} parent=1 // pred_fallthru
      _
    // Predicated region
    $region62: #{_forward_jit.1} parent=1 // pred_check
      _
    $region63: #{_forward_jit.1} parent=1 // pred_check_branch
      %168 = sbr.rel (0) target = $region65
    $region64: #{_forward_jit.1} parent=1 // pred_region
      %170 = vsyncadd [#allocation13], 0
      %s171 = sshll.u32 %s31, 4
      %s172 = int_to_ptr.hbm [resolvable:$true] %s171
      %s173 = sshll.u32 [#allocation14], 4
      %s174 = int_to_ptr.vmem [resolvable:$true] %s173
      %179 = dma.hbm_to_vmem [thread:$0]  %s172, 32, %s174, [#allocation13], 16, 16, 1
    $region65: #{_forward_jit.1} parent=1 // pred_fallthru
      _
    // Predicated region
    $region66: #{_forward_jit.1} parent=1 // pred_check
      _
    $region67: #{_forward_jit.1} parent=1 // pred_check_branch
      %181 = sbr.rel (0) target = $region69
    $region68: #{_forward_jit.1} parent=1 // pred_region
      %183 = vsyncadd [#allocation16], 0
      %s184 = sshll.u32 %s33, 4
      %s185 = int_to_ptr.hbm [resolvable:$true] %s184
      %s186 = sshll.u32 [#allocation15], 4
      %s187 = int_to_ptr.vmem [resolvable:$true] %s186
      %192 = dma.hbm_to_vmem [thread:$0]  %s185, 32, %s187, [#allocation16], 16, 16, 1
    $region69: #{_forward_jit.1} parent=1 // pred_fallthru
      _
    // Predicated region
    $region70: #{_forward_jit.1} parent=1 // pred_check
      _
    $region71: #{_forward_jit.1} parent=1 // pred_check_branch
      %194 = sbr.rel (0) target = $region73
    $region72: #{_forward_jit.1} parent=1 // pred_region
      %196 = vsyncadd [#allocation16], 0
      %s197 = sshll.u32 %s35, 4
      %s198 = int_to_ptr.hbm [resolvable:$true] %s197
      %s199 = sshll.u32 [#allocation17], 4
      %s200 = int_to_ptr.vmem [resolvable:$true] %s199
      %205 = dma.hbm_to_vmem [thread:$0]  %s198, 32, %s200, [#allocation16], 16, 16, 1
    $region73: #{_forward_jit.1} parent=1 // pred_fallthru
      _
    // Predicated region
    $region74: #{_forward_jit.1} parent=1 // pred_check
      _
    $region75: #{_forward_jit.1} parent=1 // pred_check_branch
      %207 = sbr.rel (0) target = $region77
    $region76: #{_forward_jit.1} parent=1 // pred_region
      %209 = vsyncadd [#allocation19], 0
      %s210 = sshll.u32 %s37, 4
      %s211 = int_to_ptr.hbm [resolvable:$true] %s210
      %s212 = sshll.u32 [#allocation18], 4
      %s213 = int_to_ptr.vmem [resolvable:$true] %s212
      %218 = dma.hbm_to_vmem [thread:$0]  %s211, 1024, %s213, [#allocation19], 128, 128, 8
    $region77: #{_forward_jit.1} parent=1 // pred_fallthru
      _
    // Predicated region
    $region78: #{_forward_jit.1} parent=1 // pred_check
      _
    $region79: #{_forward_jit.1} parent=1 // pred_check_branch
      %220 = sbr.rel (0) target = $region81
    $region80: #{_forward_jit.1} parent=1 // pred_region
      %222 = vsyncadd [#allocation19], 0
      %s223 = sshll.u32 %s39, 4
      %s224 = int_to_ptr.hbm [resolvable:$true] %s223
      %s225 = sshll.u32 [#allocation20], 4
      %s226 = int_to_ptr.vmem [resolvable:$true] %s225
      %231 = dma.hbm_to_vmem [thread:$0]  %s224, 32, %s226, [#allocation19], 16, 16, 1
    $region81: #{_forward_jit.1} parent=1 // pred_fallthru
      _
    // Predicated region
    $region82: #{_forward_jit.1} parent=1 // pred_check
      _
    $region83: #{_forward_jit.1} parent=1 // pred_check_branch
      %233 = sbr.rel (0) target = $region85
    $region84: #{_forward_jit.1} parent=1 // pred_region
      _
    $region85: #{_forward_jit.1} parent=1 // pred_fallthru
      _
    // Predicated region
    $region86: #{_forward_jit.1} parent=1 // pred_check
      _
    $region87: #{_forward_jit.1} parent=1 // pred_check_branch
      %235 = sbr.rel (0) target = $region89
    $region88: #{_forward_jit.1} parent=1 // pred_region
      %237 = vsyncadd [#allocation22], 0
      %s238 = sshll.u32 %s43, 4
      %s239 = int_to_ptr.hbm [resolvable:$true] %s238
      %s240 = sshll.u32 [#allocation21], 4
      %s241 = int_to_ptr.vmem [resolvable:$true] %s240
      %246 = dma.hbm_to_vmem [thread:$0]  %s239, 32, %s241, [#allocation22], 16, 16, 1
    $region89: #{_forward_jit.1} parent=1 // pred_fallthru
      _
    // Predicated region
    $region90: #{_forward_jit.1} parent=1 // pred_check
      _
    $region91: #{_forward_jit.1} parent=1 // pred_check_branch
      %248 = sbr.rel (0) target = $region93
    $region92: #{_forward_jit.1} parent=1 // pred_region
      %250 = vsyncadd [#allocation22], 0
      %s251 = sshll.u32 %s45, 4
      %s252 = int_to_ptr.hbm [resolvable:$true] %s251
      %s253 = sshll.u32 [#allocation23], 4
      %s254 = int_to_ptr.vmem [resolvable:$true] %s253
      %259 = dma.hbm_to_vmem [thread:$0]  %s252, 32, %s254, [#allocation22], 16, 16, 1
    $region93: #{_forward_jit.1} parent=1 // pred_fallthru
      _
    // Predicated region
    $region94: #{_forward_jit.1} parent=1 // pred_check
      _
    $region95: #{_forward_jit.1} parent=1 // pred_check_branch
      %261 = sbr.rel (0) target = $region97
    $region96: #{_forward_jit.1} parent=1 // pred_region
      %263 = vsyncadd [#allocation25], 0
      %s264 = sshll.u32 %s47, 4
      %s265 = int_to_ptr.hbm [resolvable:$true] %s264
      %s266 = sshll.u32 [#allocation24], 4
      %s267 = int_to_ptr.vmem [resolvable:$true] %s266
      %272 = dma.hbm_to_vmem [thread:$0]  %s265, 32, %s267, [#allocation25], 16, 16, 1
    $region97: #{_forward_jit.1} parent=1 // pred_fallthru
      _
    // Predicated region
    $region98: #{_forward_jit.1} parent=1 // pred_check
      _
    $region99: #{_forward_jit.1} parent=1 // pred_check_branch
      %274 = sbr.rel (0) target = $region101
    $region100: #{_forward_jit.1} parent=1 // pred_region
      _
    $region101: #{_forward_jit.1} parent=1 // pred_fallthru
      _
    // Predicated region
    $region102: #{_forward_jit.1} parent=1 // pred_check
      _
    $region103: #{_forward_jit.1} parent=1 // pred_check_branch
      %276 = sbr.rel (0) target = $region105
    $region104: #{_forward_jit.1} parent=1 // pred_region
      %278 = vsyncadd [#allocation25], 0
      %s280 = sshll.u32 %s51, 4
      %s281 = int_to_ptr.hbm [resolvable:$true] %s280
      %s282 = sshll.u32 [#allocation26], 4
      %s283 = int_to_ptr.vmem [resolvable:$true] %s282
      %285 = dma.hbm_to_vmem [thread:$0]  %s281, 16, %s283, [#allocation25]
    $region105: #{_forward_jit.1} parent=1 // pred_fallthru
      _
    // Predicated region
    $region106: #{_forward_jit.1} parent=1 // pred_check
      _
    $region107: #{_forward_jit.1} parent=1 // pred_check_branch
      %287 = sbr.rel (0) target = $region109
    $region108: #{_forward_jit.1} parent=1 // pred_region
      _
    $region109: #{_forward_jit.1} parent=1 // pred_fallthru
      _
    // Predicated region
    $region110: #{_forward_jit.1} parent=1 // pred_check
      _
    $region111: #{_forward_jit.1} parent=1 // pred_check_branch
      %289 = sbr.rel (0) target = $region113
    $region112: #{_forward_jit.1} parent=1 // pred_region
      %291 = vsyncadd [#allocation28], 0
      %s293 = sshll.u32 %s55, 4
      %s294 = int_to_ptr.hbm [resolvable:$true] %s293
      %s295 = sshll.u32 [#allocation27], 4
      %s296 = int_to_ptr.vmem [resolvable:$true] %s295
      %298 = dma.hbm_to_vmem [thread:$0]  %s294, 16, %s296, [#allocation28]
    $region113: #{_forward_jit.1} parent=1 // pred_fallthru
      _
    // Predicated region
    $region114: #{_forward_jit.1} parent=1 // pred_check
      _
    $region115: #{_forward_jit.1} parent=1 // pred_check_branch
      %300 = sbr.rel (0) target = $region117
    $region116: #{_forward_jit.1} parent=1 // pred_region
      %302 = dma.done [#allocation4], 256
    $region117: #{_forward_jit.1} parent=1 // pred_fallthru
      _
    // Predicated region
    $region118: #{_forward_jit.1} parent=1 // pred_check
      _
    $region119: #{_forward_jit.1} parent=1 // pred_check_branch
      %304 = sbr.rel (0) target = $region121
    $region120: #{_forward_jit.1} parent=1 // pred_region
      %306 = dma.done [#allocation7], 16
    $region121: #{_forward_jit.1} parent=1 // pred_fallthru
      _
    // Predicated region
    $region122: #{_forward_jit.1} parent=1 // pred_check
      _
    $region123: #{_forward_jit.1} parent=1 // pred_check_branch
      %308 = sbr.rel (0) target = $region125
    $region124: #{_forward_jit.1} parent=1 // pred_region
      %310 = dma.done [#allocation7], 16
    $region125: #{_forward_jit.1} parent=1 // pred_fallthru
      _
    // Predicated region
    $region126: #{_forward_jit.1} parent=1 // pred_check
      _
    $region127: #{_forward_jit.1} parent=1 // pred_check_branch
      %312 = sbr.rel (0) target = $region129
    $region128: #{_forward_jit.1} parent=1 // pred_region
      %314 = dma.done [#allocation10], 32
    $region129: #{_forward_jit.1} parent=1 // pred_fallthru
      _
    // Predicated region
    $region130: #{_forward_jit.1} parent=1 // pred_check
      _
    $region131: #{_forward_jit.1} parent=1 // pred_check_branch
      %316 = sbr.rel (0) target = $region133
    $region132: #{_forward_jit.1} parent=1 // pred_region
      %318 = dma.done [#allocation10], 32
    $region133: #{_forward_jit.1} parent=1 // pred_fallthru
      _
    // Predicated region
    $region134: #{_forward_jit.1} parent=1 // pred_check
      _
    $region135: #{_forward_jit.1} parent=1 // pred_check_branch
      %320 = sbr.rel (0) target = $region137
    $region136: #{_forward_jit.1} parent=1 // pred_region
      %322 = dma.done [#allocation13], 32
    $region137: #{_forward_jit.1} parent=1 // pred_fallthru
      _
    // Predicated region
    $region138: #{_forward_jit.1} parent=1 // pred_check
      _
    $region139: #{_forward_jit.1} parent=1 // pred_check_branch
      %324 = sbr.rel (0) target = $region141
    $region140: #{_forward_jit.1} parent=1 // pred_region
      %326 = dma.done [#allocation13], 32
    $region141: #{_forward_jit.1} parent=1 // pred_fallthru
      _
    // Predicated region
    $region142: #{_forward_jit.1} parent=1 // pred_check
      _
    $region143: #{_forward_jit.1} parent=1 // pred_check_branch
      %328 = sbr.rel (0) target = $region145
    $region144: #{_forward_jit.1} parent=1 // pred_region
      %330 = dma.done [#allocation16], 32
    $region145: #{_forward_jit.1} parent=1 // pred_fallthru
      _
    // Predicated region
    $region146: #{_forward_jit.1} parent=1 // pred_check
      _
    $region147: #{_forward_jit.1} parent=1 // pred_check_branch
      %332 = sbr.rel (0) target = $region149
    $region148: #{_forward_jit.1} parent=1 // pred_region
      %334 = dma.done [#allocation16], 32
    $region149: #{_forward_jit.1} parent=1 // pred_fallthru
      _
    // Predicated region
    $region150: #{_forward_jit.1} parent=1 // pred_check
      _
    $region151: #{_forward_jit.1} parent=1 // pred_check_branch
      %336 = sbr.rel (0) target = $region153
    $region152: #{_forward_jit.1} parent=1 // pred_region
      %338 = dma.done [#allocation19], 1024
    $region153: #{_forward_jit.1} parent=1 // pred_fallthru
      _
    // Predicated region
    $region154: #{_forward_jit.1} parent=1 // pred_check
      _
    $region155: #{_forward_jit.1} parent=1 // pred_check_branch
      %340 = sbr.rel (0) target = $region157
    $region156: #{_forward_jit.1} parent=1 // pred_region
      %342 = dma.done [#allocation19], 32
    $region157: #{_forward_jit.1} parent=1 // pred_fallthru
      _
    // Predicated region
    $region158: #{_forward_jit.1} parent=1 // pred_check
      _
    $region159: #{_forward_jit.1} parent=1 // pred_check_branch
      %344 = sbr.rel (0) target = $region161
    $region160: #{_forward_jit.1} parent=1 // pred_region
      %346 = dma.done [#allocation22], 32
    $region161: #{_forward_jit.1} parent=1 // pred_fallthru
      _
    // Predicated region
    $region162: #{_forward_jit.1} parent=1 // pred_check
      _
    $region163: #{_forward_jit.1} parent=1 // pred_check_branch
      %348 = sbr.rel (0) target = $region165
    $region164: #{_forward_jit.1} parent=1 // pred_region
      %350 = dma.done [#allocation22], 32
    $region165: #{_forward_jit.1} parent=1 // pred_fallthru
      _
    // Predicated region
    $region166: #{_forward_jit.1} parent=1 // pred_check
      _
    $region167: #{_forward_jit.1} parent=1 // pred_check_branch
      %352 = sbr.rel (0) target = $region169
    $region168: #{_forward_jit.1} parent=1 // pred_region
      %354 = dma.done [#allocation25], 32
    $region169: #{_forward_jit.1} parent=1 // pred_fallthru
      _
    // Predicated region
    $region170: #{_forward_jit.1} parent=1 // pred_check
      _
    $region171: #{_forward_jit.1} parent=1 // pred_check_branch
      %356 = sbr.rel (0) target = $region173
    $region172: #{_forward_jit.1} parent=1 // pred_region
      %358 = dma.done [#allocation25], 16
    $region173: #{_forward_jit.1} parent=1 // pred_fallthru
      _
    // Predicated region
    $region174: #{_forward_jit.1} parent=1 // pred_check
      _
    $region175: #{_forward_jit.1} parent=1 // pred_check_branch
      %360 = sbr.rel (0) target = $region177
    $region176: #{_forward_jit.1} parent=1 // pred_region
      %362 = dma.done [#allocation28], 16
    $region177: #{_forward_jit.1} parent=1 // pred_fallthru
      _
    %v363 = vld [vmem:[%s1] sm:$0x3]
    %v364 = vlaneseq
    %v365 = vand.u32 %v364, 127
    %v366 = vperm.slane %v363, 0
    %v367 = vlaneseq
    %v368 = vshrl.u32 %v367, 7
    %370 = vset.pattern.permute.xlu0 %v368
    %371 = vperm.xlu0 %370, %v366
    %v372 = vpop.permute.xlu0 %371
    %v373 = vperm.slane %v363, 1
    %v374 = vlaneseq
    %v375 = vshrl.u32 %v374, 7
    %377 = vset.pattern.permute.xlu0 %v375
    %378 = vperm.xlu0 %377, %v373
    %v379 = vpop.permute.xlu0 %378
    %vm380 = vcmp.eq.s32.totalorder %v372, %v365
    %vm381 = vcmp.eq.s32.totalorder %v379, %v365
    %v382 = vsel %vm380, 1, 0
    %v383 = vsel %vm381, 1, 0
    %v384 = vcvt.s32.f32 %v382
    %v385 = vcvt.s32.f32 %v383
    %v386 = vld [vmem:[%s7] sm:$0xff]
    %v387 = vld [vmem:[%s7 + $0x8] sm:$0xff]
    %v388 = vld [vmem:[%s7 + $0x10] sm:$0xff]
    %v389 = vld [vmem:[%s7 + $0x18] sm:$0xff]
    %v390 = vld [vmem:[%s7 + $0x20] sm:$0xff]
    %v391 = vld [vmem:[%s7 + $0x28] sm:$0xff]
    %v392 = vld [vmem:[%s7 + $0x30] sm:$0xff]
    %v393 = vld [vmem:[%s7 + $0x38] sm:$0xff]
    %v394 = vld [vmem:[%s7 + $0x40] sm:$0xff]
    %v395 = vld [vmem:[%s7 + $0x48] sm:$0xff]
    %v396 = vld [vmem:[%s7 + $0x50] sm:$0xff]
    %v397 = vld [vmem:[%s7 + $0x58] sm:$0xff]
    %v398 = vld [vmem:[%s7 + $0x60] sm:$0xf]
    %vm399 = vcmask 818176
    %v401 = vsel %vm399, %v384, 0
    %v404 = vsel %vm399, %v385, 0
    %vm406 = vcmask 1043456
    %v408 = vsel %vm406, %v398, 0
    %410 = vmatpush.msra.mxu0 0.0
    %411 = vmatpush.msra.mxu0 0.0
    %412 = vmatpush.msra.mxu0 0.0
    %413 = vmatpush.msra.mxu0 %v408
    %414 = vmatpush.msra.mxu0 %v397
    %415 = vmatpush.msra.mxu0 %v396
    %416 = vmatpush.msra.mxu0 %v395
    %417 = vmatpush.msra.mxu0 %v394
    %418 = vmatpush.msra.mxu0 %v393
    %419 = vmatpush.msra.mxu0 %v392
    %420 = vmatpush.msra.mxu0 %v391
    %421 = vmatpush.msra.mxu0 %v390
    %422 = vmatpush.msra.mxu0 %v389
    %423 = vmatpush.msra.mxu0 %v388
    %424 = vmatpush.msra.mxu0 %v387
    %425 = vmatpush.msra.mxu0 %v386
    %426 = vmatmul.f32.gmra.mxu0 %v401
    %v427 = vpop.f32.mrf.mxu0
    %v428 = vadd.f32 0.0, %v427
    %429 = vmatmul.f32.gmra.mxu0 %v404
    %v430 = vpop.f32.mrf.mxu0
    %v431 = vadd.f32 0.0, %v430
    %432 = vdwg.mxu0
    %v433 = vld [vmem:[#allocation3] sm:$0xff]
    %v434 = vld [vmem:[%s11] sm:$0x1]
    %v435 = vadd.f32 %v428, %v433
    %v436 = vadd.f32 %v431, %v433
    %v437 = vperm.slane %v434, 0
    %v438 = vadd.f32 %v435, %v437
    %v439 = vadd.f32 %v436, %v437
    %v440 = vld [vmem:[#allocation6] sm:$0x1]
    %v441 = vld [vmem:[#allocation8] sm:$0x1]
    %vm442 = vcmask 261120
    %v443 = vsel %vm442, %v438, 0.0
    %444 = vadd.xlane.f32.xlu0 %v443
    %v445 = vpop.xlane.xlu0 %444
    %v446 = vsel %vm442, %v439, 0.0
    %447 = vadd.xlane.f32.xlu0 %v446
    %v448 = vpop.xlane.xlu0 %447
    %v449 = vrcp.pop 32.0
    %v450 = vmul.f32 32.0, %v449
    %v451 = vsub.f32 1.0, %v450
    %v452 = vmul.f32 %v449, %v451
    %v453 = vadd.f32 %v449, %v452
    %vm454 = vweird.f32 %v449
    %v455 = vsel %vm454, %v449, %v453
    %v456 = vmul.f32 %v445, %v455
    %v457 = vmul.f32 %v448, %v455
    %v458 = vsub.f32 %v438, %v456
    %v459 = vsub.f32 %v439, %v457
    %v460 = vmul.f32 %v458, %v458
    %v461 = vmul.f32 %v459, %v459
    %v462 = vsel %vm442, %v460, 0.0
    %463 = vadd.xlane.f32.xlu0 %v462
    %v464 = vpop.xlane.xlu0 %463
    %v465 = vsel %vm442, %v461, 0.0
    %466 = vadd.xlane.f32.xlu0 %v465
    %v467 = vpop.xlane.xlu0 %466
    %v468 = vmul.f32 %v464, %v455
    %v469 = vmul.f32 %v467, %v455
    %v470 = vadd.f32 %v468, 1e-12
    %v471 = vadd.f32 %v469, 1e-12
    %v472 = vrsqrt.pop %v470
    %v473 = vmul.f32 %v472, %v470
    %v474 = vmul.f32 %v473, %v472
    %v475 = vmul.f32 0.5, %v474
    %v476 = vsub.f32 1.5, %v475
    %v477 = vmul.f32 %v472, %v476
    %vm478 = vweird.f32 %v470
    %vm479 = vweird.f32 %v472
    %vm480 = vmor %vm478, %vm479
    %v481 = vsel %vm480, %v472, %v477
    %v482 = vrsqrt.pop %v471
    %v483 = vmul.f32 %v482, %v471
    %v484 = vmul.f32 %v483, %v482
    %v485 = vmul.f32 0.5, %v484
    %v486 = vsub.f32 1.5, %v485
    %v487 = vmul.f32 %v482, %v486
    %vm488 = vweird.f32 %v471
    %vm489 = vweird.f32 %v482
    %vm490 = vmor %vm488, %vm489
    %v491 = vsel %vm490, %v482, %v487
    %v492 = vmul.f32 %v458, %v481
    %v493 = vmul.f32 %v459, %v491
    %v495 = vperm.slane %v440, 0
    %v497 = vmul.f32 %v492, %v495
    %v498 = vmul.f32 %v493, %v495
    %v500 = vperm.slane %v441, 0
    %v502 = vadd.f32 %v497, %v500
    %v503 = vadd.f32 %v498, %v500
    %v504 = vld [vmem:[%s3] sm:$0x3]
    %v505 = vsub.f32 1.0, %v504
    %v507 = vrot.slane %v505, 1
    %v509 = vmul.f32 %v505, -10000.0
    %v510 = vmul.f32 %v507, -10000.0
    %v511 = vld [vmem:[%s17] sm:$0xff]
    %v512 = vld [vmem:[%s17 + $0x8] sm:$0xff]
    %v513 = vld [vmem:[%s17 + $0x10] sm:$0xff]
    %v514 = vld [vmem:[%s17 + $0x18] sm:$0xff]
    %v515 = vld [vmem:[#allocation9] sm:$0x1]
    %v517 = vperm.slane %v515, 0
    %v520 = vsel %vm442, %v502, 0
    %v523 = vsel %vm442, %v503, 0
    %525 = vmatpush.msra.mxu0 0.0
    %526 = vmatpush.msra.mxu0 0.0
    %527 = vmatpush.msra.mxu0 0.0
    %528 = vmatpush.msra.mxu0 0.0
    %529 = vmatpush.msra.mxu0 0.0
    %530 = vmatpush.msra.mxu0 0.0
    %531 = vmatpush.msra.mxu0 0.0
    %532 = vmatpush.msra.mxu0 0.0
    %533 = vmatpush.msra.mxu0 0.0
    %534 = vmatpush.msra.mxu0 0.0
    %535 = vmatpush.msra.mxu0 0.0
    %536 = vmatpush.msra.mxu0 0.0
    %537 = vmatpush.msra.mxu0 %v514
    %538 = vmatpush.msra.mxu0 %v513
    %539 = vmatpush.msra.mxu0 %v512
    %540 = vmatpush.msra.mxu0 %v511
    %541 = vmatmul.f32.gmra.mxu0 %v520
    %v542 = vpop.f32.mrf.mxu0
    %v543 = vadd.f32 %v517, %v542
    %544 = vmatmul.f32.gmra.mxu0 %v523
    %v545 = vpop.f32.mrf.mxu0
    %v546 = vadd.f32 %v517, %v545
    %547 = vdwg.mxu0
    %v548 = vld [vmem:[%s21] sm:$0xff]
    %v549 = vld [vmem:[%s21 + $0x8] sm:$0xff]
    %v550 = vld [vmem:[%s21 + $0x10] sm:$0xff]
    %v551 = vld [vmem:[%s21 + $0x18] sm:$0xff]
    %v552 = vld [vmem:[#allocation11] sm:$0x1]
    %v554 = vperm.slane %v552, 0
    %556 = vmatpush.msra.mxu0 0.0
    %557 = vmatpush.msra.mxu0 0.0
    %558 = vmatpush.msra.mxu0 0.0
    %559 = vmatpush.msra.mxu0 0.0
    %560 = vmatpush.msra.mxu0 0.0
    %561 = vmatpush.msra.mxu0 0.0
    %562 = vmatpush.msra.mxu0 0.0
    %563 = vmatpush.msra.mxu0 0.0
    %564 = vmatpush.msra.mxu0 0.0
    %565 = vmatpush.msra.mxu0 0.0
    %566 = vmatpush.msra.mxu0 0.0
    %567 = vmatpush.msra.mxu0 0.0
    %568 = vmatpush.msra.mxu0 %v551
    %569 = vmatpush.msra.mxu0 %v550
    %570 = vmatpush.msra.mxu0 %v549
    %571 = vmatpush.msra.mxu0 %v548
    %572 = vmatmul.f32.gmra.mxu0 %v520
    %v573 = vpop.f32.mrf.mxu0
    %v574 = vadd.f32 %v554, %v573
    %575 = vmatmul.f32.gmra.mxu0 %v523
    %v576 = vpop.f32.mrf.mxu0
    %v577 = vadd.f32 %v554, %v576
    %578 = vdwg.mxu0
    %v579 = vld [vmem:[%s25] sm:$0xff]
    %v580 = vld [vmem:[%s25 + $0x8] sm:$0xff]
    %v581 = vld [vmem:[%s25 + $0x10] sm:$0xff]
    %v582 = vld [vmem:[%s25 + $0x18] sm:$0xff]
    %v583 = vld [vmem:[#allocation12] sm:$0x1]
    %v585 = vperm.slane %v583, 0
    %587 = vmatpush.msra.mxu0 0.0
    %588 = vmatpush.msra.mxu0 0.0
    %589 = vmatpush.msra.mxu0 0.0
    %590 = vmatpush.msra.mxu0 0.0
    %591 = vmatpush.msra.mxu0 0.0
    %592 = vmatpush.msra.mxu0 0.0
    %593 = vmatpush.msra.mxu0 0.0
    %594 = vmatpush.msra.mxu0 0.0
    %595 = vmatpush.msra.mxu0 0.0
    %596 = vmatpush.msra.mxu0 0.0
    %597 = vmatpush.msra.mxu0 0.0
    %598 = vmatpush.msra.mxu0 0.0
    %599 = vmatpush.msra.mxu0 %v582
    %600 = vmatpush.msra.mxu0 %v581
    %601 = vmatpush.msra.mxu0 %v580
    %602 = vmatpush.msra.mxu0 %v579
    %603 = vmatmul.f32.gmra.mxu0 %v520
    %v604 = vpop.f32.mrf.mxu0
    %v605 = vadd.f32 %v585, %v604
    %606 = vmatmul.f32.gmra.mxu0 %v523
    %v607 = vpop.f32.mrf.mxu0
    %v608 = vadd.f32 %v585, %v607
    %609 = vdwg.mxu0
    %vm610 = vcmask 64512
    %v612 = vsel %vm610, %v543, 0
    %v615 = vsel %vm610, %v574, 0
    %617 = vmatpush.xpose.msra.mxu0 0.0
    %618 = vmatpush.xpose.msra.mxu0 0.0
    %619 = vmatpush.xpose.msra.mxu0 0.0
    %620 = vmatpush.xpose.msra.mxu0 0.0
    %621 = vmatpush.xpose.msra.mxu0 0.0
    %622 = vmatpush.xpose.msra.mxu0 0.0
    %623 = vmatpush.xpose.msra.mxu0 0.0
    %624 = vmatpush.xpose.msra.mxu0 0.0
    %625 = vmatpush.xpose.msra.mxu0 0.0
    %626 = vmatpush.xpose.msra.mxu0 0.0
    %627 = vmatpush.xpose.msra.mxu0 0.0
    %628 = vmatpush.xpose.msra.mxu0 0.0
    %629 = vmatpush.xpose.msra.mxu0 0.0
    %630 = vmatpush.xpose.msra.mxu0 0.0
    %631 = vmatpush.xpose.msra.mxu0 0.0
    %632 = vmatpush.xpose.msra.mxu0 %v615
    %633 = vmatmul.f32.gmra.mxu0 %v612
    %v634 = vpop.f32.mrf.mxu0
    %v635 = vadd.f32 0.0, %v634
    %636 = vdwg.mxu0
    %v638 = vsel %vm610, %v546, 0
    %v641 = vsel %vm610, %v577, 0
    %643 = vmatpush.xpose.msra.mxu0 0.0
    %644 = vmatpush.xpose.msra.mxu0 0.0
    %645 = vmatpush.xpose.msra.mxu0 0.0
    %646 = vmatpush.xpose.msra.mxu0 0.0
    %647 = vmatpush.xpose.msra.mxu0 0.0
    %648 = vmatpush.xpose.msra.mxu0 0.0
    %649 = vmatpush.xpose.msra.mxu0 0.0
    %650 = vmatpush.xpose.msra.mxu0 0.0
    %651 = vmatpush.xpose.msra.mxu0 0.0
    %652 = vmatpush.xpose.msra.mxu0 0.0
    %653 = vmatpush.xpose.msra.mxu0 0.0
    %654 = vmatpush.xpose.msra.mxu0 0.0
    %655 = vmatpush.xpose.msra.mxu0 0.0
    %656 = vmatpush.xpose.msra.mxu0 0.0
    %657 = vmatpush.xpose.msra.mxu0 0.0
    %658 = vmatpush.xpose.msra.mxu0 %v641
    %659 = vmatmul.f32.gmra.mxu0 %v638
    %v660 = vpop.f32.mrf.mxu0
    %v661 = vadd.f32 0.0, %v660
    %662 = vdwg.mxu0
    %v663 = vmul.f32 %v635, 0.35355338
    %v664 = vmul.f32 %v661, 0.35355338
    %v667 = vperm.slane %v509, 0
    %v668 = vperm.slane %v510, 0
    %v671 = vadd.f32 %v663, %v667
    %v672 = vadd.f32 %v664, %v668
    %v673 = vsel %vm610, %v671, -inf
    %674 = vmax.xlane.f32.xlu0 %v673
    %v675 = vpop.xlane.xlu0 %674
    %v676 = vsel %vm610, %v672, -inf
    %677 = vmax.xlane.f32.xlu0 %v676
    %v678 = vpop.xlane.xlu0 %677
    %v679 = vsub.f32 %v671, %v675
    %v680 = vsub.f32 %v672, %v678
    %v681 = vmul.f32 %v679, 1.442695
    %v682 = vpow.pop %v681
    %v683 = vmul.f32 %v680, 1.442695
    %v684 = vpow.pop %v683
    %v685 = vsel %vm610, %v682, 0.0
    %686 = vadd.xlane.f32.xlu0 %v685
    %v687 = vpop.xlane.xlu0 %686
    %v688 = vsel %vm610, %v684, 0.0
    %689 = vadd.xlane.f32.xlu0 %v688
    %v690 = vpop.xlane.xlu0 %689
    %v691 = vrcp.pop %v687
    %v692 = vrcp.pop %v690
    %v693 = vmul.f32 %v682, %v691
    %v694 = vmul.f32 %v684, %v692
    %v696 = vsel %vm610, %v693, 0
    %698 = vmatpush.msra.mxu0 0.0
    %699 = vmatpush.msra.mxu0 0.0
    %700 = vmatpush.msra.mxu0 0.0
    %701 = vmatpush.msra.mxu0 0.0
    %702 = vmatpush.msra.mxu0 0.0
    %703 = vmatpush.msra.mxu0 0.0
    %704 = vmatpush.msra.mxu0 0.0
    %705 = vmatpush.msra.mxu0 0.0
    %706 = vmatpush.msra.mxu0 0.0
    %707 = vmatpush.msra.mxu0 0.0
    %708 = vmatpush.msra.mxu0 0.0
    %709 = vmatpush.msra.mxu0 0.0
    %710 = vmatpush.msra.mxu0 0.0
    %711 = vmatpush.msra.mxu0 0.0
    %712 = vmatpush.msra.mxu0 0.0
    %713 = vmatpush.msra.mxu0 %v605
    %714 = vmatmul.f32.gmra.mxu0 %v696
    %v715 = vpop.f32.mrf.mxu0
    %v716 = vadd.f32 0.0, %v715
    %717 = vdwg.mxu0
    %v719 = vsel %vm610, %v694, 0
    %721 = vmatpush.msra.mxu0 0.0
    %722 = vmatpush.msra.mxu0 0.0
    %723 = vmatpush.msra.mxu0 0.0
    %724 = vmatpush.msra.mxu0 0.0
    %725 = vmatpush.msra.mxu0 0.0
    %726 = vmatpush.msra.mxu0 0.0
    %727 = vmatpush.msra.mxu0 0.0
    %728 = vmatpush.msra.mxu0 0.0
    %729 = vmatpush.msra.mxu0 0.0
    %730 = vmatpush.msra.mxu0 0.0
    %731 = vmatpush.msra.mxu0 0.0
    %732 = vmatpush.msra.mxu0 0.0
    %733 = vmatpush.msra.mxu0 0.0
    %734 = vmatpush.msra.mxu0 0.0
    %735 = vmatpush.msra.mxu0 0.0
    %736 = vmatpush.msra.mxu0 %v608
    %737 = vmatmul.f32.gmra.mxu0 %v719
    %v738 = vpop.f32.mrf.mxu0
    %v739 = vadd.f32 0.0, %v738
    %740 = vdwg.mxu0
    %741 = vst.msk [vmem:[#allocation2] sm:$0xff] %vm610, %v716
    %742 = vst.msk [vmem:[#allocation2 + $0x8] sm:$0xff] %vm610, %v739
    %743 = vrot.lane.b32.xlu0 %v543, 120
    %v744 = vpop.permute.xlu0 %743
    %745 = vrot.lane.b32.xlu0 %v574, 120
    %v746 = vpop.permute.xlu0 %745
    %v747 = vsel %vm610, %v744, 0
    %v749 = vsel %vm610, %v746, 0
    %751 = vmatpush.xpose.msra.mxu0 0.0
    %752 = vmatpush.xpose.msra.mxu0 0.0
    %753 = vmatpush.xpose.msra.mxu0 0.0
    %754 = vmatpush.xpose.msra.mxu0 0.0
    %755 = vmatpush.xpose.msra.mxu0 0.0
    %756 = vmatpush.xpose.msra.mxu0 0.0
    %757 = vmatpush.xpose.msra.mxu0 0.0
    %758 = vmatpush.xpose.msra.mxu0 0.0
    %759 = vmatpush.xpose.msra.mxu0 0.0
    %760 = vmatpush.xpose.msra.mxu0 0.0
    %761 = vmatpush.xpose.msra.mxu0 0.0
    %762 = vmatpush.xpose.msra.mxu0 0.0
    %763 = vmatpush.xpose.msra.mxu0 0.0
    %764 = vmatpush.xpose.msra.mxu0 0.0
    %765 = vmatpush.xpose.msra.mxu0 0.0
    %766 = vmatpush.xpose.msra.mxu0 %v749
    %767 = vmatmul.f32.gmra.mxu0 %v747
    %v768 = vpop.f32.mrf.mxu0
    %v769 = vadd.f32 0.0, %v768
    %770 = vdwg.mxu0
    %771 = vrot.lane.b32.xlu0 %v546, 120
    %v772 = vpop.permute.xlu0 %771
    %773 = vrot.lane.b32.xlu0 %v577, 120
    %v774 = vpop.permute.xlu0 %773
    %v775 = vsel %vm610, %v772, 0
    %v777 = vsel %vm610, %v774, 0
    %779 = vmatpush.xpose.msra.mxu0 0.0
    %780 = vmatpush.xpose.msra.mxu0 0.0
    %781 = vmatpush.xpose.msra.mxu0 0.0
    %782 = vmatpush.xpose.msra.mxu0 0.0
    %783 = vmatpush.xpose.msra.mxu0 0.0
    %784 = vmatpush.xpose.msra.mxu0 0.0
    %785 = vmatpush.xpose.msra.mxu0 0.0
    %786 = vmatpush.xpose.msra.mxu0 0.0
    %787 = vmatpush.xpose.msra.mxu0 0.0
    %788 = vmatpush.xpose.msra.mxu0 0.0
    %789 = vmatpush.xpose.msra.mxu0 0.0
    %790 = vmatpush.xpose.msra.mxu0 0.0
    %791 = vmatpush.xpose.msra.mxu0 0.0
    %792 = vmatpush.xpose.msra.mxu0 0.0
    %793 = vmatpush.xpose.msra.mxu0 0.0
    %794 = vmatpush.xpose.msra.mxu0 %v777
    %795 = vmatmul.f32.gmra.mxu0 %v775
    %v796 = vpop.f32.mrf.mxu0
    %v797 = vadd.f32 0.0, %v796
    %798 = vdwg.mxu0
    %v799 = vmul.f32 %v769, 0.35355338
    %v800 = vmul.f32 %v797, 0.35355338
    %v801 = vadd.f32 %v799, %v667
    %v802 = vadd.f32 %v800, %v668
    %v803 = vsel %vm610, %v801, -inf
    %804 = vmax.xlane.f32.xlu0 %v803
    %v805 = vpop.xlane.xlu0 %804
    %v806 = vsel %vm610, %v802, -inf
    %807 = vmax.xlane.f32.xlu0 %v806
    %v808 = vpop.xlane.xlu0 %807
    %v809 = vsub.f32 %v801, %v805
    %v810 = vsub.f32 %v802, %v808
    %v811 = vmul.f32 %v809, 1.442695
    %v812 = vpow.pop %v811
    %v813 = vmul.f32 %v810, 1.442695
    %v814 = vpow.pop %v813
    %v815 = vsel %vm610, %v812, 0.0
    %816 = vadd.xlane.f32.xlu0 %v815
    %v817 = vpop.xlane.xlu0 %816
    %v818 = vsel %vm610, %v814, 0.0
    %819 = vadd.xlane.f32.xlu0 %v818
    %v820 = vpop.xlane.xlu0 %819
    %v821 = vrcp.pop %v817
    %v822 = vrcp.pop %v820
    %v823 = vmul.f32 %v812, %v821
    %v824 = vmul.f32 %v814, %v822
    %826 = vrot.lane.b32.xlu0 %v605, 120
    %v827 = vpop.permute.xlu0 %826
    %v830 = vsel %vm610, %v823, 0
    %832 = vmatpush.msra.mxu0 0.0
    %833 = vmatpush.msra.mxu0 0.0
    %834 = vmatpush.msra.mxu0 0.0
    %835 = vmatpush.msra.mxu0 0.0
    %836 = vmatpush.msra.mxu0 0.0
    %837 = vmatpush.msra.mxu0 0.0
    %838 = vmatpush.msra.mxu0 0.0
    %839 = vmatpush.msra.mxu0 0.0
    %840 = vmatpush.msra.mxu0 0.0
    %841 = vmatpush.msra.mxu0 0.0
    %842 = vmatpush.msra.mxu0 0.0
    %843 = vmatpush.msra.mxu0 0.0
    %844 = vmatpush.msra.mxu0 0.0
    %845 = vmatpush.msra.mxu0 0.0
    %846 = vmatpush.msra.mxu0 0.0
    %847 = vmatpush.msra.mxu0 %v827
    %848 = vmatmul.f32.gmra.mxu0 %v830
    %v849 = vpop.f32.mrf.mxu0
    %v850 = vadd.f32 0.0, %v849
    %851 = vdwg.mxu0
    %853 = vrot.lane.b32.xlu0 %v608, 120
    %v854 = vpop.permute.xlu0 %853
    %v857 = vsel %vm610, %v824, 0
    %859 = vmatpush.msra.mxu0 0.0
    %860 = vmatpush.msra.mxu0 0.0
    %861 = vmatpush.msra.mxu0 0.0
    %862 = vmatpush.msra.mxu0 0.0
    %863 = vmatpush.msra.mxu0 0.0
    %864 = vmatpush.msra.mxu0 0.0
    %865 = vmatpush.msra.mxu0 0.0
    %866 = vmatpush.msra.mxu0 0.0
    %867 = vmatpush.msra.mxu0 0.0
    %868 = vmatpush.msra.mxu0 0.0
    %869 = vmatpush.msra.mxu0 0.0
    %870 = vmatpush.msra.mxu0 0.0
    %871 = vmatpush.msra.mxu0 0.0
    %872 = vmatpush.msra.mxu0 0.0
    %873 = vmatpush.msra.mxu0 0.0
    %874 = vmatpush.msra.mxu0 %v854
    %875 = vmatmul.f32.gmra.mxu0 %v857
    %v876 = vpop.f32.mrf.mxu0
    %v877 = vadd.f32 0.0, %v876
    %878 = vdwg.mxu0
    %881 = vrot.lane.b32.xlu0 %v850, 8
    %v882 = vpop.permute.xlu0 %881
    %883 = vrot.lane.b32.xlu0 %v877, 8
    %v884 = vpop.permute.xlu0 %883
    %vm887 = vcmask 130112
    %888 = vst.msk [vmem:[#allocation2] sm:$0xff] %vm887, %v882
    %889 = vst.msk [vmem:[#allocation2 + $0x8] sm:$0xff] %vm887, %v884
    %890 = vrot.lane.b32.xlu0 %v543, 112
    %v891 = vpop.permute.xlu0 %890
    %892 = vrot.lane.b32.xlu0 %v574, 112
    %v893 = vpop.permute.xlu0 %892
    %v894 = vsel %vm610, %v891, 0
    %v896 = vsel %vm610, %v893, 0
    %898 = vmatpush.xpose.msra.mxu0 0.0
    %899 = vmatpush.xpose.msra.mxu0 0.0
    %900 = vmatpush.xpose.msra.mxu0 0.0
    %901 = vmatpush.xpose.msra.mxu0 0.0
    %902 = vmatpush.xpose.msra.mxu0 0.0
    %903 = vmatpush.xpose.msra.mxu0 0.0
    %904 = vmatpush.xpose.msra.mxu0 0.0
    %905 = vmatpush.xpose.msra.mxu0 0.0
    %906 = vmatpush.xpose.msra.mxu0 0.0
    %907 = vmatpush.xpose.msra.mxu0 0.0
    %908 = vmatpush.xpose.msra.mxu0 0.0
    %909 = vmatpush.xpose.msra.mxu0 0.0
    %910 = vmatpush.xpose.msra.mxu0 0.0
    %911 = vmatpush.xpose.msra.mxu0 0.0
    %912 = vmatpush.xpose.msra.mxu0 0.0
    %913 = vmatpush.xpose.msra.mxu0 %v896
    %914 = vmatmul.f32.gmra.mxu0 %v894
    %v915 = vpop.f32.mrf.mxu0
    %v916 = vadd.f32 0.0, %v915
    %917 = vdwg.mxu0
    %918 = vrot.lane.b32.xlu0 %v546, 112
    %v919 = vpop.permute.xlu0 %918
    %920 = vrot.lane.b32.xlu0 %v577, 112
    %v921 = vpop.permute.xlu0 %920
    %v922 = vsel %vm610, %v919, 0
    %v924 = vsel %vm610, %v921, 0
    %926 = vmatpush.xpose.msra.mxu0 0.0
    %927 = vmatpush.xpose.msra.mxu0 0.0
    %928 = vmatpush.xpose.msra.mxu0 0.0
    %929 = vmatpush.xpose.msra.mxu0 0.0
    %930 = vmatpush.xpose.msra.mxu0 0.0
    %931 = vmatpush.xpose.msra.mxu0 0.0
    %932 = vmatpush.xpose.msra.mxu0 0.0
    %933 = vmatpush.xpose.msra.mxu0 0.0
    %934 = vmatpush.xpose.msra.mxu0 0.0
    %935 = vmatpush.xpose.msra.mxu0 0.0
    %936 = vmatpush.xpose.msra.mxu0 0.0
    %937 = vmatpush.xpose.msra.mxu0 0.0
    %938 = vmatpush.xpose.msra.mxu0 0.0
    %939 = vmatpush.xpose.msra.mxu0 0.0
    %940 = vmatpush.xpose.msra.mxu0 0.0
    %941 = vmatpush.xpose.msra.mxu0 %v924
    %942 = vmatmul.f32.gmra.mxu0 %v922
    %v943 = vpop.f32.mrf.mxu0
    %v944 = vadd.f32 0.0, %v943
    %945 = vdwg.mxu0
    %v946 = vmul.f32 %v916, 0.35355338
    %v947 = vmul.f32 %v944, 0.35355338
    %v948 = vadd.f32 %v946, %v667
    %v949 = vadd.f32 %v947, %v668
    %v950 = vsel %vm610, %v948, -inf
    %951 = vmax.xlane.f32.xlu0 %v950
    %v952 = vpop.xlane.xlu0 %951
    %v953 = vsel %vm610, %v949, -inf
    %954 = vmax.xlane.f32.xlu0 %v953
    %v955 = vpop.xlane.xlu0 %954
    %v956 = vsub.f32 %v948, %v952
    %v957 = vsub.f32 %v949, %v955
    %v958 = vmul.f32 %v956, 1.442695
    %v959 = vpow.pop %v958
    %v960 = vmul.f32 %v957, 1.442695
    %v961 = vpow.pop %v960
    %v962 = vsel %vm610, %v959, 0.0
    %963 = vadd.xlane.f32.xlu0 %v962
    %v964 = vpop.xlane.xlu0 %963
    %v965 = vsel %vm610, %v961, 0.0
    %966 = vadd.xlane.f32.xlu0 %v965
    %v967 = vpop.xlane.xlu0 %966
    %v968 = vrcp.pop %v964
    %v969 = vrcp.pop %v967
    %v970 = vmul.f32 %v959, %v968
    %v971 = vmul.f32 %v961, %v969
    %972 = vrot.lane.b32.xlu0 %v605, 112
    %v973 = vpop.permute.xlu0 %972
    %v976 = vsel %vm610, %v970, 0
    %978 = vmatpush.msra.mxu0 0.0
    %979 = vmatpush.msra.mxu0 0.0
    %980 = vmatpush.msra.mxu0 0.0
    %981 = vmatpush.msra.mxu0 0.0
    %982 = vmatpush.msra.mxu0 0.0
    %983 = vmatpush.msra.mxu0 0.0
    %984 = vmatpush.msra.mxu0 0.0
    %985 = vmatpush.msra.mxu0 0.0
    %986 = vmatpush.msra.mxu0 0.0
    %987 = vmatpush.msra.mxu0 0.0
    %988 = vmatpush.msra.mxu0 0.0
    %989 = vmatpush.msra.mxu0 0.0
    %990 = vmatpush.msra.mxu0 0.0
    %991 = vmatpush.msra.mxu0 0.0
    %992 = vmatpush.msra.mxu0 0.0
    %993 = vmatpush.msra.mxu0 %v973
    %994 = vmatmul.f32.gmra.mxu0 %v976
    %v995 = vpop.f32.mrf.mxu0
    %v996 = vadd.f32 0.0, %v995
    %997 = vdwg.mxu0
    %998 = vrot.lane.b32.xlu0 %v608, 112
    %v999 = vpop.permute.xlu0 %998
    %v1002 = vsel %vm610, %v971, 0
    %1004 = vmatpush.msra.mxu0 0.0
    %1005 = vmatpush.msra.mxu0 0.0
    %1006 = vmatpush.msra.mxu0 0.0
    %1007 = vmatpush.msra.mxu0 0.0
    %1008 = vmatpush.msra.mxu0 0.0
    %1009 = vmatpush.msra.mxu0 0.0
    %1010 = vmatpush.msra.mxu0 0.0
    %1011 = vmatpush.msra.mxu0 0.0
    %1012 = vmatpush.msra.mxu0 0.0
    %1013 = vmatpush.msra.mxu0 0.0
    %1014 = vmatpush.msra.mxu0 0.0
    %1015 = vmatpush.msra.mxu0 0.0
    %1016 = vmatpush.msra.mxu0 0.0
    %1017 = vmatpush.msra.mxu0 0.0
    %1018 = vmatpush.msra.mxu0 0.0
    %1019 = vmatpush.msra.mxu0 %v999
    %1020 = vmatmul.f32.gmra.mxu0 %v1002
    %v1021 = vpop.f32.mrf.mxu0
    %v1022 = vadd.f32 0.0, %v1021
    %1023 = vdwg.mxu0
    %1026 = vrot.lane.b32.xlu0 %v996, 16
    %v1027 = vpop.permute.xlu0 %1026
    %1028 = vrot.lane.b32.xlu0 %v1022, 16
    %v1029 = vpop.permute.xlu0 %1028
    %vm1032 = vcmask 195712
    %1033 = vst.msk [vmem:[#allocation2] sm:$0xff] %vm1032, %v1027
    %1034 = vst.msk [vmem:[#allocation2 + $0x8] sm:$0xff] %vm1032, %v1029
    %1035 = vrot.lane.b32.xlu0 %v543, 104
    %v1036 = vpop.permute.xlu0 %1035
    %1037 = vrot.lane.b32.xlu0 %v574, 104
    %v1038 = vpop.permute.xlu0 %1037
    %v1039 = vsel %vm610, %v1036, 0
    %v1041 = vsel %vm610, %v1038, 0
    %1043 = vmatpush.xpose.msra.mxu0 0.0
    %1044 = vmatpush.xpose.msra.mxu0 0.0
    %1045 = vmatpush.xpose.msra.mxu0 0.0
    %1046 = vmatpush.xpose.msra.mxu0 0.0
    %1047 = vmatpush.xpose.msra.mxu0 0.0
    %1048 = vmatpush.xpose.msra.mxu0 0.0
    %1049 = vmatpush.xpose.msra.mxu0 0.0
    %1050 = vmatpush.xpose.msra.mxu0 0.0
    %1051 = vmatpush.xpose.msra.mxu0 0.0
    %1052 = vmatpush.xpose.msra.mxu0 0.0
    %1053 = vmatpush.xpose.msra.mxu0 0.0
    %1054 = vmatpush.xpose.msra.mxu0 0.0
    %1055 = vmatpush.xpose.msra.mxu0 0.0
    %1056 = vmatpush.xpose.msra.mxu0 0.0
    %1057 = vmatpush.xpose.msra.mxu0 0.0
    %1058 = vmatpush.xpose.msra.mxu0 %v1041
    %1059 = vmatmul.f32.gmra.mxu0 %v1039
    %v1060 = vpop.f32.mrf.mxu0
    %v1061 = vadd.f32 0.0, %v1060
    %1062 = vdwg.mxu0
    %1063 = vrot.lane.b32.xlu0 %v546, 104
    %v1064 = vpop.permute.xlu0 %1063
    %1065 = vrot.lane.b32.xlu0 %v577, 104
    %v1066 = vpop.permute.xlu0 %1065
    %v1067 = vsel %vm610, %v1064, 0
    %v1069 = vsel %vm610, %v1066, 0
    %1071 = vmatpush.xpose.msra.mxu0 0.0
    %1072 = vmatpush.xpose.msra.mxu0 0.0
    %1073 = vmatpush.xpose.msra.mxu0 0.0
    %1074 = vmatpush.xpose.msra.mxu0 0.0
    %1075 = vmatpush.xpose.msra.mxu0 0.0
    %1076 = vmatpush.xpose.msra.mxu0 0.0
    %1077 = vmatpush.xpose.msra.mxu0 0.0
    %1078 = vmatpush.xpose.msra.mxu0 0.0
    %1079 = vmatpush.xpose.msra.mxu0 0.0
    %1080 = vmatpush.xpose.msra.mxu0 0.0
    %1081 = vmatpush.xpose.msra.mxu0 0.0
    %1082 = vmatpush.xpose.msra.mxu0 0.0
    %1083 = vmatpush.xpose.msra.mxu0 0.0
    %1084 = vmatpush.xpose.msra.mxu0 0.0
    %1085 = vmatpush.xpose.msra.mxu0 0.0
    %1086 = vmatpush.xpose.msra.mxu0 %v1069
    %1087 = vmatmul.f32.gmra.mxu0 %v1067
    %v1088 = vpop.f32.mrf.mxu0
    %v1089 = vadd.f32 0.0, %v1088
    %1090 = vdwg.mxu0
    %v1091 = vmul.f32 %v1061, 0.35355338
    %v1092 = vmul.f32 %v1089, 0.35355338
    %v1093 = vadd.f32 %v1091, %v667
    %v1094 = vadd.f32 %v1092, %v668
    %v1095 = vsel %vm610, %v1093, -inf
    %1096 = vmax.xlane.f32.xlu0 %v1095
    %v1097 = vpop.xlane.xlu0 %1096
    %v1098 = vsel %vm610, %v1094, -inf
    %1099 = vmax.xlane.f32.xlu0 %v1098
    %v1100 = vpop.xlane.xlu0 %1099
    %v1101 = vsub.f32 %v1093, %v1097
    %v1102 = vsub.f32 %v1094, %v1100
    %v1103 = vmul.f32 %v1101, 1.442695
    %v1104 = vpow.pop %v1103
    %v1105 = vmul.f32 %v1102, 1.442695
    %v1106 = vpow.pop %v1105
    %v1107 = vsel %vm610, %v1104, 0.0
    %1108 = vadd.xlane.f32.xlu0 %v1107
    %v1109 = vpop.xlane.xlu0 %1108
    %v1110 = vsel %vm610, %v1106, 0.0
    %1111 = vadd.xlane.f32.xlu0 %v1110
    %v1112 = vpop.xlane.xlu0 %1111
    %v1113 = vrcp.pop %v1109
    %v1114 = vrcp.pop %v1112
    %v1115 = vmul.f32 %v1104, %v1113
    %v1116 = vmul.f32 %v1106, %v1114
    %1117 = vrot.lane.b32.xlu0 %v605, 104
    %v1118 = vpop.permute.xlu0 %1117
    %v1121 = vsel %vm610, %v1115, 0
    %1123 = vmatpush.msra.mxu0 0.0
    %1124 = vmatpush.msra.mxu0 0.0
    %1125 = vmatpush.msra.mxu0 0.0
    %1126 = vmatpush.msra.mxu0 0.0
    %1127 = vmatpush.msra.mxu0 0.0
    %1128 = vmatpush.msra.mxu0 0.0
    %1129 = vmatpush.msra.mxu0 0.0
    %1130 = vmatpush.msra.mxu0 0.0
    %1131 = vmatpush.msra.mxu0 0.0
    %1132 = vmatpush.msra.mxu0 0.0
    %1133 = vmatpush.msra.mxu0 0.0
    %1134 = vmatpush.msra.mxu0 0.0
    %1135 = vmatpush.msra.mxu0 0.0
    %1136 = vmatpush.msra.mxu0 0.0
    %1137 = vmatpush.msra.mxu0 0.0
    %1138 = vmatpush.msra.mxu0 %v1118
    %1139 = vmatmul.f32.gmra.mxu0 %v1121
    %v1140 = vpop.f32.mrf.mxu0
    %v1141 = vadd.f32 0.0, %v1140
    %1142 = vdwg.mxu0
    %1143 = vrot.lane.b32.xlu0 %v608, 104
    %v1144 = vpop.permute.xlu0 %1143
    %v1147 = vsel %vm610, %v1116, 0
    %1149 = vmatpush.msra.mxu0 0.0
    %1150 = vmatpush.msra.mxu0 0.0
    %1151 = vmatpush.msra.mxu0 0.0
    %1152 = vmatpush.msra.mxu0 0.0
    %1153 = vmatpush.msra.mxu0 0.0
    %1154 = vmatpush.msra.mxu0 0.0
    %1155 = vmatpush.msra.mxu0 0.0
    %1156 = vmatpush.msra.mxu0 0.0
    %1157 = vmatpush.msra.mxu0 0.0
    %1158 = vmatpush.msra.mxu0 0.0
    %1159 = vmatpush.msra.mxu0 0.0
    %1160 = vmatpush.msra.mxu0 0.0
    %1161 = vmatpush.msra.mxu0 0.0
    %1162 = vmatpush.msra.mxu0 0.0
    %1163 = vmatpush.msra.mxu0 0.0
    %1164 = vmatpush.msra.mxu0 %v1144
    %1165 = vmatmul.f32.gmra.mxu0 %v1147
    %v1166 = vpop.f32.mrf.mxu0
    %v1167 = vadd.f32 0.0, %v1166
    %1168 = vdwg.mxu0
    %1171 = vrot.lane.b32.xlu0 %v1141, 24
    %v1172 = vpop.permute.xlu0 %1171
    %1173 = vrot.lane.b32.xlu0 %v1167, 24
    %v1174 = vpop.permute.xlu0 %1173
    %vm1177 = vcmask 261312
    %1178 = vst.msk [vmem:[#allocation2] sm:$0xff] %vm1177, %v1172
    %1179 = vst.msk [vmem:[#allocation2 + $0x8] sm:$0xff] %vm1177, %v1174
    %v1180 = vld [vmem:[#allocation2] sm:$0xff]
    %v1181 = vld [vmem:[#allocation2 + $0x8] sm:$0xff]
    %v1182 = vld [vmem:[%s29] sm:$0xff]
    %v1183 = vld [vmem:[%s29 + $0x8] sm:$0xff]
    %v1184 = vld [vmem:[%s29 + $0x10] sm:$0xff]
    %v1185 = vld [vmem:[%s29 + $0x18] sm:$0xff]
    %v1186 = vld [vmem:[#allocation14] sm:$0x1]
    %v1188 = vperm.slane %v1186, 0
    %v1191 = vsel %vm442, %v1180, 0
    %v1194 = vsel %vm442, %v1181, 0
    %1196 = vmatpush.msra.mxu0 0.0
    %1197 = vmatpush.msra.mxu0 0.0
    %1198 = vmatpush.msra.mxu0 0.0
    %1199 = vmatpush.msra.mxu0 0.0
    %1200 = vmatpush.msra.mxu0 0.0
    %1201 = vmatpush.msra.mxu0 0.0
    %1202 = vmatpush.msra.mxu0 0.0
    %1203 = vmatpush.msra.mxu0 0.0
    %1204 = vmatpush.msra.mxu0 0.0
    %1205 = vmatpush.msra.mxu0 0.0
    %1206 = vmatpush.msra.mxu0 0.0
    %1207 = vmatpush.msra.mxu0 0.0
    %1208 = vmatpush.msra.mxu0 %v1185
    %1209 = vmatpush.msra.mxu0 %v1184
    %1210 = vmatpush.msra.mxu0 %v1183
    %1211 = vmatpush.msra.mxu0 %v1182
    %1212 = vmatmul.f32.gmra.mxu0 %v1191
    %v1213 = vpop.f32.mrf.mxu0
    %v1214 = vadd.f32 %v1188, %v1213
    %1215 = vmatmul.f32.gmra.mxu0 %v1194
    %v1216 = vpop.f32.mrf.mxu0
    %v1217 = vadd.f32 %v1188, %v1216
    %1218 = vdwg.mxu0
    %v1219 = vadd.f32 %v502, %v1214
    %v1220 = vadd.f32 %v503, %v1217
    %v1221 = vld [vmem:[#allocation15] sm:$0x1]
    %v1222 = vld [vmem:[#allocation17] sm:$0x1]
    %v1223 = vsel %vm442, %v1219, 0.0
    %1224 = vadd.xlane.f32.xlu0 %v1223
    %v1225 = vpop.xlane.xlu0 %1224
    %v1226 = vsel %vm442, %v1220, 0.0
    %1227 = vadd.xlane.f32.xlu0 %v1226
    %v1228 = vpop.xlane.xlu0 %1227
    %v1229 = vmul.f32 %v1225, %v455
    %v1230 = vmul.f32 %v1228, %v455
    %v1231 = vsub.f32 %v1219, %v1229
    %v1232 = vsub.f32 %v1220, %v1230
    %v1233 = vmul.f32 %v1231, %v1231
    %v1234 = vmul.f32 %v1232, %v1232
    %v1235 = vsel %vm442, %v1233, 0.0
    %1236 = vadd.xlane.f32.xlu0 %v1235
    %v1237 = vpop.xlane.xlu0 %1236
    %v1238 = vsel %vm442, %v1234, 0.0
    %1239 = vadd.xlane.f32.xlu0 %v1238
    %v1240 = vpop.xlane.xlu0 %1239
    %v1241 = vmul.f32 %v1237, %v455
    %v1242 = vmul.f32 %v1240, %v455
    %v1243 = vadd.f32 %v1241, 1e-12
    %v1244 = vadd.f32 %v1242, 1e-12
    %v1245 = vrsqrt.pop %v1243
    %v1246 = vmul.f32 %v1245, %v1243
    %v1247 = vmul.f32 %v1246, %v1245
    %v1248 = vmul.f32 0.5, %v1247
    %v1249 = vsub.f32 1.5, %v1248
    %v1250 = vmul.f32 %v1245, %v1249
    %vm1251 = vweird.f32 %v1243
    %vm1252 = vweird.f32 %v1245
    %vm1253 = vmor %vm1251, %vm1252
    %v1254 = vsel %vm1253, %v1245, %v1250
    %v1255 = vrsqrt.pop %v1244
    %v1256 = vmul.f32 %v1255, %v1244
    %v1257 = vmul.f32 %v1256, %v1255
    %v1258 = vmul.f32 0.5, %v1257
    %v1259 = vsub.f32 1.5, %v1258
    %v1260 = vmul.f32 %v1255, %v1259
    %vm1261 = vweird.f32 %v1244
    %vm1262 = vweird.f32 %v1255
    %vm1263 = vmor %vm1261, %vm1262
    %v1264 = vsel %vm1263, %v1255, %v1260
    %v1265 = vmul.f32 %v1231, %v1254
    %v1266 = vmul.f32 %v1232, %v1264
    %v1268 = vperm.slane %v1221, 0
    %v1270 = vmul.f32 %v1265, %v1268
    %v1271 = vmul.f32 %v1266, %v1268
    %v1273 = vperm.slane %v1222, 0
    %v1275 = vadd.f32 %v1270, %v1273
    %v1276 = vadd.f32 %v1271, %v1273
    %v1277 = vld [vmem:[#allocation18] sm:$0xff]
    %v1278 = vld [vmem:[#allocation18 + $0x8] sm:$0xff]
    %v1279 = vld [vmem:[#allocation18 + $0x10] sm:$0xff]
    %v1280 = vld [vmem:[#allocation18 + $0x18] sm:$0xff]
    %v1281 = vld [vmem:[#allocation20] sm:$0x1]
    %v1283 = vperm.slane %v1281, 0
    %v1286 = vsel %vm442, %v1275, 0
    %v1289 = vsel %vm442, %v1276, 0
    %1291 = vmatpush.msra.mxu0 0.0
    %1292 = vmatpush.msra.mxu0 0.0
    %1293 = vmatpush.msra.mxu0 0.0
    %1294 = vmatpush.msra.mxu0 0.0
    %1295 = vmatpush.msra.mxu0 0.0
    %1296 = vmatpush.msra.mxu0 0.0
    %1297 = vmatpush.msra.mxu0 0.0
    %1298 = vmatpush.msra.mxu0 0.0
    %1299 = vmatpush.msra.mxu0 0.0
    %1300 = vmatpush.msra.mxu0 0.0
    %1301 = vmatpush.msra.mxu0 0.0
    %1302 = vmatpush.msra.mxu0 0.0
    %1303 = vmatpush.msra.mxu0 %v1280
    %1304 = vmatpush.msra.mxu0 %v1279
    %1305 = vmatpush.msra.mxu0 %v1278
    %1306 = vmatpush.msra.mxu0 %v1277
    %1307 = vmatmul.f32.gmra.mxu0 %v1286
    %v1308 = vpop.f32.mrf.mxu0
    %v1309 = vadd.f32 %v1283, %v1308
    %1310 = vmatmul.f32.gmra.mxu0 %v1289
    %v1311 = vpop.f32.mrf.mxu0
    %v1312 = vadd.f32 %v1283, %v1311
    %1313 = vdwg.mxu0
    %v1314 = vmul.f32 %v1309, 0.5
    %v1315 = vmul.f32 %v1312, 0.5
    %v1316 = vmul.f32 %v1309, 0.044715
    %v1317 = vmul.f32 %v1312, 0.044715
    %v1318 = vmul.f32 %v1316, %v1309
    %v1319 = vmul.f32 %v1317, %v1312
    %v1320 = vmul.f32 %v1318, %v1309
    %v1321 = vmul.f32 %v1319, %v1312
    %v1322 = vadd.f32 %v1309, %v1320
    %v1323 = vadd.f32 %v1312, %v1321
    %v1324 = vmul.f32 %v1322, 0.7978846
    %v1325 = vmul.f32 %v1323, 0.7978846
    %v1326 = vtanh.pop %v1324
    %v1327 = vtanh.pop %v1325
    %v1328 = vadd.f32 %v1326, 1.0
    %v1329 = vadd.f32 %v1327, 1.0
    %v1330 = vmul.f32 %v1314, %v1328
    %v1331 = vmul.f32 %v1315, %v1329
    %v1332 = vld [vmem:[%s41] sm:$0xff]
    %v1333 = vld [vmem:[%s41 + $0x8] sm:$0xff]
    %v1334 = vld [vmem:[%s41 + $0x10] sm:$0xff]
    %v1335 = vld [vmem:[%s41 + $0x18] sm:$0xff]
    %v1336 = vld [vmem:[%s41 + $0x20] sm:$0xff]
    %v1337 = vld [vmem:[%s41 + $0x28] sm:$0xff]
    %v1338 = vld [vmem:[%s41 + $0x30] sm:$0xff]
    %v1339 = vld [vmem:[%s41 + $0x38] sm:$0xff]
    %v1340 = vld [vmem:[#allocation21] sm:$0x1]
    %v1342 = vperm.slane %v1340, 0
    %vm1344 = vcmask 523264
    %v1346 = vsel %vm1344, %v1330, 0
    %v1349 = vsel %vm1344, %v1331, 0
    %1351 = vmatpush.msra.mxu0 0.0
    %1352 = vmatpush.msra.mxu0 0.0
    %1353 = vmatpush.msra.mxu0 0.0
    %1354 = vmatpush.msra.mxu0 0.0
    %1355 = vmatpush.msra.mxu0 0.0
    %1356 = vmatpush.msra.mxu0 0.0
    %1357 = vmatpush.msra.mxu0 0.0
    %1358 = vmatpush.msra.mxu0 0.0
    %1359 = vmatpush.msra.mxu0 %v1339
    %1360 = vmatpush.msra.mxu0 %v1338
    %1361 = vmatpush.msra.mxu0 %v1337
    %1362 = vmatpush.msra.mxu0 %v1336
    %1363 = vmatpush.msra.mxu0 %v1335
    %1364 = vmatpush.msra.mxu0 %v1334
    %1365 = vmatpush.msra.mxu0 %v1333
    %1366 = vmatpush.msra.mxu0 %v1332
    %1367 = vmatmul.f32.gmra.mxu0 %v1346
    %v1368 = vpop.f32.mrf.mxu0
    %v1369 = vadd.f32 %v1342, %v1368
    %1370 = vmatmul.f32.gmra.mxu0 %v1349
    %v1371 = vpop.f32.mrf.mxu0
    %v1372 = vadd.f32 %v1342, %v1371
    %1373 = vdwg.mxu0
    %v1374 = vadd.f32 %v1275, %v1369
    %v1375 = vadd.f32 %v1276, %v1372
    %v1376 = vld [vmem:[#allocation23] sm:$0x1]
    %v1377 = vld [vmem:[#allocation24] sm:$0x1]
    %v1378 = vsel %vm442, %v1374, 0.0
    %1379 = vadd.xlane.f32.xlu0 %v1378
    %v1380 = vpop.xlane.xlu0 %1379
    %v1381 = vsel %vm442, %v1375, 0.0
    %1382 = vadd.xlane.f32.xlu0 %v1381
    %v1383 = vpop.xlane.xlu0 %1382
    %v1384 = vmul.f32 %v1380, %v455
    %v1385 = vmul.f32 %v1383, %v455
    %v1386 = vsub.f32 %v1374, %v1384
    %v1387 = vsub.f32 %v1375, %v1385
    %v1388 = vmul.f32 %v1386, %v1386
    %v1389 = vmul.f32 %v1387, %v1387
    %v1390 = vsel %vm442, %v1388, 0.0
    %1391 = vadd.xlane.f32.xlu0 %v1390
    %v1392 = vpop.xlane.xlu0 %1391
    %v1393 = vsel %vm442, %v1389, 0.0
    %1394 = vadd.xlane.f32.xlu0 %v1393
    %v1395 = vpop.xlane.xlu0 %1394
    %v1396 = vmul.f32 %v1392, %v455
    %v1397 = vmul.f32 %v1395, %v455
    %v1398 = vadd.f32 %v1396, 1e-12
    %v1399 = vadd.f32 %v1397, 1e-12
    %v1400 = vrsqrt.pop %v1398
    %v1401 = vmul.f32 %v1400, %v1398
    %v1402 = vmul.f32 %v1401, %v1400
    %v1403 = vmul.f32 0.5, %v1402
    %v1404 = vsub.f32 1.5, %v1403
    %v1405 = vmul.f32 %v1400, %v1404
    %vm1406 = vweird.f32 %v1398
    %vm1407 = vweird.f32 %v1400
    %vm1408 = vmor %vm1406, %vm1407
    %v1409 = vsel %vm1408, %v1400, %v1405
    %v1410 = vrsqrt.pop %v1399
    %v1411 = vmul.f32 %v1410, %v1399
    %v1412 = vmul.f32 %v1411, %v1410
    %v1413 = vmul.f32 0.5, %v1412
    %v1414 = vsub.f32 1.5, %v1413
    %v1415 = vmul.f32 %v1410, %v1414
    %vm1416 = vweird.f32 %v1399
    %vm1417 = vweird.f32 %v1410
    %vm1418 = vmor %vm1416, %vm1417
    %v1419 = vsel %vm1418, %v1410, %v1415
    %v1420 = vmul.f32 %v1386, %v1409
    %v1421 = vmul.f32 %v1387, %v1419
    %v1423 = vperm.slane %v1376, 0
    %v1425 = vmul.f32 %v1420, %v1423
    %v1426 = vmul.f32 %v1421, %v1423
    %v1428 = vperm.slane %v1377, 0
    %v1430 = vadd.f32 %v1425, %v1428
    %v1431 = vadd.f32 %v1426, %v1428
    %s1432 = scalar_lea.vmem %s17, 32
    %v1433 = vld [vmem:[%s1432] sm:$0xff]
    %v1434 = vld [vmem:[%s1432 + $0x8] sm:$0xff]
    %v1435 = vld [vmem:[%s1432 + $0x10] sm:$0xff]
    %v1436 = vld [vmem:[%s1432 + $0x18] sm:$0xff]
    %s1437 = scalar_lea.vmem [#allocation9], 1
    %v1438 = vld [vmem:[%s1437] sm:$0x1]
    %v1440 = vperm.slane %v1438, 0
    %v1443 = vsel %vm442, %v1430, 0
    %v1446 = vsel %vm442, %v1431, 0
    %1448 = vmatpush.msra.mxu0 0.0
    %1449 = vmatpush.msra.mxu0 0.0
    %1450 = vmatpush.msra.mxu0 0.0
    %1451 = vmatpush.msra.mxu0 0.0
    %1452 = vmatpush.msra.mxu0 0.0
    %1453 = vmatpush.msra.mxu0 0.0
    %1454 = vmatpush.msra.mxu0 0.0
    %1455 = vmatpush.msra.mxu0 0.0
    %1456 = vmatpush.msra.mxu0 0.0
    %1457 = vmatpush.msra.mxu0 0.0
    %1458 = vmatpush.msra.mxu0 0.0
    %1459 = vmatpush.msra.mxu0 0.0
    %1460 = vmatpush.msra.mxu0 %v1436
    %1461 = vmatpush.msra.mxu0 %v1435
    %1462 = vmatpush.msra.mxu0 %v1434
    %1463 = vmatpush.msra.mxu0 %v1433
    %1464 = vmatmul.f32.gmra.mxu0 %v1443
    %v1465 = vpop.f32.mrf.mxu0
    %v1466 = vadd.f32 %v1440, %v1465
    %1467 = vmatmul.f32.gmra.mxu0 %v1446
    %v1468 = vpop.f32.mrf.mxu0
    %v1469 = vadd.f32 %v1440, %v1468
    %1470 = vdwg.mxu0
    %s1471 = scalar_lea.vmem %s21, 32
    %v1472 = vld [vmem:[%s1471] sm:$0xff]
    %v1473 = vld [vmem:[%s1471 + $0x8] sm:$0xff]
    %v1474 = vld [vmem:[%s1471 + $0x10] sm:$0xff]
    %v1475 = vld [vmem:[%s1471 + $0x18] sm:$0xff]
    %s1476 = scalar_lea.vmem [#allocation11], 1
    %v1477 = vld [vmem:[%s1476] sm:$0x1]
    %v1479 = vperm.slane %v1477, 0
    %1481 = vmatpush.msra.mxu0 0.0
    %1482 = vmatpush.msra.mxu0 0.0
    %1483 = vmatpush.msra.mxu0 0.0
    %1484 = vmatpush.msra.mxu0 0.0
    %1485 = vmatpush.msra.mxu0 0.0
    %1486 = vmatpush.msra.mxu0 0.0
    %1487 = vmatpush.msra.mxu0 0.0
    %1488 = vmatpush.msra.mxu0 0.0
    %1489 = vmatpush.msra.mxu0 0.0
    %1490 = vmatpush.msra.mxu0 0.0
    %1491 = vmatpush.msra.mxu0 0.0
    %1492 = vmatpush.msra.mxu0 0.0
    %1493 = vmatpush.msra.mxu0 %v1475
    %1494 = vmatpush.msra.mxu0 %v1474
    %1495 = vmatpush.msra.mxu0 %v1473
    %1496 = vmatpush.msra.mxu0 %v1472
    %1497 = vmatmul.f32.gmra.mxu0 %v1443
    %v1498 = vpop.f32.mrf.mxu0
    %v1499 = vadd.f32 %v1479, %v1498
    %1500 = vmatmul.f32.gmra.mxu0 %v1446
    %v1501 = vpop.f32.mrf.mxu0
    %v1502 = vadd.f32 %v1479, %v1501
    %1503 = vdwg.mxu0
    %s1504 = scalar_lea.vmem %s25, 32
    %v1505 = vld [vmem:[%s1504] sm:$0xff]
    %v1506 = vld [vmem:[%s1504 + $0x8] sm:$0xff]
    %v1507 = vld [vmem:[%s1504 + $0x10] sm:$0xff]
    %v1508 = vld [vmem:[%s1504 + $0x18] sm:$0xff]
    %s1509 = scalar_lea.vmem [#allocation12], 1
    %v1510 = vld [vmem:[%s1509] sm:$0x1]
    %v1512 = vperm.slane %v1510, 0
    %1514 = vmatpush.msra.mxu0 0.0
    %1515 = vmatpush.msra.mxu0 0.0
    %1516 = vmatpush.msra.mxu0 0.0
    %1517 = vmatpush.msra.mxu0 0.0
    %1518 = vmatpush.msra.mxu0 0.0
    %1519 = vmatpush.msra.mxu0 0.0
    %1520 = vmatpush.msra.mxu0 0.0
    %1521 = vmatpush.msra.mxu0 0.0
    %1522 = vmatpush.msra.mxu0 0.0
    %1523 = vmatpush.msra.mxu0 0.0
    %1524 = vmatpush.msra.mxu0 0.0
    %1525 = vmatpush.msra.mxu0 0.0
    %1526 = vmatpush.msra.mxu0 %v1508
    %1527 = vmatpush.msra.mxu0 %v1507
    %1528 = vmatpush.msra.mxu0 %v1506
    %1529 = vmatpush.msra.mxu0 %v1505
    %1530 = vmatmul.f32.gmra.mxu0 %v1443
    %v1531 = vpop.f32.mrf.mxu0
    %v1532 = vadd.f32 %v1512, %v1531
    %1533 = vmatmul.f32.gmra.mxu0 %v1446
    %v1534 = vpop.f32.mrf.mxu0
    %v1535 = vadd.f32 %v1512, %v1534
    %1536 = vdwg.mxu0
    %v1538 = vsel %vm610, %v1466, 0
    %v1541 = vsel %vm610, %v1499, 0
    %1543 = vmatpush.xpose.msra.mxu0 0.0
    %1544 = vmatpush.xpose.msra.mxu0 0.0
    %1545 = vmatpush.xpose.msra.mxu0 0.0
    %1546 = vmatpush.xpose.msra.mxu0 0.0
    %1547 = vmatpush.xpose.msra.mxu0 0.0
    %1548 = vmatpush.xpose.msra.mxu0 0.0
    %1549 = vmatpush.xpose.msra.mxu0 0.0
    %1550 = vmatpush.xpose.msra.mxu0 0.0
    %1551 = vmatpush.xpose.msra.mxu0 0.0
    %1552 = vmatpush.xpose.msra.mxu0 0.0
    %1553 = vmatpush.xpose.msra.mxu0 0.0
    %1554 = vmatpush.xpose.msra.mxu0 0.0
    %1555 = vmatpush.xpose.msra.mxu0 0.0
    %1556 = vmatpush.xpose.msra.mxu0 0.0
    %1557 = vmatpush.xpose.msra.mxu0 0.0
    %1558 = vmatpush.xpose.msra.mxu0 %v1541
    %1559 = vmatmul.f32.gmra.mxu0 %v1538
    %v1560 = vpop.f32.mrf.mxu0
    %v1561 = vadd.f32 0.0, %v1560
    %1562 = vdwg.mxu0
    %v1564 = vsel %vm610, %v1469, 0
    %v1567 = vsel %vm610, %v1502, 0
    %1569 = vmatpush.xpose.msra.mxu0 0.0
    %1570 = vmatpush.xpose.msra.mxu0 0.0
    %1571 = vmatpush.xpose.msra.mxu0 0.0
    %1572 = vmatpush.xpose.msra.mxu0 0.0
    %1573 = vmatpush.xpose.msra.mxu0 0.0
    %1574 = vmatpush.xpose.msra.mxu0 0.0
    %1575 = vmatpush.xpose.msra.mxu0 0.0
    %1576 = vmatpush.xpose.msra.mxu0 0.0
    %1577 = vmatpush.xpose.msra.mxu0 0.0
    %1578 = vmatpush.xpose.msra.mxu0 0.0
    %1579 = vmatpush.xpose.msra.mxu0 0.0
    %1580 = vmatpush.xpose.msra.mxu0 0.0
    %1581 = vmatpush.xpose.msra.mxu0 0.0
    %1582 = vmatpush.xpose.msra.mxu0 0.0
    %1583 = vmatpush.xpose.msra.mxu0 0.0
    %1584 = vmatpush.xpose.msra.mxu0 %v1567
    %1585 = vmatmul.f32.gmra.mxu0 %v1564
    %v1586 = vpop.f32.mrf.mxu0
    %v1587 = vadd.f32 0.0, %v1586
    %1588 = vdwg.mxu0
    %v1589 = vmul.f32 %v1561, 0.35355338
    %v1590 = vmul.f32 %v1587, 0.35355338
    %v1591 = vadd.f32 %v1589, %v667
    %v1592 = vadd.f32 %v1590, %v668
    %v1593 = vsel %vm610, %v1591, -inf
    %1594 = vmax.xlane.f32.xlu0 %v1593
    %v1595 = vpop.xlane.xlu0 %1594
    %v1596 = vsel %vm610, %v1592, -inf
    %1597 = vmax.xlane.f32.xlu0 %v1596
    %v1598 = vpop.xlane.xlu0 %1597
    %v1599 = vsub.f32 %v1591, %v1595
    %v1600 = vsub.f32 %v1592, %v1598
    %v1601 = vmul.f32 %v1599, 1.442695
    %v1602 = vpow.pop %v1601
    %v1603 = vmul.f32 %v1600, 1.442695
    %v1604 = vpow.pop %v1603
    %v1605 = vsel %vm610, %v1602, 0.0
    %1606 = vadd.xlane.f32.xlu0 %v1605
    %v1607 = vpop.xlane.xlu0 %1606
    %v1608 = vsel %vm610, %v1604, 0.0
    %1609 = vadd.xlane.f32.xlu0 %v1608
    %v1610 = vpop.xlane.xlu0 %1609
    %v1611 = vrcp.pop %v1607
    %v1612 = vrcp.pop %v1610
    %v1613 = vmul.f32 %v1602, %v1611
    %v1614 = vmul.f32 %v1604, %v1612
    %v1616 = vsel %vm610, %v1613, 0
    %1618 = vmatpush.msra.mxu0 0.0
    %1619 = vmatpush.msra.mxu0 0.0
    %1620 = vmatpush.msra.mxu0 0.0
    %1621 = vmatpush.msra.mxu0 0.0
    %1622 = vmatpush.msra.mxu0 0.0
    %1623 = vmatpush.msra.mxu0 0.0
    %1624 = vmatpush.msra.mxu0 0.0
    %1625 = vmatpush.msra.mxu0 0.0
    %1626 = vmatpush.msra.mxu0 0.0
    %1627 = vmatpush.msra.mxu0 0.0
    %1628 = vmatpush.msra.mxu0 0.0
    %1629 = vmatpush.msra.mxu0 0.0
    %1630 = vmatpush.msra.mxu0 0.0
    %1631 = vmatpush.msra.mxu0 0.0
    %1632 = vmatpush.msra.mxu0 0.0
    %1633 = vmatpush.msra.mxu0 %v1532
    %1634 = vmatmul.f32.gmra.mxu0 %v1616
    %v1635 = vpop.f32.mrf.mxu0
    %v1636 = vadd.f32 0.0, %v1635
    %1637 = vdwg.mxu0
    %v1639 = vsel %vm610, %v1614, 0
    %1641 = vmatpush.msra.mxu0 0.0
    %1642 = vmatpush.msra.mxu0 0.0
    %1643 = vmatpush.msra.mxu0 0.0
    %1644 = vmatpush.msra.mxu0 0.0
    %1645 = vmatpush.msra.mxu0 0.0
    %1646 = vmatpush.msra.mxu0 0.0
    %1647 = vmatpush.msra.mxu0 0.0
    %1648 = vmatpush.msra.mxu0 0.0
    %1649 = vmatpush.msra.mxu0 0.0
    %1650 = vmatpush.msra.mxu0 0.0
    %1651 = vmatpush.msra.mxu0 0.0
    %1652 = vmatpush.msra.mxu0 0.0
    %1653 = vmatpush.msra.mxu0 0.0
    %1654 = vmatpush.msra.mxu0 0.0
    %1655 = vmatpush.msra.mxu0 0.0
    %1656 = vmatpush.msra.mxu0 %v1535
    %1657 = vmatmul.f32.gmra.mxu0 %v1639
    %v1658 = vpop.f32.mrf.mxu0
    %v1659 = vadd.f32 0.0, %v1658
    %1660 = vdwg.mxu0
    %1661 = vst.msk [vmem:[#allocation2] sm:$0xff] %vm610, %v1636
    %1662 = vst.msk [vmem:[#allocation2 + $0x8] sm:$0xff] %vm610, %v1659
    %1663 = vrot.lane.b32.xlu0 %v1466, 120
    %v1664 = vpop.permute.xlu0 %1663
    %1665 = vrot.lane.b32.xlu0 %v1499, 120
    %v1666 = vpop.permute.xlu0 %1665
    %v1667 = vsel %vm610, %v1664, 0
    %v1669 = vsel %vm610, %v1666, 0
    %1671 = vmatpush.xpose.msra.mxu0 0.0
    %1672 = vmatpush.xpose.msra.mxu0 0.0
    %1673 = vmatpush.xpose.msra.mxu0 0.0
    %1674 = vmatpush.xpose.msra.mxu0 0.0
    %1675 = vmatpush.xpose.msra.mxu0 0.0
    %1676 = vmatpush.xpose.msra.mxu0 0.0
    %1677 = vmatpush.xpose.msra.mxu0 0.0
    %1678 = vmatpush.xpose.msra.mxu0 0.0
    %1679 = vmatpush.xpose.msra.mxu0 0.0
    %1680 = vmatpush.xpose.msra.mxu0 0.0
    %1681 = vmatpush.xpose.msra.mxu0 0.0
    %1682 = vmatpush.xpose.msra.mxu0 0.0
    %1683 = vmatpush.xpose.msra.mxu0 0.0
    %1684 = vmatpush.xpose.msra.mxu0 0.0
    %1685 = vmatpush.xpose.msra.mxu0 0.0
    %1686 = vmatpush.xpose.msra.mxu0 %v1669
    %1687 = vmatmul.f32.gmra.mxu0 %v1667
    %v1688 = vpop.f32.mrf.mxu0
    %v1689 = vadd.f32 0.0, %v1688
    %1690 = vdwg.mxu0
    %1691 = vrot.lane.b32.xlu0 %v1469, 120
    %v1692 = vpop.permute.xlu0 %1691
    %1693 = vrot.lane.b32.xlu0 %v1502, 120
    %v1694 = vpop.permute.xlu0 %1693
    %v1695 = vsel %vm610, %v1692, 0
    %v1697 = vsel %vm610, %v1694, 0
    %1699 = vmatpush.xpose.msra.mxu0 0.0
    %1700 = vmatpush.xpose.msra.mxu0 0.0
    %1701 = vmatpush.xpose.msra.mxu0 0.0
    %1702 = vmatpush.xpose.msra.mxu0 0.0
    %1703 = vmatpush.xpose.msra.mxu0 0.0
    %1704 = vmatpush.xpose.msra.mxu0 0.0
    %1705 = vmatpush.xpose.msra.mxu0 0.0
    %1706 = vmatpush.xpose.msra.mxu0 0.0
    %1707 = vmatpush.xpose.msra.mxu0 0.0
    %1708 = vmatpush.xpose.msra.mxu0 0.0
    %1709 = vmatpush.xpose.msra.mxu0 0.0
    %1710 = vmatpush.xpose.msra.mxu0 0.0
    %1711 = vmatpush.xpose.msra.mxu0 0.0
    %1712 = vmatpush.xpose.msra.mxu0 0.0
    %1713 = vmatpush.xpose.msra.mxu0 0.0
    %1714 = vmatpush.xpose.msra.mxu0 %v1697
    %1715 = vmatmul.f32.gmra.mxu0 %v1695
    %v1716 = vpop.f32.mrf.mxu0
    %v1717 = vadd.f32 0.0, %v1716
    %1718 = vdwg.mxu0
    %v1719 = vmul.f32 %v1689, 0.35355338
    %v1720 = vmul.f32 %v1717, 0.35355338
    %v1721 = vadd.f32 %v1719, %v667
    %v1722 = vadd.f32 %v1720, %v668
    %v1723 = vsel %vm610, %v1721, -inf
    %1724 = vmax.xlane.f32.xlu0 %v1723
    %v1725 = vpop.xlane.xlu0 %1724
    %v1726 = vsel %vm610, %v1722, -inf
    %1727 = vmax.xlane.f32.xlu0 %v1726
    %v1728 = vpop.xlane.xlu0 %1727
    %v1729 = vsub.f32 %v1721, %v1725
    %v1730 = vsub.f32 %v1722, %v1728
    %v1731 = vmul.f32 %v1729, 1.442695
    %v1732 = vpow.pop %v1731
    %v1733 = vmul.f32 %v1730, 1.442695
    %v1734 = vpow.pop %v1733
    %v1735 = vsel %vm610, %v1732, 0.0
    %1736 = vadd.xlane.f32.xlu0 %v1735
    %v1737 = vpop.xlane.xlu0 %1736
    %v1738 = vsel %vm610, %v1734, 0.0
    %1739 = vadd.xlane.f32.xlu0 %v1738
    %v1740 = vpop.xlane.xlu0 %1739
    %v1741 = vrcp.pop %v1737
    %v1742 = vrcp.pop %v1740
    %v1743 = vmul.f32 %v1732, %v1741
    %v1744 = vmul.f32 %v1734, %v1742
    %1746 = vrot.lane.b32.xlu0 %v1532, 120
    %v1747 = vpop.permute.xlu0 %1746
    %v1750 = vsel %vm610, %v1743, 0
    %1752 = vmatpush.msra.mxu0 0.0
    %1753 = vmatpush.msra.mxu0 0.0
    %1754 = vmatpush.msra.mxu0 0.0
    %1755 = vmatpush.msra.mxu0 0.0
    %1756 = vmatpush.msra.mxu0 0.0
    %1757 = vmatpush.msra.mxu0 0.0
    %1758 = vmatpush.msra.mxu0 0.0
    %1759 = vmatpush.msra.mxu0 0.0
    %1760 = vmatpush.msra.mxu0 0.0
    %1761 = vmatpush.msra.mxu0 0.0
    %1762 = vmatpush.msra.mxu0 0.0
    %1763 = vmatpush.msra.mxu0 0.0
    %1764 = vmatpush.msra.mxu0 0.0
    %1765 = vmatpush.msra.mxu0 0.0
    %1766 = vmatpush.msra.mxu0 0.0
    %1767 = vmatpush.msra.mxu0 %v1747
    %1768 = vmatmul.f32.gmra.mxu0 %v1750
    %v1769 = vpop.f32.mrf.mxu0
    %v1770 = vadd.f32 0.0, %v1769
    %1771 = vdwg.mxu0
    %1773 = vrot.lane.b32.xlu0 %v1535, 120
    %v1774 = vpop.permute.xlu0 %1773
    %v1777 = vsel %vm610, %v1744, 0
    %1779 = vmatpush.msra.mxu0 0.0
    %1780 = vmatpush.msra.mxu0 0.0
    %1781 = vmatpush.msra.mxu0 0.0
    %1782 = vmatpush.msra.mxu0 0.0
    %1783 = vmatpush.msra.mxu0 0.0
    %1784 = vmatpush.msra.mxu0 0.0
    %1785 = vmatpush.msra.mxu0 0.0
    %1786 = vmatpush.msra.mxu0 0.0
    %1787 = vmatpush.msra.mxu0 0.0
    %1788 = vmatpush.msra.mxu0 0.0
    %1789 = vmatpush.msra.mxu0 0.0
    %1790 = vmatpush.msra.mxu0 0.0
    %1791 = vmatpush.msra.mxu0 0.0
    %1792 = vmatpush.msra.mxu0 0.0
    %1793 = vmatpush.msra.mxu0 0.0
    %1794 = vmatpush.msra.mxu0 %v1774
    %1795 = vmatmul.f32.gmra.mxu0 %v1777
    %v1796 = vpop.f32.mrf.mxu0
    %v1797 = vadd.f32 0.0, %v1796
    %1798 = vdwg.mxu0
    %1801 = vrot.lane.b32.xlu0 %v1770, 8
    %v1802 = vpop.permute.xlu0 %1801
    %1803 = vrot.lane.b32.xlu0 %v1797, 8
    %v1804 = vpop.permute.xlu0 %1803
    %1807 = vst.msk [vmem:[#allocation2] sm:$0xff] %vm887, %v1802
    %1808 = vst.msk [vmem:[#allocation2 + $0x8] sm:$0xff] %vm887, %v1804
    %1809 = vrot.lane.b32.xlu0 %v1466, 112
    %v1810 = vpop.permute.xlu0 %1809
    %1811 = vrot.lane.b32.xlu0 %v1499, 112
    %v1812 = vpop.permute.xlu0 %1811
    %v1813 = vsel %vm610, %v1810, 0
    %v1815 = vsel %vm610, %v1812, 0
    %1817 = vmatpush.xpose.msra.mxu0 0.0
    %1818 = vmatpush.xpose.msra.mxu0 0.0
    %1819 = vmatpush.xpose.msra.mxu0 0.0
    %1820 = vmatpush.xpose.msra.mxu0 0.0
    %1821 = vmatpush.xpose.msra.mxu0 0.0
    %1822 = vmatpush.xpose.msra.mxu0 0.0
    %1823 = vmatpush.xpose.msra.mxu0 0.0
    %1824 = vmatpush.xpose.msra.mxu0 0.0
    %1825 = vmatpush.xpose.msra.mxu0 0.0
    %1826 = vmatpush.xpose.msra.mxu0 0.0
    %1827 = vmatpush.xpose.msra.mxu0 0.0
    %1828 = vmatpush.xpose.msra.mxu0 0.0
    %1829 = vmatpush.xpose.msra.mxu0 0.0
    %1830 = vmatpush.xpose.msra.mxu0 0.0
    %1831 = vmatpush.xpose.msra.mxu0 0.0
    %1832 = vmatpush.xpose.msra.mxu0 %v1815
    %1833 = vmatmul.f32.gmra.mxu0 %v1813
    %v1834 = vpop.f32.mrf.mxu0
    %v1835 = vadd.f32 0.0, %v1834
    %1836 = vdwg.mxu0
    %1837 = vrot.lane.b32.xlu0 %v1469, 112
    %v1838 = vpop.permute.xlu0 %1837
    %1839 = vrot.lane.b32.xlu0 %v1502, 112
    %v1840 = vpop.permute.xlu0 %1839
    %v1841 = vsel %vm610, %v1838, 0
    %v1843 = vsel %vm610, %v1840, 0
    %1845 = vmatpush.xpose.msra.mxu0 0.0
    %1846 = vmatpush.xpose.msra.mxu0 0.0
    %1847 = vmatpush.xpose.msra.mxu0 0.0
    %1848 = vmatpush.xpose.msra.mxu0 0.0
    %1849 = vmatpush.xpose.msra.mxu0 0.0
    %1850 = vmatpush.xpose.msra.mxu0 0.0
    %1851 = vmatpush.xpose.msra.mxu0 0.0
    %1852 = vmatpush.xpose.msra.mxu0 0.0
    %1853 = vmatpush.xpose.msra.mxu0 0.0
    %1854 = vmatpush.xpose.msra.mxu0 0.0
    %1855 = vmatpush.xpose.msra.mxu0 0.0
    %1856 = vmatpush.xpose.msra.mxu0 0.0
    %1857 = vmatpush.xpose.msra.mxu0 0.0
    %1858 = vmatpush.xpose.msra.mxu0 0.0
    %1859 = vmatpush.xpose.msra.mxu0 0.0
    %1860 = vmatpush.xpose.msra.mxu0 %v1843
    %1861 = vmatmul.f32.gmra.mxu0 %v1841
    %v1862 = vpop.f32.mrf.mxu0
    %v1863 = vadd.f32 0.0, %v1862
    %1864 = vdwg.mxu0
    %v1865 = vmul.f32 %v1835, 0.35355338
    %v1866 = vmul.f32 %v1863, 0.35355338
    %v1867 = vadd.f32 %v1865, %v667
    %v1868 = vadd.f32 %v1866, %v668
    %v1869 = vsel %vm610, %v1867, -inf
    %1870 = vmax.xlane.f32.xlu0 %v1869
    %v1871 = vpop.xlane.xlu0 %1870
    %v1872 = vsel %vm610, %v1868, -inf
    %1873 = vmax.xlane.f32.xlu0 %v1872
    %v1874 = vpop.xlane.xlu0 %1873
    %v1875 = vsub.f32 %v1867, %v1871
    %v1876 = vsub.f32 %v1868, %v1874
    %v1877 = vmul.f32 %v1875, 1.442695
    %v1878 = vpow.pop %v1877
    %v1879 = vmul.f32 %v1876, 1.442695
    %v1880 = vpow.pop %v1879
    %v1881 = vsel %vm610, %v1878, 0.0
    %1882 = vadd.xlane.f32.xlu0 %v1881
    %v1883 = vpop.xlane.xlu0 %1882
    %v1884 = vsel %vm610, %v1880, 0.0
    %1885 = vadd.xlane.f32.xlu0 %v1884
    %v1886 = vpop.xlane.xlu0 %1885
    %v1887 = vrcp.pop %v1883
    %v1888 = vrcp.pop %v1886
    %v1889 = vmul.f32 %v1878, %v1887
    %v1890 = vmul.f32 %v1880, %v1888
    %1891 = vrot.lane.b32.xlu0 %v1532, 112
    %v1892 = vpop.permute.xlu0 %1891
    %v1895 = vsel %vm610, %v1889, 0
    %1897 = vmatpush.msra.mxu0 0.0
    %1898 = vmatpush.msra.mxu0 0.0
    %1899 = vmatpush.msra.mxu0 0.0
    %1900 = vmatpush.msra.mxu0 0.0
    %1901 = vmatpush.msra.mxu0 0.0
    %1902 = vmatpush.msra.mxu0 0.0
    %1903 = vmatpush.msra.mxu0 0.0
    %1904 = vmatpush.msra.mxu0 0.0
    %1905 = vmatpush.msra.mxu0 0.0
    %1906 = vmatpush.msra.mxu0 0.0
    %1907 = vmatpush.msra.mxu0 0.0
    %1908 = vmatpush.msra.mxu0 0.0
    %1909 = vmatpush.msra.mxu0 0.0
    %1910 = vmatpush.msra.mxu0 0.0
    %1911 = vmatpush.msra.mxu0 0.0
    %1912 = vmatpush.msra.mxu0 %v1892
    %1913 = vmatmul.f32.gmra.mxu0 %v1895
    %v1914 = vpop.f32.mrf.mxu0
    %v1915 = vadd.f32 0.0, %v1914
    %1916 = vdwg.mxu0
    %1917 = vrot.lane.b32.xlu0 %v1535, 112
    %v1918 = vpop.permute.xlu0 %1917
    %v1921 = vsel %vm610, %v1890, 0
    %1923 = vmatpush.msra.mxu0 0.0
    %1924 = vmatpush.msra.mxu0 0.0
    %1925 = vmatpush.msra.mxu0 0.0
    %1926 = vmatpush.msra.mxu0 0.0
    %1927 = vmatpush.msra.mxu0 0.0
    %1928 = vmatpush.msra.mxu0 0.0
    %1929 = vmatpush.msra.mxu0 0.0
    %1930 = vmatpush.msra.mxu0 0.0
    %1931 = vmatpush.msra.mxu0 0.0
    %1932 = vmatpush.msra.mxu0 0.0
    %1933 = vmatpush.msra.mxu0 0.0
    %1934 = vmatpush.msra.mxu0 0.0
    %1935 = vmatpush.msra.mxu0 0.0
    %1936 = vmatpush.msra.mxu0 0.0
    %1937 = vmatpush.msra.mxu0 0.0
    %1938 = vmatpush.msra.mxu0 %v1918
    %1939 = vmatmul.f32.gmra.mxu0 %v1921
    %v1940 = vpop.f32.mrf.mxu0
    %v1941 = vadd.f32 0.0, %v1940
    %1942 = vdwg.mxu0
    %1945 = vrot.lane.b32.xlu0 %v1915, 16
    %v1946 = vpop.permute.xlu0 %1945
    %1947 = vrot.lane.b32.xlu0 %v1941, 16
    %v1948 = vpop.permute.xlu0 %1947
    %1951 = vst.msk [vmem:[#allocation2] sm:$0xff] %vm1032, %v1946
    %1952 = vst.msk [vmem:[#allocation2 + $0x8] sm:$0xff] %vm1032, %v1948
    %1953 = vrot.lane.b32.xlu0 %v1466, 104
    %v1954 = vpop.permute.xlu0 %1953
    %1955 = vrot.lane.b32.xlu0 %v1499, 104
    %v1956 = vpop.permute.xlu0 %1955
    %v1957 = vsel %vm610, %v1954, 0
    %v1959 = vsel %vm610, %v1956, 0
    %1961 = vmatpush.xpose.msra.mxu0 0.0
    %1962 = vmatpush.xpose.msra.mxu0 0.0
    %1963 = vmatpush.xpose.msra.mxu0 0.0
    %1964 = vmatpush.xpose.msra.mxu0 0.0
    %1965 = vmatpush.xpose.msra.mxu0 0.0
    %1966 = vmatpush.xpose.msra.mxu0 0.0
    %1967 = vmatpush.xpose.msra.mxu0 0.0
    %1968 = vmatpush.xpose.msra.mxu0 0.0
    %1969 = vmatpush.xpose.msra.mxu0 0.0
    %1970 = vmatpush.xpose.msra.mxu0 0.0
    %1971 = vmatpush.xpose.msra.mxu0 0.0
    %1972 = vmatpush.xpose.msra.mxu0 0.0
    %1973 = vmatpush.xpose.msra.mxu0 0.0
    %1974 = vmatpush.xpose.msra.mxu0 0.0
    %1975 = vmatpush.xpose.msra.mxu0 0.0
    %1976 = vmatpush.xpose.msra.mxu0 %v1959
    %1977 = vmatmul.f32.gmra.mxu0 %v1957
    %v1978 = vpop.f32.mrf.mxu0
    %v1979 = vadd.f32 0.0, %v1978
    %1980 = vdwg.mxu0
    %1981 = vrot.lane.b32.xlu0 %v1469, 104
    %v1982 = vpop.permute.xlu0 %1981
    %1983 = vrot.lane.b32.xlu0 %v1502, 104
    %v1984 = vpop.permute.xlu0 %1983
    %v1985 = vsel %vm610, %v1982, 0
    %v1987 = vsel %vm610, %v1984, 0
    %1989 = vmatpush.xpose.msra.mxu0 0.0
    %1990 = vmatpush.xpose.msra.mxu0 0.0
    %1991 = vmatpush.xpose.msra.mxu0 0.0
    %1992 = vmatpush.xpose.msra.mxu0 0.0
    %1993 = vmatpush.xpose.msra.mxu0 0.0
    %1994 = vmatpush.xpose.msra.mxu0 0.0
    %1995 = vmatpush.xpose.msra.mxu0 0.0
    %1996 = vmatpush.xpose.msra.mxu0 0.0
    %1997 = vmatpush.xpose.msra.mxu0 0.0
    %1998 = vmatpush.xpose.msra.mxu0 0.0
    %1999 = vmatpush.xpose.msra.mxu0 0.0
    %2000 = vmatpush.xpose.msra.mxu0 0.0
    %2001 = vmatpush.xpose.msra.mxu0 0.0
    %2002 = vmatpush.xpose.msra.mxu0 0.0
    %2003 = vmatpush.xpose.msra.mxu0 0.0
    %2004 = vmatpush.xpose.msra.mxu0 %v1987
    %2005 = vmatmul.f32.gmra.mxu0 %v1985
    %v2006 = vpop.f32.mrf.mxu0
    %v2007 = vadd.f32 0.0, %v2006
    %2008 = vdwg.mxu0
    %v2009 = vmul.f32 %v1979, 0.35355338
    %v2010 = vmul.f32 %v2007, 0.35355338
    %v2011 = vadd.f32 %v2009, %v667
    %v2012 = vadd.f32 %v2010, %v668
    %v2013 = vsel %vm610, %v2011, -inf
    %2014 = vmax.xlane.f32.xlu0 %v2013
    %v2015 = vpop.xlane.xlu0 %2014
    %v2016 = vsel %vm610, %v2012, -inf
    %2017 = vmax.xlane.f32.xlu0 %v2016
    %v2018 = vpop.xlane.xlu0 %2017
    %v2019 = vsub.f32 %v2011, %v2015
    %v2020 = vsub.f32 %v2012, %v2018
    %v2021 = vmul.f32 %v2019, 1.442695
    %v2022 = vpow.pop %v2021
    %v2023 = vmul.f32 %v2020, 1.442695
    %v2024 = vpow.pop %v2023
    %v2025 = vsel %vm610, %v2022, 0.0
    %2026 = vadd.xlane.f32.xlu0 %v2025
    %v2027 = vpop.xlane.xlu0 %2026
    %v2028 = vsel %vm610, %v2024, 0.0
    %2029 = vadd.xlane.f32.xlu0 %v2028
    %v2030 = vpop.xlane.xlu0 %2029
    %v2031 = vrcp.pop %v2027
    %v2032 = vrcp.pop %v2030
    %v2033 = vmul.f32 %v2022, %v2031
    %v2034 = vmul.f32 %v2024, %v2032
    %2035 = vrot.lane.b32.xlu0 %v1532, 104
    %v2036 = vpop.permute.xlu0 %2035
    %v2039 = vsel %vm610, %v2033, 0
    %2041 = vmatpush.msra.mxu0 0.0
    %2042 = vmatpush.msra.mxu0 0.0
    %2043 = vmatpush.msra.mxu0 0.0
    %2044 = vmatpush.msra.mxu0 0.0
    %2045 = vmatpush.msra.mxu0 0.0
    %2046 = vmatpush.msra.mxu0 0.0
    %2047 = vmatpush.msra.mxu0 0.0
    %2048 = vmatpush.msra.mxu0 0.0
    %2049 = vmatpush.msra.mxu0 0.0
    %2050 = vmatpush.msra.mxu0 0.0
    %2051 = vmatpush.msra.mxu0 0.0
    %2052 = vmatpush.msra.mxu0 0.0
    %2053 = vmatpush.msra.mxu0 0.0
    %2054 = vmatpush.msra.mxu0 0.0
    %2055 = vmatpush.msra.mxu0 0.0
    %2056 = vmatpush.msra.mxu0 %v2036
    %2057 = vmatmul.f32.gmra.mxu0 %v2039
    %v2058 = vpop.f32.mrf.mxu0
    %v2059 = vadd.f32 0.0, %v2058
    %2060 = vdwg.mxu0
    %2061 = vrot.lane.b32.xlu0 %v1535, 104
    %v2062 = vpop.permute.xlu0 %2061
    %v2065 = vsel %vm610, %v2034, 0
    %2067 = vmatpush.msra.mxu0 0.0
    %2068 = vmatpush.msra.mxu0 0.0
    %2069 = vmatpush.msra.mxu0 0.0
    %2070 = vmatpush.msra.mxu0 0.0
    %2071 = vmatpush.msra.mxu0 0.0
    %2072 = vmatpush.msra.mxu0 0.0
    %2073 = vmatpush.msra.mxu0 0.0
    %2074 = vmatpush.msra.mxu0 0.0
    %2075 = vmatpush.msra.mxu0 0.0
    %2076 = vmatpush.msra.mxu0 0.0
    %2077 = vmatpush.msra.mxu0 0.0
    %2078 = vmatpush.msra.mxu0 0.0
    %2079 = vmatpush.msra.mxu0 0.0
    %2080 = vmatpush.msra.mxu0 0.0
    %2081 = vmatpush.msra.mxu0 0.0
    %2082 = vmatpush.msra.mxu0 %v2062
    %2083 = vmatmul.f32.gmra.mxu0 %v2065
    %v2084 = vpop.f32.mrf.mxu0
    %v2085 = vadd.f32 0.0, %v2084
    %2086 = vdwg.mxu0
    %2089 = vrot.lane.b32.xlu0 %v2059, 24
    %v2090 = vpop.permute.xlu0 %2089
    %2091 = vrot.lane.b32.xlu0 %v2085, 24
    %v2092 = vpop.permute.xlu0 %2091
    %2095 = vst.msk [vmem:[#allocation2] sm:$0xff] %vm1177, %v2090
    %2096 = vst.msk [vmem:[#allocation2 + $0x8] sm:$0xff] %vm1177, %v2092
    %v2097 = vld [vmem:[#allocation2] sm:$0xff]
    %v2098 = vld [vmem:[#allocation2 + $0x8] sm:$0xff]
    %s2099 = scalar_lea.vmem %s29, 32
    %v2100 = vld [vmem:[%s2099] sm:$0xff]
    %v2101 = vld [vmem:[%s2099 + $0x8] sm:$0xff]
    %v2102 = vld [vmem:[%s2099 + $0x10] sm:$0xff]
    %v2103 = vld [vmem:[%s2099 + $0x18] sm:$0xff]
    %s2104 = scalar_lea.vmem [#allocation14], 1
    %v2105 = vld [vmem:[%s2104] sm:$0x1]
    %v2107 = vperm.slane %v2105, 0
    %v2110 = vsel %vm442, %v2097, 0
    %v2113 = vsel %vm442, %v2098, 0
    %2115 = vmatpush.msra.mxu0 0.0
    %2116 = vmatpush.msra.mxu0 0.0
    %2117 = vmatpush.msra.mxu0 0.0
    %2118 = vmatpush.msra.mxu0 0.0
    %2119 = vmatpush.msra.mxu0 0.0
    %2120 = vmatpush.msra.mxu0 0.0
    %2121 = vmatpush.msra.mxu0 0.0
    %2122 = vmatpush.msra.mxu0 0.0
    %2123 = vmatpush.msra.mxu0 0.0
    %2124 = vmatpush.msra.mxu0 0.0
    %2125 = vmatpush.msra.mxu0 0.0
    %2126 = vmatpush.msra.mxu0 0.0
    %2127 = vmatpush.msra.mxu0 %v2103
    %2128 = vmatpush.msra.mxu0 %v2102
    %2129 = vmatpush.msra.mxu0 %v2101
    %2130 = vmatpush.msra.mxu0 %v2100
    %2131 = vmatmul.f32.gmra.mxu0 %v2110
    %v2132 = vpop.f32.mrf.mxu0
    %v2133 = vadd.f32 %v2107, %v2132
    %2134 = vmatmul.f32.gmra.mxu0 %v2113
    %v2135 = vpop.f32.mrf.mxu0
    %v2136 = vadd.f32 %v2107, %v2135
    %2137 = vdwg.mxu0
    %v2138 = vadd.f32 %v1430, %v2133
    %v2139 = vadd.f32 %v1431, %v2136
    %s2140 = scalar_lea.vmem [#allocation15], 1
    %v2141 = vld [vmem:[%s2140] sm:$0x1]
    %s2142 = scalar_lea.vmem [#allocation17], 1
    %v2143 = vld [vmem:[%s2142] sm:$0x1]
    %v2144 = vsel %vm442, %v2138, 0.0
    %2145 = vadd.xlane.f32.xlu0 %v2144
    %v2146 = vpop.xlane.xlu0 %2145
    %v2147 = vsel %vm442, %v2139, 0.0
    %2148 = vadd.xlane.f32.xlu0 %v2147
    %v2149 = vpop.xlane.xlu0 %2148
    %v2150 = vmul.f32 %v2146, %v455
    %v2151 = vmul.f32 %v2149, %v455
    %v2152 = vsub.f32 %v2138, %v2150
    %v2153 = vsub.f32 %v2139, %v2151
    %v2154 = vmul.f32 %v2152, %v2152
    %v2155 = vmul.f32 %v2153, %v2153
    %v2156 = vsel %vm442, %v2154, 0.0
    %2157 = vadd.xlane.f32.xlu0 %v2156
    %v2158 = vpop.xlane.xlu0 %2157
    %v2159 = vsel %vm442, %v2155, 0.0
    %2160 = vadd.xlane.f32.xlu0 %v2159
    %v2161 = vpop.xlane.xlu0 %2160
    %v2162 = vmul.f32 %v2158, %v455
    %v2163 = vmul.f32 %v2161, %v455
    %v2164 = vadd.f32 %v2162, 1e-12
    %v2165 = vadd.f32 %v2163, 1e-12
    %v2166 = vrsqrt.pop %v2164
    %v2167 = vmul.f32 %v2166, %v2164
    %v2168 = vmul.f32 %v2167, %v2166
    %v2169 = vmul.f32 0.5, %v2168
    %v2170 = vsub.f32 1.5, %v2169
    %v2171 = vmul.f32 %v2166, %v2170
    %vm2172 = vweird.f32 %v2164
    %vm2173 = vweird.f32 %v2166
    %vm2174 = vmor %vm2172, %vm2173
    %v2175 = vsel %vm2174, %v2166, %v2171
    %v2176 = vrsqrt.pop %v2165
    %v2177 = vmul.f32 %v2176, %v2165
    %v2178 = vmul.f32 %v2177, %v2176
    %v2179 = vmul.f32 0.5, %v2178
    %v2180 = vsub.f32 1.5, %v2179
    %v2181 = vmul.f32 %v2176, %v2180
    %vm2182 = vweird.f32 %v2165
    %vm2183 = vweird.f32 %v2176
    %vm2184 = vmor %vm2182, %vm2183
    %v2185 = vsel %vm2184, %v2176, %v2181
    %v2186 = vmul.f32 %v2152, %v2175
    %v2187 = vmul.f32 %v2153, %v2185
    %v2189 = vperm.slane %v2141, 0
    %v2191 = vmul.f32 %v2186, %v2189
    %v2192 = vmul.f32 %v2187, %v2189
    %v2194 = vperm.slane %v2143, 0
    %v2196 = vadd.f32 %v2191, %v2194
    %v2197 = vadd.f32 %v2192, %v2194
    %s2198 = scalar_lea.vmem [#allocation18], 32
    %v2199 = vld [vmem:[%s2198] sm:$0xff]
    %v2200 = vld [vmem:[%s2198 + $0x8] sm:$0xff]
    %v2201 = vld [vmem:[%s2198 + $0x10] sm:$0xff]
    %v2202 = vld [vmem:[%s2198 + $0x18] sm:$0xff]
    %s2203 = scalar_lea.vmem [#allocation20], 1
    %v2204 = vld [vmem:[%s2203] sm:$0x1]
    %v2206 = vperm.slane %v2204, 0
    %v2209 = vsel %vm442, %v2196, 0
    %v2212 = vsel %vm442, %v2197, 0
    %2214 = vmatpush.msra.mxu0 0.0
    %2215 = vmatpush.msra.mxu0 0.0
    %2216 = vmatpush.msra.mxu0 0.0
    %2217 = vmatpush.msra.mxu0 0.0
    %2218 = vmatpush.msra.mxu0 0.0
    %2219 = vmatpush.msra.mxu0 0.0
    %2220 = vmatpush.msra.mxu0 0.0
    %2221 = vmatpush.msra.mxu0 0.0
    %2222 = vmatpush.msra.mxu0 0.0
    %2223 = vmatpush.msra.mxu0 0.0
    %2224 = vmatpush.msra.mxu0 0.0
    %2225 = vmatpush.msra.mxu0 0.0
    %2226 = vmatpush.msra.mxu0 %v2202
    %2227 = vmatpush.msra.mxu0 %v2201
    %2228 = vmatpush.msra.mxu0 %v2200
    %2229 = vmatpush.msra.mxu0 %v2199
    %2230 = vmatmul.f32.gmra.mxu0 %v2209
    %v2231 = vpop.f32.mrf.mxu0
    %v2232 = vadd.f32 %v2206, %v2231
    %2233 = vmatmul.f32.gmra.mxu0 %v2212
    %v2234 = vpop.f32.mrf.mxu0
    %v2235 = vadd.f32 %v2206, %v2234
    %2236 = vdwg.mxu0
    %v2237 = vmul.f32 %v2232, 0.5
    %v2238 = vmul.f32 %v2235, 0.5
    %v2239 = vmul.f32 %v2232, 0.044715
    %v2240 = vmul.f32 %v2235, 0.044715
    %v2241 = vmul.f32 %v2239, %v2232
    %v2242 = vmul.f32 %v2240, %v2235
    %v2243 = vmul.f32 %v2241, %v2232
    %v2244 = vmul.f32 %v2242, %v2235
    %v2245 = vadd.f32 %v2232, %v2243
    %v2246 = vadd.f32 %v2235, %v2244
    %v2247 = vmul.f32 %v2245, 0.7978846
    %v2248 = vmul.f32 %v2246, 0.7978846
    %v2249 = vtanh.pop %v2247
    %v2250 = vtanh.pop %v2248
    %v2251 = vadd.f32 %v2249, 1.0
    %v2252 = vadd.f32 %v2250, 1.0
    %v2253 = vmul.f32 %v2237, %v2251
    %v2254 = vmul.f32 %v2238, %v2252
    %s2255 = scalar_lea.vmem %s41, 64
    %v2256 = vld [vmem:[%s2255] sm:$0xff]
    %v2257 = vld [vmem:[%s2255 + $0x8] sm:$0xff]
    %v2258 = vld [vmem:[%s2255 + $0x10] sm:$0xff]
    %v2259 = vld [vmem:[%s2255 + $0x18] sm:$0xff]
    %v2260 = vld [vmem:[%s2255 + $0x20] sm:$0xff]
    %v2261 = vld [vmem:[%s2255 + $0x28] sm:$0xff]
    %v2262 = vld [vmem:[%s2255 + $0x30] sm:$0xff]
    %v2263 = vld [vmem:[%s2255 + $0x38] sm:$0xff]
    %s2264 = scalar_lea.vmem [#allocation21], 1
    %v2265 = vld [vmem:[%s2264] sm:$0x1]
    %v2267 = vperm.slane %v2265, 0
    %v2270 = vsel %vm1344, %v2253, 0
    %v2273 = vsel %vm1344, %v2254, 0
    %2275 = vmatpush.msra.mxu0 0.0
    %2276 = vmatpush.msra.mxu0 0.0
    %2277 = vmatpush.msra.mxu0 0.0
    %2278 = vmatpush.msra.mxu0 0.0
    %2279 = vmatpush.msra.mxu0 0.0
    %2280 = vmatpush.msra.mxu0 0.0
    %2281 = vmatpush.msra.mxu0 0.0
    %2282 = vmatpush.msra.mxu0 0.0
    %2283 = vmatpush.msra.mxu0 %v2263
    %2284 = vmatpush.msra.mxu0 %v2262
    %2285 = vmatpush.msra.mxu0 %v2261
    %2286 = vmatpush.msra.mxu0 %v2260
    %2287 = vmatpush.msra.mxu0 %v2259
    %2288 = vmatpush.msra.mxu0 %v2258
    %2289 = vmatpush.msra.mxu0 %v2257
    %2290 = vmatpush.msra.mxu0 %v2256
    %2291 = vmatmul.f32.gmra.mxu0 %v2270
    %v2292 = vpop.f32.mrf.mxu0
    %v2293 = vadd.f32 %v2267, %v2292
    %2294 = vmatmul.f32.gmra.mxu0 %v2273
    %v2295 = vpop.f32.mrf.mxu0
    %v2296 = vadd.f32 %v2267, %v2295
    %2297 = vdwg.mxu0
    %v2298 = vadd.f32 %v2196, %v2293
    %v2299 = vadd.f32 %v2197, %v2296
    %s2300 = scalar_lea.vmem [#allocation23], 1
    %v2301 = vld [vmem:[%s2300] sm:$0x1]
    %s2302 = scalar_lea.vmem [#allocation24], 1
    %v2303 = vld [vmem:[%s2302] sm:$0x1]
    %v2304 = vsel %vm442, %v2298, 0.0
    %2305 = vadd.xlane.f32.xlu0 %v2304
    %v2306 = vpop.xlane.xlu0 %2305
    %v2307 = vsel %vm442, %v2299, 0.0
    %2308 = vadd.xlane.f32.xlu0 %v2307
    %v2309 = vpop.xlane.xlu0 %2308
    %v2310 = vmul.f32 %v2306, %v455
    %v2311 = vmul.f32 %v2309, %v455
    %v2312 = vsub.f32 %v2298, %v2310
    %v2313 = vsub.f32 %v2299, %v2311
    %v2314 = vmul.f32 %v2312, %v2312
    %v2315 = vmul.f32 %v2313, %v2313
    %v2316 = vsel %vm442, %v2314, 0.0
    %2317 = vadd.xlane.f32.xlu0 %v2316
    %v2318 = vpop.xlane.xlu0 %2317
    %v2319 = vsel %vm442, %v2315, 0.0
    %2320 = vadd.xlane.f32.xlu0 %v2319
    %v2321 = vpop.xlane.xlu0 %2320
    %v2322 = vmul.f32 %v2318, %v455
    %v2323 = vmul.f32 %v2321, %v455
    %v2324 = vadd.f32 %v2322, 1e-12
    %v2325 = vadd.f32 %v2323, 1e-12
    %v2326 = vrsqrt.pop %v2324
    %v2327 = vmul.f32 %v2326, %v2324
    %v2328 = vmul.f32 %v2327, %v2326
    %v2329 = vmul.f32 0.5, %v2328
    %v2330 = vsub.f32 1.5, %v2329
    %v2331 = vmul.f32 %v2326, %v2330
    %vm2332 = vweird.f32 %v2324
    %vm2333 = vweird.f32 %v2326
    %vm2334 = vmor %vm2332, %vm2333
    %v2335 = vsel %vm2334, %v2326, %v2331
    %v2336 = vrsqrt.pop %v2325
    %v2337 = vmul.f32 %v2336, %v2325
    %v2338 = vmul.f32 %v2337, %v2336
    %v2339 = vmul.f32 0.5, %v2338
    %v2340 = vsub.f32 1.5, %v2339
    %v2341 = vmul.f32 %v2336, %v2340
    %vm2342 = vweird.f32 %v2325
    %vm2343 = vweird.f32 %v2336
    %vm2344 = vmor %vm2342, %vm2343
    %v2345 = vsel %vm2344, %v2336, %v2341
    %v2346 = vmul.f32 %v2312, %v2335
    %v2347 = vmul.f32 %v2313, %v2345
    %v2349 = vperm.slane %v2301, 0
    %v2351 = vmul.f32 %v2346, %v2349
    %v2352 = vmul.f32 %v2347, %v2349
    %v2354 = vperm.slane %v2303, 0
    %v2356 = vadd.f32 %v2351, %v2354
    %v2357 = vadd.f32 %v2352, %v2354
    %v2358 = vld [vmem:[%s49] sm:$0xff]
    %v2359 = vld [vmem:[%s49 + $0x8] sm:$0xff]
    %v2360 = vld [vmem:[%s49 + $0x10] sm:$0xff]
    %v2361 = vld [vmem:[%s49 + $0x18] sm:$0xff]
    %v2362 = vld [vmem:[#allocation26] sm:$0x1]
    %v2364 = vperm.slane %v2362, 0
    %v2368 = vrot.slane %v2357, 7
    %vm2369 = vcmask 1041409
    %v2370 = vsel %vm2369, %v2368, %v2356
    %v2371 = vsel %vm442, %v2370, 0
    %2373 = vmatpush.msra.mxu0 0.0
    %2374 = vmatpush.msra.mxu0 0.0
    %2375 = vmatpush.msra.mxu0 0.0
    %2376 = vmatpush.msra.mxu0 0.0
    %2377 = vmatpush.msra.mxu0 0.0
    %2378 = vmatpush.msra.mxu0 0.0
    %2379 = vmatpush.msra.mxu0 0.0
    %2380 = vmatpush.msra.mxu0 0.0
    %2381 = vmatpush.msra.mxu0 0.0
    %2382 = vmatpush.msra.mxu0 0.0
    %2383 = vmatpush.msra.mxu0 0.0
    %2384 = vmatpush.msra.mxu0 0.0
    %2385 = vmatpush.msra.mxu0 %v2361
    %2386 = vmatpush.msra.mxu0 %v2360
    %2387 = vmatpush.msra.mxu0 %v2359
    %2388 = vmatpush.msra.mxu0 %v2358
    %2389 = vmatmul.f32.gmra.mxu0 %v2371
    %v2390 = vpop.f32.mrf.mxu0
    %v2391 = vadd.f32 %v2364, %v2390
    %2392 = vdwg.mxu0
    %v2393 = vtanh.pop %v2391
    %v2394 = vld [vmem:[%s53] sm:$0xff]
    %v2395 = vld [vmem:[%s53 + $0x8] sm:$0xff]
    %v2396 = vld [vmem:[%s53 + $0x10] sm:$0xff]
    %v2397 = vld [vmem:[%s53 + $0x18] sm:$0xff]
    %v2398 = vld [vmem:[#allocation27] sm:$0x1]
    %v2400 = vperm.slane %v2398, 0
    %v2403 = vsel %vm442, %v2393, 0
    %2405 = vmatpush.msra.mxu0 0.0
    %2406 = vmatpush.msra.mxu0 0.0
    %2407 = vmatpush.msra.mxu0 0.0
    %2408 = vmatpush.msra.mxu0 0.0
    %2409 = vmatpush.msra.mxu0 0.0
    %2410 = vmatpush.msra.mxu0 0.0
    %2411 = vmatpush.msra.mxu0 0.0
    %2412 = vmatpush.msra.mxu0 0.0
    %2413 = vmatpush.msra.mxu0 0.0
    %2414 = vmatpush.msra.mxu0 0.0
    %2415 = vmatpush.msra.mxu0 0.0
    %2416 = vmatpush.msra.mxu0 0.0
    %2417 = vmatpush.msra.mxu0 %v2397
    %2418 = vmatpush.msra.mxu0 %v2396
    %2419 = vmatpush.msra.mxu0 %v2395
    %2420 = vmatpush.msra.mxu0 %v2394
    %2421 = vmatmul.f32.gmra.mxu0 %v2403
    %v2422 = vpop.f32.mrf.mxu0
    %v2423 = vadd.f32 %v2400, %v2422
    %2424 = vdwg.mxu0
    %v2425 = vld [vmem:[%s5] sm:$0x3]
    %v2427 = vrot.slane %v2423, 1
    %vm2429 = vcmask 16384
    %2430 = vst.msk [vmem:[%s57] sm:$0x1] %vm2429, %v2423
    %2431 = vst.msk [vmem:[%s57 + $0x4] sm:$0x1] %vm2429, %v2427
    %vm2432 = vcmask 17408
    %v2433 = vsel %vm2432, %v2423, -inf
    %2434 = vmax.xlane.f32.xlu0 %v2433
    %v2435 = vpop.xlane.xlu0 %2434
    %v2436 = vsub.f32 %v2423, %v2435
    %v2437 = vmul.f32 %v2436, 1.442695
    %v2438 = vpow.pop %v2437
    %v2439 = vsel %vm2432, %v2438, 0.0
    %2440 = vadd.xlane.f32.xlu0 %v2439
    %v2441 = vpop.xlane.xlu0 %2440
    %v2442 = vlog2.pop %v2441
    %v2443 = vmul.f32 %v2442, 0.6931472
    %v2444 = vsub.f32 %v2436, %v2443
    %2445 = vset.pattern.permute.xlu0 0
    %2446 = vperm.xlu0 %2445, %v2425
    %v2447 = vpop.permute.xlu0 %2446
    %vm2448 = vcmp.eq.s32.totalorder %v2447, %v365
    %v2449 = vsel %vm2448, 1, 0
    %v2450 = vcvt.s32.f32 %v2449
    %v2451 = vmul.f32 %v2444, %v2450
    %v2452 = vsel %vm2432, %v2451, 0.0
    %2453 = vadd.xlane.f32.xlu0 %v2452
    %v2454 = vpop.xlane.xlu0 %2453
    %v2455 = vrot.slane %v2454, 4
    %v2456 = vadd.f32 %v2454, %v2455
    %v2457 = vrot.slane %v2456, 2
    %v2458 = vadd.f32 %v2456, %v2457
    %v2459 = vrot.slane %v2458, 1
    %v2460 = vadd.f32 %v2458, %v2459
    %s2461 = vtos %v2460
    %s2462 = ssub.f32 0.0, %s2461
    %s2463 = sadd.f32 %s2462, 0.0
    %v2464 = vperm.slane %v2423, 0
    %v2465 = vperm.slane %v2427, 0
    %2466 = vrot.lane.b32.xlu0 %v2464, 125
    %v2467 = vpop.permute.xlu0 %2466
    %2468 = vrot.lane.b32.xlu0 %v2465, 125
    %v2469 = vpop.permute.xlu0 %2468
    %2472 = vst.msk [vmem:[%s57 + $0x1] sm:$0x1] %vm2429, %v2467
    %2473 = vst.msk [vmem:[%s57 + $0x5] sm:$0x1] %vm2429, %v2469
    %vm2474 = vcmask 42008
    %v2475 = vsel %vm2474, %v2423, -inf
    %2476 = vmax.xlane.f32.xlu0 %v2475
    %v2477 = vpop.xlane.xlu0 %2476
    %v2478 = vsub.f32 %v2423, %v2477
    %v2479 = vmul.f32 %v2478, 1.442695
    %v2480 = vpow.pop %v2479
    %2482 = vrot.lane.b32.xlu0 %v2480, 125
    %v2483 = vpop.permute.xlu0 %2482
    %v2485 = vsel %vm2432, %v2483, 0.0
    %2486 = vadd.xlane.f32.xlu0 %v2485
    %v2487 = vpop.xlane.xlu0 %2486
    %v2488 = vlog2.pop %v2487
    %v2489 = vmul.f32 %v2488, 0.6931472
    %v2490 = vsub.f32 %v2478, %v2489
    %2491 = vset.pattern.permute.xlu0 1
    %2492 = vperm.xlu0 %2491, %v2425
    %v2493 = vpop.permute.xlu0 %2492
    %vm2494 = vcmp.eq.s32.totalorder %v2493, %v365
    %v2495 = vsel %vm2494, 1, 0
    %v2496 = vcvt.s32.f32 %v2495
    %2498 = vrot.lane.b32.xlu0 %v2496, 3
    %v2499 = vpop.permute.xlu0 %2498
    %v2501 = vmul.f32 %v2490, %v2499
    %2503 = vrot.lane.b32.xlu0 %v2501, 125
    %v2504 = vpop.permute.xlu0 %2503
    %v2506 = vsel %vm2432, %v2504, 0.0
    %2507 = vadd.xlane.f32.xlu0 %v2506
    %v2508 = vpop.xlane.xlu0 %2507
    %v2509 = vrot.slane %v2508, 4
    %v2510 = vadd.f32 %v2508, %v2509
    %v2511 = vrot.slane %v2510, 2
    %v2512 = vadd.f32 %v2510, %v2511
    %v2513 = vrot.slane %v2512, 1
    %v2514 = vadd.f32 %v2512, %v2513
    %s2515 = vtos %v2514
    %s2516 = ssub.f32 0.0, %s2515
    %s2517 = sadd.f32 %s2463, %s2516
    %2518 = vrot.lane.b32.xlu0 %v2464, 122
    %v2519 = vpop.permute.xlu0 %2518
    %2520 = vrot.lane.b32.xlu0 %v2465, 122
    %v2521 = vpop.permute.xlu0 %2520
    %2524 = vst.msk [vmem:[%s57 + $0x2] sm:$0x1] %vm2429, %v2519
    %2525 = vst.msk [vmem:[%s57 + $0x6] sm:$0x1] %vm2429, %v2521
    %vm2526 = vcmask 66608
    %v2527 = vsel %vm2526, %v2423, -inf
    %2528 = vmax.xlane.f32.xlu0 %v2527
    %v2529 = vpop.xlane.xlu0 %2528
    %v2530 = vsub.f32 %v2423, %v2529
    %v2531 = vmul.f32 %v2530, 1.442695
    %v2532 = vpow.pop %v2531
    %2534 = vrot.lane.b32.xlu0 %v2532, 122
    %v2535 = vpop.permute.xlu0 %2534
    %v2537 = vsel %vm2432, %v2535, 0.0
    %2538 = vadd.xlane.f32.xlu0 %v2537
    %v2539 = vpop.xlane.xlu0 %2538
    %v2540 = vlog2.pop %v2539
    %v2541 = vmul.f32 %v2540, 0.6931472
    %v2542 = vsub.f32 %v2530, %v2541
    %2543 = vset.pattern.permute.xlu0 2
    %2544 = vperm.xlu0 %2543, %v2425
    %v2545 = vpop.permute.xlu0 %2544
    %vm2546 = vcmp.eq.s32.totalorder %v2545, %v365
    %v2547 = vsel %vm2546, 1, 0
    %v2548 = vcvt.s32.f32 %v2547
    %2550 = vrot.lane.b32.xlu0 %v2548, 6
    %v2551 = vpop.permute.xlu0 %2550
    %v2553 = vmul.f32 %v2542, %v2551
    %2555 = vrot.lane.b32.xlu0 %v2553, 122
    %v2556 = vpop.permute.xlu0 %2555
    %v2558 = vsel %vm2432, %v2556, 0.0
    %2559 = vadd.xlane.f32.xlu0 %v2558
    %v2560 = vpop.xlane.xlu0 %2559
    %v2561 = vrot.slane %v2560, 4
    %v2562 = vadd.f32 %v2560, %v2561
    %v2563 = vrot.slane %v2562, 2
    %v2564 = vadd.f32 %v2562, %v2563
    %v2565 = vrot.slane %v2564, 1
    %v2566 = vadd.f32 %v2564, %v2565
    %s2567 = vtos %v2566
    %s2568 = ssub.f32 0.0, %s2567
    %s2569 = sadd.f32 %s2517, %s2568
    %2570 = vrot.lane.b32.xlu0 %v2464, 119
    %v2571 = vpop.permute.xlu0 %2570
    %2572 = vrot.lane.b32.xlu0 %v2465, 119
    %v2573 = vpop.permute.xlu0 %2572
    %2576 = vst.msk [vmem:[%s57 + $0x3] sm:$0x1] %vm2429, %v2571
    %2577 = vst.msk [vmem:[%s57 + $0x7] sm:$0x1] %vm2429, %v2573
    %vm2578 = vcmask 91208
    %v2579 = vsel %vm2578, %v2423, -inf
    %2580 = vmax.xlane.f32.xlu0 %v2579
    %v2581 = vpop.xlane.xlu0 %2580
    %v2582 = vsub.f32 %v2423, %v2581
    %v2583 = vmul.f32 %v2582, 1.442695
    %v2584 = vpow.pop %v2583
    %2586 = vrot.lane.b32.xlu0 %v2584, 119
    %v2587 = vpop.permute.xlu0 %2586
    %v2589 = vsel %vm2432, %v2587, 0.0
    %2590 = vadd.xlane.f32.xlu0 %v2589
    %v2591 = vpop.xlane.xlu0 %2590
    %v2592 = vlog2.pop %v2591
    %v2593 = vmul.f32 %v2592, 0.6931472
    %v2594 = vsub.f32 %v2582, %v2593
    %2595 = vset.pattern.permute.xlu0 3
    %2596 = vperm.xlu0 %2595, %v2425
    %v2597 = vpop.permute.xlu0 %2596
    %vm2598 = vcmp.eq.s32.totalorder %v2597, %v365
    %v2599 = vsel %vm2598, 1, 0
    %v2600 = vcvt.s32.f32 %v2599
    %2602 = vrot.lane.b32.xlu0 %v2600, 9
    %v2603 = vpop.permute.xlu0 %2602
    %v2605 = vmul.f32 %v2594, %v2603
    %2607 = vrot.lane.b32.xlu0 %v2605, 119
    %v2608 = vpop.permute.xlu0 %2607
    %v2610 = vsel %vm2432, %v2608, 0.0
    %2611 = vadd.xlane.f32.xlu0 %v2610
    %v2612 = vpop.xlane.xlu0 %2611
    %v2613 = vrot.slane %v2612, 4
    %v2614 = vadd.f32 %v2612, %v2613
    %v2615 = vrot.slane %v2614, 2
    %v2616 = vadd.f32 %v2614, %v2615
    %v2617 = vrot.slane %v2616, 1
    %v2618 = vadd.f32 %v2616, %v2617
    %s2619 = vtos %v2618
    %s2620 = ssub.f32 0.0, %s2619
    %s2621 = sadd.f32 %s2569, %s2620
    %v2622 = vrcp.pop 8.0
    %v2623 = vmul.f32 8.0, %v2622
    %v2624 = vsub.f32 1.0, %v2623
    %v2625 = vmul.f32 %v2622, %v2624
    %v2626 = vadd.f32 %v2622, %v2625
    %vm2627 = vweird.f32 %v2622
    %v2628 = vsel %vm2627, %v2622, %v2626
    %s2629 = vtos %v2628
    %s2630 = smul.f32 %s2621, %s2629
    %v2631 = vstv %s2630
    %vm2632 = vcmask 0
    %2633 = vst.msk [vmem:[#allocation29] sm:$0x1] %vm2632, %v2631
    // Predicated region
    $region178: #{_forward_jit.1} parent=1 // pred_check
      _
    $region179: #{_forward_jit.1} parent=1 // pred_check_branch
      %2635 = sbr.rel (0) target = $region181
    $region180: #{_forward_jit.1} parent=1 // pred_region
      _
    $region181: #{_forward_jit.1} parent=1 // pred_fallthru
      _
    // Predicated region
    $region182: #{_forward_jit.1} parent=1 // pred_check
      _
    $region183: #{_forward_jit.1} parent=1 // pred_check_branch
      %2637 = sbr.rel (0) target = $region185
    $region184: #{_forward_jit.1} parent=1 // pred_region
      %2639 = vsyncadd [#allocation5], 0
      %s2641 = sshll.u32 [#allocation29], 4
      %s2642 = int_to_ptr.vmem [resolvable:$true] %s2641
      %s2643 = sshll.u32 %s59, 4
      %s2644 = int_to_ptr.hbm [resolvable:$true] %s2643
      %2646 = dma.vmem_to_hbm [thread:$0]  %s2642, 16, %s2644, [#allocation5]
    $region185: #{_forward_jit.1} parent=1 // pred_fallthru
      _
    // Predicated region
    $region186: #{_forward_jit.1} parent=1 // pred_check
      _
    $region187: #{_forward_jit.1} parent=1 // pred_check_branch
      %2648 = sbr.rel (0) target = $region189
    $region188: #{_forward_jit.1} parent=1 // pred_region
      _
    $region189: #{_forward_jit.1} parent=1 // pred_fallthru
      _
    // Predicated region
    $region190: #{_forward_jit.1} parent=1 // pred_check
      _
    $region191: #{_forward_jit.1} parent=1 // pred_check_branch
      %2650 = sbr.rel (0) target = $region193
    $region192: #{_forward_jit.1} parent=1 // pred_region
      %2652 = dma.done [#allocation5], 16
    $region193: #{_forward_jit.1} parent=1 // pred_fallthru
      _
    %2653 = vsyncpa [#allocation4], 1
    %2654 = vsyncpa [#allocation7], 1
    %2655 = vsyncpa [#allocation10], 1
    %2656 = vsyncpa [#allocation13], 1
    %2657 = vsyncpa [#allocation16], 1
    %2658 = vsyncpa [#allocation19], 1
    %2659 = vsyncpa [#allocation22], 1
    %2660 = vsyncpa [#allocation25], 1
    %2661 = vsyncpa [#allocation28], 1
    %2662 = vsyncpa [#allocation5], 1

</llo_original>
